<compile_context>
chip_gen: v6e
topology: v6e:2x2x1
jax: 0.10.0
libtpu: 0.0.40
codegen_flags: <defaults>
</compile_context>

<pallas_src>
import numpy as np
import jax
import jax.numpy as jnp
from jax.experimental import pallas as pl
from jax.experimental.pallas import tpu as pltpu

f32 = jnp.float32
bf16 = jnp.bfloat16


# ----------------------------- small helpers -----------------------------

def _round_up(x, m):
    return (x + m - 1) // m * m


def _pad2(w, rows, cols, dt):
    w = w.astype(dt)
    return jnp.pad(w, ((0, rows - w.shape[0]), (0, cols - w.shape[1])))


def _pick_gnn_batch_tile(B, N, Hp):
    """Batch elements folded into the MXU row dimension per GNN grid step.

    Targets a few hundred rows in the per-edge matmuls, keeps >= 2 grid steps so both
    v7x TensorCores get work, prefers sublane (8) aligned row counts, and bounds the
    per-step f32 intermediates to a few MiB so the tiling fits every chip's VMEM.
    """
    edge_rows = N * (N - 1)
    target = max(1, 512 // max(1, edge_rows))
    vmem_cap = max(1, (8 << 20) // max(1, 6 * edge_rows * Hp * 4))
    cap = min(target, vmem_cap)
    if B >= 2:
        cap = min(cap, B // 2)
    cap = max(cap, 1)
    divisors = [d for d in range(1, cap + 1) if B % d == 0]
    aligned = [d for d in divisors if (N * d) % 8 == 0]
    return (aligned or divisors)[-1]


def _pick_mlp_batch_tile(B, N, pmax):
    """Batch tile for the encoder / decoder MLP kernels (>= 2 grid steps, VMEM-bounded)."""
    cap = max(1, (8 << 20) // max(1, 4 * N * pmax * 4))
    if B >= 2:
        cap = min(cap, B // 2)
    cap = max(cap, 1)
    divisors = [d for d in range(1, cap + 1) if B % d == 0]
    aligned = [d for d in divisors if (N * d) % 8 == 0]
    return (aligned or divisors)[-1]


def _masked_layer_norm(x, gamma, beta, n_real, eps=1e-5):
    """LayerNorm over the first n_real lanes of a lane-padded activation.

    Padded lanes of x are exactly zero (weights / biases are zero-padded), so full-lane
    sums equal sums over the real features; gamma/beta are also zero-padded, keeping the
    padded lanes at zero on the way out.
    """
    hp = x.shape[-1]
    lane = jax.lax.broadcasted_iota(jnp.int32, (1, hp), 1)
    mask = (lane < n_real).astype(x.dtype)
    inv_n = 1.0 / float(n_real)
    mean = jnp.sum(x, axis=-1, keepdims=True) * inv_n
    diff = (x - mean) * mask
    var = jnp.sum(diff * diff, axis=-1, keepdims=True) * inv_n
    return diff * jax.lax.rsqrt(var + eps) * gamma + beta


# ----------------------------- StateGnnNet kernel -----------------------------

def state_gnn_forward(states, feature, params, feature_dim):
    """StateGnnNet.forward (delta_states) as one Pallas TPU kernel."""
    B, N, D = states.shape
    # TODO(synk): num_nodes == 1 branch (no edge model) not implemented; the PyTorch
    # module itself would fail there (node_mlp expects hidden+input+feature columns).
    assert N > 1
    F = feature_dim
    assert params["nw1f"].shape[0] == F
    H = params["ew2"].shape[0]
    Hp = _round_up(H, 128)        # hidden dim padded to full 128-lane vregs / MXU K dim
    Dp = _round_up(D, 128)        # output lane dim padded -> unmasked lane-dense stores
    Bt = _pick_gnn_batch_tile(B, N, Hp)
    G = B // Bt                   # grid steps
    R = N * Bt                    # node rows per grid step (batch folded into MXU rows)

    ew1 = params["ew1"]
    # matmul operands in bf16 (native MXU path on v5e/v6e/v7x); biases / LN params f32.
    w_esrc = _pad2(ew1[:D], D, Hp, bf16)          # applied to the edge *source* node
    w_edst = _pad2(ew1[D:], D, Hp, bf16)          # applied to the edge *target* node
    eb1 = _pad2(params["eb1"], 1, Hp, f32)
    ew2 = _pad2(params["ew2"], Hp, Hp, bf16)
    eb2 = _pad2(params["eb2"], 1, Hp, f32)
    eg = _pad2(params["eg"], 1, Hp, f32)          # zero-padded gamma keeps padded lanes 0
    ebt = _pad2(params["ebt"], 1, Hp, f32)
    ew3 = _pad2(params["ew3"], Hp, Hp, bf16)
    eb3 = _pad2(params["eb3"], 1, Hp, f32)
    nw1x = _pad2(params["nw1x"], D, Hp, bf16)
    nw1a = _pad2(params["nw1agg"], Hp, Hp, bf16)
    nw2 = _pad2(params["nw2"], Hp, Hp, bf16)
    nb2 = _pad2(params["nb2"], 1, Hp, f32)
    ng = _pad2(params["ng"], 1, Hp, f32)
    nbt = _pad2(params["nbt"], 1, Hp, f32)
    nw3 = _pad2(params["nw3"], Hp, Dp, bf16)
    nb3 = _pad2(params["nb3"], 1, Dp, f32)

    # one_hot(feature) @ nw1f is a row select, not a matmul: fold it (plus nb1) into a
    # per-(batch, node) additive bias so the node MLP carries no one-hot K columns.
    featb = params["nw1f"][feature] + params["nb1"]                      # [B, H]
    featb = jnp.pad(featb.astype(f32), ((0, 0), (0, Hp - H)))            # [B, Hp]

    # Node-major row layout per grid step (row = node * Bt + local_batch) so the
    # per-batch "all nodes except self" pairing is a plain cyclic row roll in-kernel.
    x_rows = states.reshape(G, Bt, N, D).transpose(0, 2, 1, 3).reshape(G, R, D)
    fb_rows = jnp.broadcast_to(featb.reshape(G, 1, Bt, Hp),
                               (G, N, Bt, Hp)).reshape(G, R, Hp)

    def kernel(x_ref, fb_ref, wes_ref, wed_ref, eb1_ref, ew2_ref, eb2_ref, eg_ref,
               ebt_ref, ew3_ref, eb3_ref, nw1x_ref, nw1a_ref, nw2_ref, nb2_ref,
               ng_ref, nbt_ref, nw3_ref, nb3_ref, out_ref):
        x = x_ref[0]                                              # [R, D] f32
        xb = x.astype(bf16)

        # --- edge MLP first layer as two per-node projections (no [E, 2D] gather) ---
        src = jnp.dot(xb, wes_ref[...], preferred_element_type=f32) + eb1_ref[...]
        dst = jnp.dot(xb, wed_ref[...], preferred_element_type=f32)

        # Directed edges (i -> (i+s) mod N), s = 1..N-1, cover every ordered pair j != i
        # exactly once.  With node-major rows the per-batch pairing is a cyclic roll of
        # the target projections by s*Bt rows (XLU rotate; no gather / selection matmul).
        parts = []
        for s in range(1, N):
            dst_roll = pltpu.roll(dst, R - s * Bt, 0)
            parts.append(src + dst_roll)
        h = jnp.concatenate(parts, axis=0)                        # [(N-1)*R, Hp]

        h = jnp.maximum(h, 0.0)
        h = jnp.dot(h.astype(bf16), ew2_ref[...], preferred_element_type=f32) + eb2_ref[...]
        h = _masked_layer_norm(h, eg_ref[...], ebt_ref[...], H)
        h = jnp.maximum(h, 0.0)
        e = jnp.dot(h.astype(bf16), ew3_ref[...], preferred_element_type=f32) + eb3_ref[...]

        # unsorted_segment_sum over edge sources == sum of the (N-1) shift blocks
        # (rows of every block are already indexed by their source node).
        agg = e[0:R, :]
        for s in range(1, N - 1):
            agg = agg + e[s * R:(s + 1) * R, :]

        # --- node MLP: cat([states, one_hot, agg]) expressed as split matmuls + bias ---
        g = (jnp.dot(xb, nw1x_ref[...], preferred_element_type=f32)
             + jnp.dot(agg.astype(bf16), nw1a_ref[...], preferred_element_type=f32)
             + fb_ref[0])
        g = jnp.maximum(g, 0.0)
        g = jnp.dot(g.astype(bf16), nw2_ref[...], preferred_element_type=f32) + nb2_ref[...]
        g = _masked_layer_norm(g, ng_ref[...], nbt_ref[...], H)
        g = jnp.maximum(g, 0.0)
        delta = jnp.dot(g.astype(bf16), nw3_ref[...], preferred_element_type=f32) + nb3_ref[...]
        out_ref[0] = delta.astype(out_ref.dtype)                  # [R, Dp] lane-dense store

    weights = [w_esrc, w_edst, eb1, ew2, eb2, eg, ebt, ew3, eb3,
               nw1x, nw1a, nw2, nb2, ng, nbt, nw3, nb3]

    def step_spec(shape):        # tensors tiled over the (parallel) batch-tile grid
        n = len(shape)
        return pl.BlockSpec((1,) + tuple(shape[1:]),
                            lambda g, _n=n: (g,) + (0,) * (_n - 1))

    def const_spec(shape):       # weights: same (tiny) block every step
        n = len(shape)
        return pl.BlockSpec(tuple(shape), lambda g, _n=n: (0,) * _n)

    out_rows = pl.pallas_call(
        kernel,
        out_shape=jax.ShapeDtypeStruct((G, R, Dp), states.dtype),
        grid_spec=pltpu.PrefetchScalarGridSpec(
            num_scalar_prefetch=0,
            grid=(G,),
            in_specs=[step_spec((G, R, D)), step_spec((G, R, Hp))]
                     + [const_spec(w.shape) for w in weights],
            out_specs=pl.BlockSpec((1, R, Dp), lambda g: (g, 0, 0)),
        ),
        compiler_params=pltpu.CompilerParams(dimension_semantics=("parallel",)),
    )(x_rows, fb_rows, *weights)

    # undo the node-major row permutation and drop the output lane padding
    out = out_rows.reshape(G, N, Bt, Dp).transpose(0, 2, 1, 3).reshape(B, N, Dp)
    return out[:, :, :D]


# ----------------------- encoder / decoder MLP-chain kernel -----------------------

def _padded_mlp_forward(x, weights, biases, *, normalize_dim1=False, eps=1e-6):
    """Matmul/tanh chain over [B, N, d] with optional F.normalize over the node axis.

    tanh after every layer except the last (matches q_graph / p_graph).  Lane dims are
    zero-padded to multiples of 128; padded lanes stay exactly zero through the chain
    (zero-padded weights/biases, tanh(0)=0) so the real output lanes are exact.
    """
    B, N, Din = x.shape
    L = len(weights)
    assert weights[0].shape[0] == Din
    dims = [Din] + [w.shape[1] for w in weights]
    pdims = [_round_up(d, 128) for d in dims]

    wp = [_pad2(weights[i], pdims[i], pdims[i + 1], bf16) for i in range(L)]
    bp = [_pad2(biases[i], 1, pdims[i + 1], f32) for i in range(L)]
    xp = jnp.pad(x.astype(f32), ((0, 0), (0, 0), (0, pdims[0] - Din)))

    Bt = _pick_mlp_batch_tile(B, N, max(pdims))
    G = B // Bt

    def kernel(x_ref, *refs):
        w_refs = refs[:L]
        b_refs = refs[L:2 * L]
        out_ref = refs[2 * L]
        xv = x_ref[...]                                           # [Bt, N, P0] f32
        if normalize_dim1:
            # F.normalize(dim=1): per (batch, lane) L2 norm over the N node entries.
            nrm = jnp.sqrt(jnp.sum(xv * xv, axis=1, keepdims=True))
            xv = xv / jnp.maximum(nrm, eps)
        h = xv.reshape(Bt * N, pdims[0])
        for i in range(L):
            h = (jnp.dot(h.astype(bf16), w_refs[i][...], preferred_element_type=f32)
                 + b_refs[i][...])
            if i < L - 1:
                h = jnp.tanh(h)
        out_ref[...] = h.reshape(Bt, N, pdims[-1]).astype(out_ref.dtype)

    def const_spec(shape):
        n = len(shape)
        return pl.BlockSpec(tuple(shape), lambda g, _n=n: (0,) * _n)

    out = pl.pallas_call(
        kernel,
        out_shape=jax.ShapeDtypeStruct((B, N, pdims[-1]), x.dtype),
        grid_spec=pltpu.PrefetchScalarGridSpec(
            num_scalar_prefetch=0,
            grid=(G,),
            in_specs=[pl.BlockSpec((Bt, N, pdims[0]), lambda g: (g, 0, 0))]
                     + [const_spec(w.shape) for w in wp]
                     + [const_spec(b.shape) for b in bp],
            out_specs=pl.BlockSpec((Bt, N, pdims[-1]), lambda g: (g, 0, 0)),
        ),
        compiler_params=pltpu.CompilerParams(dimension_semantics=("parallel",)),
    )(xp, *wp, *bp)
    return out[:, :, :dims[-1]]


# ----------------------------- full DSSL forward -----------------------------

def dssl_forward(obs, feature, params, feature_dim):
    """DSSL.forward(obs, feature) -> pred_val, eval-mode semantics (state_net='gnn')."""
    wq, bq = params["wq"], params["bq"]
    Z = wq[-1].shape[1] // 2
    # q_graph: only mu_q is consumed in eval mode, so slice the last layer to its mu
    # columns (std/logvar columns never hit the MXU).
    enc_w = list(wq[:-1]) + [wq[-1][:, :Z]]
    enc_b = list(bq[:-1]) + [bq[-1][:, :Z]]
    mu_q = _padded_mlp_forward(obs, enc_w, enc_b, normalize_dim1=True)
    # TODO(synk): training-mode dropout in q_graph and the reparameterization noise
    # (epsilon * std_q) are omitted; eval-mode forward uses sampled_z = mu_q.
    sampled_z = mu_q

    delta = state_gnn_forward(sampled_z, feature, params["gnn"], feature_dim)
    next_state = sampled_z + delta                                 # residual in _DSSL

    pred_val = _padded_mlp_forward(next_state, params["wp"], params["bp"],
                                   normalize_dim1=False)
    return pred_val


# ----------------------------- parameters & reference -----------------------------

def init_gnn_params(key, input_dim, hidden_dim, feature_dim):
    D, H, F = input_dim, hidden_dim, feature_dim
    keys = jax.random.split(key, 6)

    def lin(k, fan_in, fan_out):
        # PyTorch nn.Linear default init: U(-1/sqrt(fan_in), 1/sqrt(fan_in)); W pre-transposed.
        k1, k2 = jax.random.split(k)
        bound = 1.0 / np.sqrt(fan_in)
        w = jax.random.uniform(k1, (fan_in, fan_out), f32, -bound, bound)
        b = jax.random.uniform(k2, (1, fan_out), f32, -bound, bound)
        return w, b

    ew1, eb1 = lin(keys[0], 2 * D, H)
    ew2, eb2 = lin(keys[1], H, H)
    ew3, eb3 = lin(keys[2], H, H)
    nw1, nb1 = lin(keys[3], D + F + H, H)     # node MLP input = cat([states, feat, agg])
    nw2, nb2 = lin(keys[4], H, H)
    nw3, nb3 = lin(keys[5], H, D)
    return dict(
        ew1=ew1, eb1=eb1, ew2=ew2, eb2=eb2,
        eg=jnp.ones((1, H), f32), ebt=jnp.zeros((1, H), f32),
        ew3=ew3, eb3=eb3,
        nw1x=nw1[:D], nw1f=nw1[D:D + F], nw1agg=nw1[D + F:], nb1=nb1,
        nw2=nw2, nb2=nb2,
        ng=jnp.ones((1, H), f32), nbt=jnp.zeros((1, H), f32),
        nw3=nw3, nb3=nb3,
    )


def init_dssl_params(key, q_dims, p_dims, feature_dim):
    Z = q_dims[-1]
    keys = jax.random.split(key, 3)

    def xavier(k, din, dout):
        std = np.sqrt(2.0 / (din + dout))
        return jax.random.normal(k, (din, dout), f32) * std

    wq, bq = [], []
    kq = jax.random.split(keys[0], len(q_dims) - 1)
    for i, (din, dout) in enumerate(zip(q_dims[:-1], q_dims[1:])):
        if i == len(q_dims) - 2:
            dout *= 2                       # last encoder layer emits [mu, logvar]
        k1, k2 = jax.random.split(kq[i])
        wq.append(xavier(k1, din, dout))
        bq.append(jax.random.normal(k2, (1, dout), f32) * 0.001)

    wp, bp = [], []
    kp = jax.random.split(keys[1], len(p_dims) - 1)
    for i, (din, dout) in enumerate(zip(p_dims[:-1], p_dims[1:])):
        k1, k2 = jax.random.split(kp[i])
        wp.append(xavier(k1, din, dout))
        bp.append(jax.random.normal(k2, (1, dout), f32) * 0.001)

    gnn = init_gnn_params(keys[2], Z, Z, feature_dim)   # GNN input_dim = hidden_dim = Z
    return dict(wq=wq, bq=bq, wp=wp, bp=bp, gnn=gnn)


def _layer_norm_ref(x, gamma, beta, eps=1e-5):
    mu = jnp.mean(x, axis=-1, keepdims=True)
    var = jnp.mean((x - mu) ** 2, axis=-1, keepdims=True)
    return (x - mu) * jax.lax.rsqrt(var + eps) * gamma + beta


def _edge_lists(N):
    idx = np.arange(N)
    row = np.repeat(idx, N - 1)                                   # torch nonzero order
    col = np.concatenate([np.delete(idx, i) for i in range(N)])
    return row, col


def gnn_reference(states, feature, params, feature_dim):
    """Pure-JAX f32 reference matching the PyTorch StateGnnNet.forward semantics."""
    B, N, D = states.shape
    F = feature_dim
    x = states.reshape(B * N, D)
    row_l, col_l = _edge_lists(N)
    offs = np.repeat(np.arange(B) * N, N * (N - 1))
    row = np.tile(row_l, B) + offs
    col = np.tile(col_l, B) + offs
    e_in = jnp.concatenate([x[row], x[col]], axis=-1)
    h = jnp.maximum(e_in @ params["ew1"] + params["eb1"], 0.0)
    h = h @ params["ew2"] + params["eb2"]
    h = _layer_norm_ref(h, params["eg"], params["ebt"])
    h = jnp.maximum(h, 0.0)
    e = h @ params["ew3"] + params["eb3"]
    agg = jax.ops.segment_sum(e, jnp.asarray(row), num_segments=B * N)
    feat = jax.nn.one_hot(feature, F, dtype=states.dtype)
    feat = jnp.broadcast_to(feat[:, None, :], (B, N, F)).reshape(B * N, F)
    W1 = jnp.concatenate([params["nw1x"], params["nw1f"], params["nw1agg"]], axis=0)
    n_in = jnp.concatenate([x, feat, agg], axis=-1)
    g = jnp.maximum(n_in @ W1 + params["nb1"], 0.0)
    g = g @ params["nw2"] + params["nb2"]
    g = _layer_norm_ref(g, params["ng"], params["nbt"])
    g = jnp.maximum(g, 0.0)
    out = g @ params["nw3"] + params["nb3"]
    return out.reshape(B, N, D)


def dssl_reference(obs, feature, params, feature_dim):
    """Pure-JAX f32 reference of DSSL.forward (eval mode, state_net='gnn')."""
    wq, bq = params["wq"], params["bq"]
    nrm = jnp.sqrt(jnp.sum(obs * obs, axis=1, keepdims=True))
    h = obs / jnp.maximum(nrm, 1e-6)                              # F.normalize(dim=1)
    for i, (w, b) in enumerate(zip(wq, bq)):
        h = h @ w + b
        if i != len(wq) - 1:
            h = jnp.tanh(h)
    Z = wq[-1].shape[1] // 2
    mu_q = h[:, :, :Z]
    sampled_z = mu_q                                              # training flag == 0
    delta = gnn_reference(sampled_z, feature, params["gnn"], feature_dim)
    next_state = sampled_z + delta
    g = next_state
    for i, (w, b) in enumerate(zip(params["wp"], params["bp"])):
        g = g @ w + b
        if i != len(params["wp"]) - 1:
            g = jnp.tanh(g)
    return g


if __name__ == "__main__":
    # batch, num_objects, n_items, hidden, embedding (q_dims[-1]), feature_dim
    B, N = 16, 4
    n_items, H1, Z = 96, 64, 32
    F_DIM = 6
    q_dims = [n_items, H1, Z]
    p_dims = [Z, H1, n_items]

    key = jax.random.PRNGKey(0)
    k_obs, k_feat, k_par = jax.random.split(key, 3)
    obs = jax.random.normal(k_obs, (B, N, n_items), f32)
    feature = jax.random.randint(k_feat, (B,), 0, F_DIM)
    params = init_dssl_params(k_par, q_dims, p_dims, F_DIM)

    fwd = jax.jit(lambda o, u, p: dssl_forward(o, u, p, F_DIM))
    out = jax.block_until_ready(fwd(obs, feature, params))

    ref = dssl_reference(obs, feature, params, F_DIM)
    np.testing.assert_allclose(np.asarray(out), np.asarray(ref), rtol=6e-2, atol=6e-2)
    assert out.shape == (B, N, n_items) and bool(jnp.all(jnp.isfinite(out)))
    print("KERNEL_OK")
</pallas_src>

<mosaic_0001>
module attributes {stable_mosaic.version = 11 : i64} {
  func.func @kernel(%arg0: i32, %arg1: memref<8x4x128xf32, #tpu.memory_space<vmem>>, %arg2: memref<128x128xbf16, #tpu.memory_space<vmem>>, %arg3: memref<128x128xbf16, #tpu.memory_space<vmem>>, %arg4: memref<1x128xf32, #tpu.memory_space<vmem>>, %arg5: memref<1x128xf32, #tpu.memory_space<vmem>>, %arg6: memref<8x4x128xf32, #tpu.memory_space<vmem>>) attributes {dimension_semantics = [#tpu.dimension_semantics<parallel>], iteration_bounds = array<i64: 2>, scalar_prefetch = 0 : i64, scratch_operands = 0 : i64, tpu.core_type = #tpu.core_type<tc>, window_params = [{transform_indices = @transform_0, window_bounds = array<i64: 8, 4, 128>}, {pipeline_mode = #tpu.pipeline_mode<synchronous>, transform_indices = @transform_1, window_bounds = array<i64: 128, 128>}, {pipeline_mode = #tpu.pipeline_mode<synchronous>, transform_indices = @transform_2, window_bounds = array<i64: 128, 128>}, {pipeline_mode = #tpu.pipeline_mode<synchronous>, transform_indices = @transform_3, window_bounds = array<i64: 1, 128>}, {pipeline_mode = #tpu.pipeline_mode<synchronous>, transform_indices = @transform_4, window_bounds = array<i64: 1, 128>}, {transform_indices = @transform_5, window_bounds = array<i64: 8, 4, 128>}]} {
    %c0 = arith.constant 0 : index
    %c0_0 = arith.constant 0 : index
    %c0_1 = arith.constant 0 : index
    %0 = vector.load %arg1[%c0, %c0_0, %c0_1] : memref<8x4x128xf32, #tpu.memory_space<vmem>>, vector<8x4x128xf32>
    %1 = arith.mulf %0, %0 : vector<8x4x128xf32>
    %cst = arith.constant dense<0.000000e+00> : vector<8x128xf32>
    %2 = vector.multi_reduction <add>, %1, %cst [1] : vector<8x4x128xf32> to vector<8x128xf32>
    %3 = vector.shape_cast %2 : vector<8x128xf32> to vector<8x1x128xf32>
    %4 = math.sqrt %3 : vector<8x1x128xf32>
    %cst_2 = arith.constant 9.99999997E-7 : f32
    %5 = vector.broadcast %cst_2 : f32 to vector<8x1x128xf32>
    %6 = arith.maximumf %4, %5 : vector<8x1x128xf32>
    %7 = vector.broadcast %6 : vector<8x1x128xf32> to vector<8x4x128xf32>
    %8 = arith.divf %0, %7 : vector<8x4x128xf32>
    %9 = vector.shape_cast %8 : vector<8x4x128xf32> to vector<32x128xf32>
    %10 = arith.truncf %9 : vector<32x128xf32> to vector<32x128xbf16>
    %c0_3 = arith.constant 0 : index
    %c0_4 = arith.constant 0 : index
    %11 = vector.load %arg2[%c0_3, %c0_4] : memref<128x128xbf16, #tpu.memory_space<vmem>>, vector<128x128xbf16>
    %cst_5 = arith.constant dense<0.000000e+00> : vector<32x128xf32>
    %12 = tpu.matmul %10, %11, %cst_5 {dimension_numbers = #tpu.dot_dimension_numbers<[1], [0], [0], [1], [0, 0, 1, 1], [], []>} : vector<32x128xbf16>, vector<128x128xbf16>, vector<32x128xf32> -> vector<32x128xf32>
    %c0_6 = arith.constant 0 : index
    %c0_7 = arith.constant 0 : index
    %13 = vector.load %arg4[%c0_6, %c0_7] : memref<1x128xf32, #tpu.memory_space<vmem>>, vector<1x128xf32>
    %14 = vector.broadcast %13 : vector<1x128xf32> to vector<32x128xf32>
    %15 = arith.addf %12, %14 : vector<32x128xf32>
    %16 = math.tanh %15 : vector<32x128xf32>
    %17 = arith.truncf %16 : vector<32x128xf32> to vector<32x128xbf16>
    %c0_8 = arith.constant 0 : index
    %c0_9 = arith.constant 0 : index
    %18 = vector.load %arg3[%c0_8, %c0_9] : memref<128x128xbf16, #tpu.memory_space<vmem>>, vector<128x128xbf16>
    %cst_10 = arith.constant dense<0.000000e+00> : vector<32x128xf32>
    %19 = tpu.matmul %17, %18, %cst_10 {dimension_numbers = #tpu.dot_dimension_numbers<[1], [0], [0], [1], [0, 0, 1, 1], [], []>} : vector<32x128xbf16>, vector<128x128xbf16>, vector<32x128xf32> -> vector<32x128xf32>
    %c0_11 = arith.constant 0 : index
    %c0_12 = arith.constant 0 : index
    %20 = vector.load %arg5[%c0_11, %c0_12] : memref<1x128xf32, #tpu.memory_space<vmem>>, vector<1x128xf32>
    %21 = vector.broadcast %20 : vector<1x128xf32> to vector<32x128xf32>
    %22 = arith.addf %19, %21 : vector<32x128xf32>
    %23 = vector.shape_cast %22 : vector<32x128xf32> to vector<8x4x128xf32>
    %c0_13 = arith.constant 0 : index
    %c0_14 = arith.constant 0 : index
    %c0_15 = arith.constant 0 : index
    %24 = vector.load %arg6[%c0_13, %c0_14, %c0_15] : memref<8x4x128xf32, #tpu.memory_space<vmem>>, vector<8x4x128xf32>
    tpu.vector_store %arg6[%c0_13, %c0_14, %c0_15], %23 {strides = array<i32>} : memref<8x4x128xf32, #tpu.memory_space<vmem>>, vector<8x4x128xf32>,
    return
  }
  func.func @transform_0(%arg0: i32) -> (i32, i32, i32) {
    %c0_i32 = arith.constant 0 : i32
    %c0_i32_0 = arith.constant 0 : i32
    %c0_i32_1 = arith.constant 0 : i32
    return %arg0, %c0_i32, %c0_i32_0 : i32, i32, i32
  }
  func.func @transform_1(%arg0: i32) -> (i32, i32) {
    %c0_i32 = arith.constant 0 : i32
    %c0_i32_0 = arith.constant 0 : i32
    %c0_i32_1 = arith.constant 0 : i32
    return %c0_i32, %c0_i32_0 : i32, i32
  }
  func.func @transform_2(%arg0: i32) -> (i32, i32) {
    %c0_i32 = arith.constant 0 : i32
    %c0_i32_0 = arith.constant 0 : i32
    %c0_i32_1 = arith.constant 0 : i32
    return %c0_i32, %c0_i32_0 : i32, i32
  }
  func.func @transform_3(%arg0: i32) -> (i32, i32) {
    %c0_i32 = arith.constant 0 : i32
    %c0_i32_0 = arith.constant 0 : i32
    %c0_i32_1 = arith.constant 0 : i32
    return %c0_i32, %c0_i32_0 : i32, i32
  }
  func.func @transform_4(%arg0: i32) -> (i32, i32) {
    %c0_i32 = arith.constant 0 : i32
    %c0_i32_0 = arith.constant 0 : i32
    %c0_i32_1 = arith.constant 0 : i32
    return %c0_i32, %c0_i32_0 : i32, i32
  }
  func.func @transform_5(%arg0: i32) -> (i32, i32, i32) {
    %c0_i32 = arith.constant 0 : i32
    %c0_i32_0 = arith.constant 0 : i32
    %c0_i32_1 = arith.constant 0 : i32
    return %arg0, %c0_i32, %c0_i32_0 : i32, i32, i32
  }
}

module attributes {stable_mosaic.version = 11 : i64} {
  func.func @kernel(%arg0: i32, %arg1: memref<1x32x32xf32, #tpu.memory_space<vmem>>, %arg2: memref<1x32x128xf32, #tpu.memory_space<vmem>>, %arg3: memref<32x128xbf16, #tpu.memory_space<vmem>>, %arg4: memref<32x128xbf16, #tpu.memory_space<vmem>>, %arg5: memref<1x128xf32, #tpu.memory_space<vmem>>, %arg6: memref<128x128xbf16, #tpu.memory_space<vmem>>, %arg7: memref<1x128xf32, #tpu.memory_space<vmem>>, %arg8: memref<1x128xf32, #tpu.memory_space<vmem>>, %arg9: memref<1x128xf32, #tpu.memory_space<vmem>>, %arg10: memref<128x128xbf16, #tpu.memory_space<vmem>>, %arg11: memref<1x128xf32, #tpu.memory_space<vmem>>, %arg12: memref<32x128xbf16, #tpu.memory_space<vmem>>, %arg13: memref<128x128xbf16, #tpu.memory_space<vmem>>, %arg14: memref<128x128xbf16, #tpu.memory_space<vmem>>, %arg15: memref<1x128xf32, #tpu.memory_space<vmem>>, %arg16: memref<1x128xf32, #tpu.memory_space<vmem>>, %arg17: memref<1x128xf32, #tpu.memory_space<vmem>>, %arg18: memref<128x128xbf16, #tpu.memory_space<vmem>>, %arg19: memref<1x128xf32, #tpu.memory_space<vmem>>, %arg20: memref<1x32x128xf32, #tpu.memory_space<vmem>>) attributes {dimension_semantics = [#tpu.dimension_semantics<parallel>], iteration_bounds = array<i64: 2>, scalar_prefetch = 0 : i64, scratch_operands = 0 : i64, tpu.core_type = #tpu.core_type<tc>, window_params = [{transform_indices = @transform_0, window_bounds = array<i64: 1, 32, 32>}, {transform_indices = @transform_1, window_bounds = array<i64: 1, 32, 128>}, {pipeline_mode = #tpu.pipeline_mode<synchronous>, transform_indices = @transform_2, window_bounds = array<i64: 32, 128>}, {pipeline_mode = #tpu.pipeline_mode<synchronous>, transform_indices = @transform_3, window_bounds = array<i64: 32, 128>}, {pipeline_mode = #tpu.pipeline_mode<synchronous>, transform_indices = @transform_4, window_bounds = array<i64: 1, 128>}, {pipeline_mode = #tpu.pipeline_mode<synchronous>, transform_indices = @transform_5, window_bounds = array<i64: 128, 128>}, {pipeline_mode = #tpu.pipeline_mode<synchronous>, transform_indices = @transform_6, window_bounds = array<i64: 1, 128>}, {pipeline_mode = #tpu.pipeline_mode<synchronous>, transform_indices = @transform_7, window_bounds = array<i64: 1, 128>}, {pipeline_mode = #tpu.pipeline_mode<synchronous>, transform_indices = @transform_8, window_bounds = array<i64: 1, 128>}, {pipeline_mode = #tpu.pipeline_mode<synchronous>, transform_indices = @transform_9, window_bounds = array<i64: 128, 128>}, {pipeline_mode = #tpu.pipeline_mode<synchronous>, transform_indices = @transform_10, window_bounds = array<i64: 1, 128>}, {pipeline_mode = #tpu.pipeline_mode<synchronous>, transform_indices = @transform_11, window_bounds = array<i64: 32, 128>}, {pipeline_mode = #tpu.pipeline_mode<synchronous>, transform_indices = @transform_12, window_bounds = array<i64: 128, 128>}, {pipeline_mode = #tpu.pipeline_mode<synchronous>, transform_indices = @transform_13, window_bounds = array<i64: 128, 128>}, {pipeline_mode = #tpu.pipeline_mode<synchronous>, transform_indices = @transform_14, window_bounds = array<i64: 1, 128>}, {pipeline_mode = #tpu.pipeline_mode<synchronous>, transform_indices = @transform_15, window_bounds = array<i64: 1, 128>}, {pipeline_mode = #tpu.pipeline_mode<synchronous>, transform_indices = @transform_16, window_bounds = array<i64: 1, 128>}, {pipeline_mode = #tpu.pipeline_mode<synchronous>, transform_indices = @transform_17, window_bounds = array<i64: 128, 128>}, {pipeline_mode = #tpu.pipeline_mode<synchronous>, transform_indices = @transform_18, window_bounds = array<i64: 1, 128>}, {transform_indices = @transform_19, window_bounds = array<i64: 1, 32, 128>}]} {
    %c0 = arith.constant 0 : index
    %c0_0 = arith.constant 0 : index
    %c0_1 = arith.constant 0 : index
    %0 = vector.load %arg1[%c0, %c0_0, %c0_1] : memref<1x32x32xf32, #tpu.memory_space<vmem>>, vector<1x32x32xf32>
    %1 = vector.shape_cast %0 : vector<1x32x32xf32> to vector<32x32xf32>
    %2 = arith.truncf %1 : vector<32x32xf32> to vector<32x32xbf16>
    %c0_2 = arith.constant 0 : index
    %c0_3 = arith.constant 0 : index
    %3 = vector.load %arg3[%c0_2, %c0_3] : memref<32x128xbf16, #tpu.memory_space<vmem>>, vector<32x128xbf16>
    %cst = arith.constant dense<0.000000e+00> : vector<32x128xf32>
    %4 = tpu.matmul %2, %3, %cst {dimension_numbers = #tpu.dot_dimension_numbers<[1], [0], [0], [1], [0, 0, 1, 1], [], []>} : vector<32x32xbf16>, vector<32x128xbf16>, vector<32x128xf32> -> vector<32x128xf32>
    %c0_4 = arith.constant 0 : index
    %c0_5 = arith.constant 0 : index
    %5 = vector.load %arg5[%c0_4, %c0_5] : memref<1x128xf32, #tpu.memory_space<vmem>>, vector<1x128xf32>
    %6 = vector.broadcast %5 : vector<1x128xf32> to vector<32x128xf32>
    %7 = arith.addf %4, %6 : vector<32x128xf32>
    %c0_6 = arith.constant 0 : index
    %c0_7 = arith.constant 0 : index
    %8 = vector.load %arg4[%c0_6, %c0_7] : memref<32x128xbf16, #tpu.memory_space<vmem>>, vector<32x128xbf16>
    %cst_8 = arith.constant dense<0.000000e+00> : vector<32x128xf32>
    %9 = tpu.matmul %2, %8, %cst_8 {dimension_numbers = #tpu.dot_dimension_numbers<[1], [0], [0], [1], [0, 0, 1, 1], [], []>} : vector<32x32xbf16>, vector<32x128xbf16>, vector<32x128xf32> -> vector<32x128xf32>
    %c24_i32 = arith.constant 24 : i32
    %10 = tpu.dynamic_rotate %9 by %c24_i32 dim 0 : vector<32x128xf32>, i32 -> vector<32x128xf32>
    %11 = arith.addf %7, %10 : vector<32x128xf32>
    %c16_i32 = arith.constant 16 : i32
    %12 = tpu.dynamic_rotate %9 by %c16_i32 dim 0 : vector<32x128xf32>, i32 -> vector<32x128xf32>
    %13 = arith.addf %7, %12 : vector<32x128xf32>
    %c8_i32 = arith.constant 8 : i32
    %14 = tpu.dynamic_rotate %9 by %c8_i32 dim 0 : vector<32x128xf32>, i32 -> vector<32x128xf32>
    %15 = arith.addf %7, %14 : vector<32x128xf32>
    %16 = tpu.concatenate %11, %13, %15 in 0 : vector<32x128xf32>, vector<32x128xf32>, vector<32x128xf32> -> vector<96x128xf32>
    %cst_9 = arith.constant 0.000000e+00 : f32
    %17 = vector.broadcast %cst_9 : f32 to vector<96x128xf32>
    %18 = arith.maximumf %16, %17 : vector<96x128xf32>
    %19 = arith.truncf %18 : vector<96x128xf32> to vector<96x128xbf16>
    %c0_10 = arith.constant 0 : index
    %c0_11 = arith.constant 0 : index
    %20 = vector.load %arg6[%c0_10, %c0_11] : memref<128x128xbf16, #tpu.memory_space<vmem>>, vector<128x128xbf16>
    %cst_12 = arith.constant dense<0.000000e+00> : vector<96x128xf32>
    %21 = tpu.matmul %19, %20, %cst_12 {dimension_numbers = #tpu.dot_dimension_numbers<[1], [0], [0], [1], [0, 0, 1, 1], [], []>} : vector<96x128xbf16>, vector<128x128xbf16>, vector<96x128xf32> -> vector<96x128xf32>
    %c0_13 = arith.constant 0 : index
    %c0_14 = arith.constant 0 : index
    %22 = vector.load %arg7[%c0_13, %c0_14] : memref<1x128xf32, #tpu.memory_space<vmem>>, vector<1x128xf32>
    %23 = vector.broadcast %22 : vector<1x128xf32> to vector<96x128xf32>
    %24 = arith.addf %21, %23 : vector<96x128xf32>
    %c0_15 = arith.constant 0 : index
    %c0_16 = arith.constant 0 : index
    %25 = vector.load %arg8[%c0_15, %c0_16] : memref<1x128xf32, #tpu.memory_space<vmem>>, vector<1x128xf32>
    %c0_17 = arith.constant 0 : index
    %c0_18 = arith.constant 0 : index
    %26 = vector.load %arg9[%c0_17, %c0_18] : memref<1x128xf32, #tpu.memory_space<vmem>>, vector<1x128xf32>
    %27 = tpu.iota {dimensions = array<i32: 1>} : vector<1x128xi32>
    %c32_i32 = arith.constant 32 : i32
    %28 = vector.broadcast %c32_i32 : i32 to vector<1x128xi32>
    %29 = arith.cmpi slt, %27, %28 : vector<1x128xi32>
    %30 = arith.extui %29 : vector<1x128xi1> to vector<1x128xi32>
    %31 = arith.sitofp %30 : vector<1x128xi32> to vector<1x128xf32>
    %cst_19 = arith.constant dense<0.000000e+00> : vector<96xf32>
    %32 = vector.multi_reduction <add>, %24, %cst_19 [1] : vector<96x128xf32> to vector<96xf32>
    %33 = vector.shape_cast %32 : vector<96xf32> to vector<96x1xf32>
    %cst_20 = arith.constant 3.125000e-02 : f32
    %34 = vector.broadcast %cst_20 : f32 to vector<96x1xf32>
    %35 = arith.mulf %33, %34 : vector<96x1xf32>
    %36 = vector.broadcast %35 : vector<96x1xf32> to vector<96x128xf32>
    %37 = arith.subf %24, %36 : vector<96x128xf32>
    %38 = vector.broadcast %31 : vector<1x128xf32> to vector<96x128xf32>
    %39 = arith.mulf %37, %38 : vector<96x128xf32>
    %40 = arith.mulf %39, %39 : vector<96x128xf32>
    %cst_21 = arith.constant dense<0.000000e+00> : vector<96xf32>
    %41 = vector.multi_reduction <add>, %40, %cst_21 [1] : vector<96x128xf32> to vector<96xf32>
    %42 = vector.shape_cast %41 : vector<96xf32> to vector<96x1xf32>
    %cst_22 = arith.constant 3.125000e-02 : f32
    %43 = vector.broadcast %cst_22 : f32 to vector<96x1xf32>
    %44 = arith.mulf %42, %43 : vector<96x1xf32>
    %cst_23 = arith.constant 9.99999974E-6 : f32
    %45 = vector.broadcast %cst_23 : f32 to vector<96x1xf32>
    %46 = arith.addf %44, %45 : vector<96x1xf32>
    %47 = math.rsqrt %46 : vector<96x1xf32>
    %48 = vector.broadcast %47 : vector<96x1xf32> to vector<96x128xf32>
    %49 = arith.mulf %39, %48 : vector<96x128xf32>
    %50 = vector.broadcast %25 : vector<1x128xf32> to vector<96x128xf32>
    %51 = arith.mulf %49, %50 : vector<96x128xf32>
    %52 = vector.broadcast %26 : vector<1x128xf32> to vector<96x128xf32>
    %53 = arith.addf %51, %52 : vector<96x128xf32>
    %cst_24 = arith.constant 0.000000e+00 : f32
    %54 = vector.broadcast %cst_24 : f32 to vector<96x128xf32>
    %55 = arith.maximumf %53, %54 : vector<96x128xf32>
    %56 = arith.truncf %55 : vector<96x128xf32> to vector<96x128xbf16>
    %c0_25 = arith.constant 0 : index
    %c0_26 = arith.constant 0 : index
    %57 = vector.load %arg10[%c0_25, %c0_26] : memref<128x128xbf16, #tpu.memory_space<vmem>>, vector<128x128xbf16>
    %cst_27 = arith.constant dense<0.000000e+00> : vector<96x128xf32>
    %58 = tpu.matmul %56, %57, %cst_27 {dimension_numbers = #tpu.dot_dimension_numbers<[1], [0], [0], [1], [0, 0, 1, 1], [], []>} : vector<96x128xbf16>, vector<128x128xbf16>, vector<96x128xf32> -> vector<96x128xf32>
    %c0_28 = arith.constant 0 : index
    %c0_29 = arith.constant 0 : index
    %59 = vector.load %arg11[%c0_28, %c0_29] : memref<1x128xf32, #tpu.memory_space<vmem>>, vector<1x128xf32>
    %60 = vector.broadcast %59 : vector<1x128xf32> to vector<96x128xf32>
    %61 = arith.addf %58, %60 : vector<96x128xf32>
    %62 = vector.extract_strided_slice %61 {offsets = [0, 0], sizes = [32, 128], strides = [1, 1]} : vector<96x128xf32> to vector<32x128xf32>
    %63 = vector.extract_strided_slice %61 {offsets = [32, 0], sizes = [32, 128], strides = [1, 1]} : vector<96x128xf32> to vector<32x128xf32>
    %64 = arith.addf %62, %63 : vector<32x128xf32>
    %65 = vector.extract_strided_slice %61 {offsets = [64, 0], sizes = [32, 128], strides = [1, 1]} : vector<96x128xf32> to vector<32x128xf32>
    %66 = arith.addf %64, %65 : vector<32x128xf32>
    %c0_30 = arith.constant 0 : index
    %c0_31 = arith.constant 0 : index
    %67 = vector.load %arg12[%c0_30, %c0_31] : memref<32x128xbf16, #tpu.memory_space<vmem>>, vector<32x128xbf16>
    %cst_32 = arith.constant dense<0.000000e+00> : vector<32x128xf32>
    %68 = tpu.matmul %2, %67, %cst_32 {dimension_numbers = #tpu.dot_dimension_numbers<[1], [0], [0], [1], [0, 0, 1, 1], [], []>} : vector<32x32xbf16>, vector<32x128xbf16>, vector<32x128xf32> -> vector<32x128xf32>
    %69 = arith.truncf %66 : vector<32x128xf32> to vector<32x128xbf16>
    %c0_33 = arith.constant 0 : index
    %c0_34 = arith.constant 0 : index
    %70 = vector.load %arg13[%c0_33, %c0_34] : memref<128x128xbf16, #tpu.memory_space<vmem>>, vector<128x128xbf16>
    %cst_35 = arith.constant dense<0.000000e+00> : vector<32x128xf32>
    %71 = tpu.matmul %69, %70, %cst_35 {dimension_numbers = #tpu.dot_dimension_numbers<[1], [0], [0], [1], [0, 0, 1, 1], [], []>} : vector<32x128xbf16>, vector<128x128xbf16>, vector<32x128xf32> -> vector<32x128xf32>
    %72 = arith.addf %68, %71 : vector<32x128xf32>
    %c0_36 = arith.constant 0 : index
    %c0_37 = arith.constant 0 : index
    %c0_38 = arith.constant 0 : index
    %73 = vector.load %arg2[%c0_36, %c0_37, %c0_38] : memref<1x32x128xf32, #tpu.memory_space<vmem>>, vector<1x32x128xf32>
    %74 = vector.shape_cast %73 : vector<1x32x128xf32> to vector<32x128xf32>
    %75 = arith.addf %72, %74 : vector<32x128xf32>
    %cst_39 = arith.constant 0.000000e+00 : f32
    %76 = vector.broadcast %cst_39 : f32 to vector<32x128xf32>
    %77 = arith.maximumf %75, %76 : vector<32x128xf32>
    %78 = arith.truncf %77 : vector<32x128xf32> to vector<32x128xbf16>
    %c0_40 = arith.constant 0 : index
    %c0_41 = arith.constant 0 : index
    %79 = vector.load %arg14[%c0_40, %c0_41] : memref<128x128xbf16, #tpu.memory_space<vmem>>, vector<128x128xbf16>
    %cst_42 = arith.constant dense<0.000000e+00> : vector<32x128xf32>
    %80 = tpu.matmul %78, %79, %cst_42 {dimension_numbers = #tpu.dot_dimension_numbers<[1], [0], [0], [1], [0, 0, 1, 1], [], []>} : vector<32x128xbf16>, vector<128x128xbf16>, vector<32x128xf32> -> vector<32x128xf32>
    %c0_43 = arith.constant 0 : index
    %c0_44 = arith.constant 0 : index
    %81 = vector.load %arg15[%c0_43, %c0_44] : memref<1x128xf32, #tpu.memory_space<vmem>>, vector<1x128xf32>
    %82 = vector.broadcast %81 : vector<1x128xf32> to vector<32x128xf32>
    %83 = arith.addf %80, %82 : vector<32x128xf32>
    %c0_45 = arith.constant 0 : index
    %c0_46 = arith.constant 0 : index
    %84 = vector.load %arg16[%c0_45, %c0_46] : memref<1x128xf32, #tpu.memory_space<vmem>>, vector<1x128xf32>
    %c0_47 = arith.constant 0 : index
    %c0_48 = arith.constant 0 : index
    %85 = vector.load %arg17[%c0_47, %c0_48] : memref<1x128xf32, #tpu.memory_space<vmem>>, vector<1x128xf32>
    %86 = tpu.iota {dimensions = array<i32: 1>} : vector<1x128xi32>
    %c32_i32_49 = arith.constant 32 : i32
    %87 = vector.broadcast %c32_i32_49 : i32 to vector<1x128xi32>
    %88 = arith.cmpi slt, %86, %87 : vector<1x128xi32>
    %89 = arith.extui %88 : vector<1x128xi1> to vector<1x128xi32>
    %90 = arith.sitofp %89 : vector<1x128xi32> to vector<1x128xf32>
    %cst_50 = arith.constant dense<0.000000e+00> : vector<32xf32>
    %91 = vector.multi_reduction <add>, %83, %cst_50 [1] : vector<32x128xf32> to vector<32xf32>
    %92 = vector.shape_cast %91 : vector<32xf32> to vector<32x1xf32>
    %cst_51 = arith.constant 3.125000e-02 : f32
    %93 = vector.broadcast %cst_51 : f32 to vector<32x1xf32>
    %94 = arith.mulf %92, %93 : vector<32x1xf32>
    %95 = vector.broadcast %94 : vector<32x1xf32> to vector<32x128xf32>
    %96 = arith.subf %83, %95 : vector<32x128xf32>
    %97 = vector.broadcast %90 : vector<1x128xf32> to vector<32x128xf32>
    %98 = arith.mulf %96, %97 : vector<32x128xf32>
    %99 = arith.mulf %98, %98 : vector<32x128xf32>
    %cst_52 = arith.constant dense<0.000000e+00> : vector<32xf32>
    %100 = vector.multi_reduction <add>, %99, %cst_52 [1] : vector<32x128xf32> to vector<32xf32>
    %101 = vector.shape_cast %100 : vector<32xf32> to vector<32x1xf32>
    %cst_53 = arith.constant 3.125000e-02 : f32
    %102 = vector.broadcast %cst_53 : f32 to vector<32x1xf32>
    %103 = arith.mulf %101, %102 : vector<32x1xf32>
    %cst_54 = arith.constant 9.99999974E-6 : f32
    %104 = vector.broadcast %cst_54 : f32 to vector<32x1xf32>
    %105 = arith.addf %103, %104 : vector<32x1xf32>
    %106 = math.rsqrt %105 : vector<32x1xf32>
    %107 = vector.broadcast %106 : vector<32x1xf32> to vector<32x128xf32>
    %108 = arith.mulf %98, %107 : vector<32x128xf32>
    %109 = vector.broadcast %84 : vector<1x128xf32> to vector<32x128xf32>
    %110 = arith.mulf %108, %109 : vector<32x128xf32>
    %111 = vector.broadcast %85 : vector<1x128xf32> to vector<32x128xf32>
    %112 = arith.addf %110, %111 : vector<32x128xf32>
    %cst_55 = arith.constant 0.000000e+00 : f32
    %113 = vector.broadcast %cst_55 : f32 to vector<32x128xf32>
    %114 = arith.maximumf %112, %113 : vector<32x128xf32>
    %115 = arith.truncf %114 : vector<32x128xf32> to vector<32x128xbf16>
    %c0_56 = arith.constant 0 : index
    %c0_57 = arith.constant 0 : index
    %116 = vector.load %arg18[%c0_56, %c0_57] : memref<128x128xbf16, #tpu.memory_space<vmem>>, vector<128x128xbf16>
    %cst_58 = arith.constant dense<0.000000e+00> : vector<32x128xf32>
    %117 = tpu.matmul %115, %116, %cst_58 {dimension_numbers = #tpu.dot_dimension_numbers<[1], [0], [0], [1], [0, 0, 1, 1], [], []>} : vector<32x128xbf16>, vector<128x128xbf16>, vector<32x128xf32> -> vector<32x128xf32>
    %c0_59 = arith.constant 0 : index
    %c0_60 = arith.constant 0 : index
    %118 = vector.load %arg19[%c0_59, %c0_60] : memref<1x128xf32, #tpu.memory_space<vmem>>, vector<1x128xf32>
    %119 = vector.broadcast %118 : vector<1x128xf32> to vector<32x128xf32>
    %120 = arith.addf %117, %119 : vector<32x128xf32>
    %c0_61 = arith.constant 0 : index
    %c0_62 = arith.constant 0 : index
    %c0_63 = arith.constant 0 : index
    %121 = vector.load %arg20[%c0_61, %c0_62, %c0_63] : memref<1x32x128xf32, #tpu.memory_space<vmem>>, vector<1x32x128xf32>
    %122 = vector.shape_cast %121 : vector<1x32x128xf32> to vector<32x128xf32>
    %123 = vector.shape_cast %120 : vector<32x128xf32> to vector<1x32x128xf32>
    tpu.vector_store %arg20[%c0_61, %c0_62, %c0_63], %123 {strides = array<i32>} : memref<1x32x128xf32, #tpu.memory_space<vmem>>, vector<1x32x128xf32>,
    return
  }
  func.func @transform_0(%arg0: i32) -> (i32, i32, i32) {
    %c0_i32 = arith.constant 0 : i32
    %c0_i32_0 = arith.constant 0 : i32
    %c0_i32_1 = arith.constant 0 : i32
    return %arg0, %c0_i32, %c0_i32_0 : i32, i32, i32
  }
  func.func @transform_1(%arg0: i32) -> (i32, i32, i32) {
    %c0_i32 = arith.constant 0 : i32
    %c0_i32_0 = arith.constant 0 : i32
    %c0_i32_1 = arith.constant 0 : i32
    return %arg0, %c0_i32, %c0_i32_0 : i32, i32, i32
  }
  func.func @transform_2(%arg0: i32) -> (i32, i32) {
    %c0_i32 = arith.constant 0 : i32
    %c0_i32_0 = arith.constant 0 : i32
    %c0_i32_1 = arith.constant 0 : i32
    return %c0_i32, %c0_i32_0 : i32, i32
  }
  func.func @transform_3(%arg0: i32) -> (i32, i32) {
    %c0_i32 = arith.constant 0 : i32
    %c0_i32_0 = arith.constant 0 : i32
    %c0_i32_1 = arith.constant 0 : i32
    return %c0_i32, %c0_i32_0 : i32, i32
  }
  func.func @transform_4(%arg0: i32) -> (i32, i32) {
    %c0_i32 = arith.constant 0 : i32
    %c0_i32_0 = arith.constant 0 : i32
    %c0_i32_1 = arith.constant 0 : i32
    return %c0_i32, %c0_i32_0 : i32, i32
  }
  func.func @transform_5(%arg0: i32) -> (i32, i32) {
    %c0_i32 = arith.constant 0 : i32
    %c0_i32_0 = arith.constant 0 : i32
    %c0_i32_1 = arith.constant 0 : i32
    return %c0_i32, %c0_i32_0 : i32, i32
  }
  func.func @transform_6(%arg0: i32) -> (i32, i32) {
    %c0_i32 = arith.constant 0 : i32
    %c0_i32_0 = arith.constant 0 : i32
    %c0_i32_1 = arith.constant 0 : i32
    return %c0_i32, %c0_i32_0 : i32, i32
  }
  func.func @transform_7(%arg0: i32) -> (i32, i32) {
    %c0_i32 = arith.constant 0 : i32
    %c0_i32_0 = arith.constant 0 : i32
    %c0_i32_1 = arith.constant 0 : i32
    return %c0_i32, %c0_i32_0 : i32, i32
  }
  func.func @transform_8(%arg0: i32) -> (i32, i32) {
    %c0_i32 = arith.constant 0 : i32
    %c0_i32_0 = arith.constant 0 : i32
    %c0_i32_1 = arith.constant 0 : i32
    return %c0_i32, %c0_i32_0 : i32, i32
  }
  func.func @transform_9(%arg0: i32) -> (i32, i32) {
    %c0_i32 = arith.constant 0 : i32
    %c0_i32_0 = arith.constant 0 : i32
    %c0_i32_1 = arith.constant 0 : i32
    return %c0_i32, %c0_i32_0 : i32, i32
  }
  func.func @transform_10(%arg0: i32) -> (i32, i32) {
    %c0_i32 = arith.constant 0 : i32
    %c0_i32_0 = arith.constant 0 : i32
    %c0_i32_1 = arith.constant 0 : i32
    return %c0_i32, %c0_i32_0 : i32, i32
  }
  func.func @transform_11(%arg0: i32) -> (i32, i32) {
    %c0_i32 = arith.constant 0 : i32
    %c0_i32_0 = arith.constant 0 : i32
    %c0_i32_1 = arith.constant 0 : i32
    return %c0_i32, %c0_i32_0 : i32, i32
  }
  func.func @transform_12(%arg0: i32) -> (i32, i32) {
    %c0_i32 = arith.constant 0 : i32
    %c0_i32_0 = arith.constant 0 : i32
    %c0_i32_1 = arith.constant 0 : i32
    return %c0_i32, %c0_i32_0 : i32, i32
  }
  func.func @transform_13(%arg0: i32) -> (i32, i32) {
    %c0_i32 = arith.constant 0 : i32
    %c0_i32_0 = arith.constant 0 : i32
    %c0_i32_1 = arith.constant 0 : i32
    return %c0_i32, %c0_i32_0 : i32, i32
  }
  func.func @transform_14(%arg0: i32) -> (i32, i32) {
    %c0_i32 = arith.constant 0 : i32
    %c0_i32_0 = arith.constant 0 : i32
    %c0_i32_1 = arith.constant 0 : i32
    return %c0_i32, %c0_i32_0 : i32, i32
  }
  func.func @transform_15(%arg0: i32) -> (i32, i32) {
    %c0_i32 = arith.constant 0 : i32
    %c0_i32_0 = arith.constant 0 : i32
    %c0_i32_1 = arith.constant 0 : i32
    return %c0_i32, %c0_i32_0 : i32, i32
  }
  func.func @transform_16(%arg0: i32) -> (i32, i32) {
    %c0_i32 = arith.constant 0 : i32
    %c0_i32_0 = arith.constant 0 : i32
    %c0_i32_1 = arith.constant 0 : i32
    return %c0_i32, %c0_i32_0 : i32, i32
  }
  func.func @transform_17(%arg0: i32) -> (i32, i32) {
    %c0_i32 = arith.constant 0 : i32
    %c0_i32_0 = arith.constant 0 : i32
    %c0_i32_1 = arith.constant 0 : i32
    return %c0_i32, %c0_i32_0 : i32, i32
  }
  func.func @transform_18(%arg0: i32) -> (i32, i32) {
    %c0_i32 = arith.constant 0 : i32
    %c0_i32_0 = arith.constant 0 : i32
    %c0_i32_1 = arith.constant 0 : i32
    return %c0_i32, %c0_i32_0 : i32, i32
  }
  func.func @transform_19(%arg0: i32) -> (i32, i32, i32) {
    %c0_i32 = arith.constant 0 : i32
    %c0_i32_0 = arith.constant 0 : i32
    %c0_i32_1 = arith.constant 0 : i32
    return %arg0, %c0_i32, %c0_i32_0 : i32, i32, i32
  }
}

module attributes {stable_mosaic.version = 11 : i64} {
  func.func @kernel(%arg0: i32, %arg1: memref<8x4x128xf32, #tpu.memory_space<vmem>>, %arg2: memref<128x128xbf16, #tpu.memory_space<vmem>>, %arg3: memref<128x128xbf16, #tpu.memory_space<vmem>>, %arg4: memref<1x128xf32, #tpu.memory_space<vmem>>, %arg5: memref<1x128xf32, #tpu.memory_space<vmem>>, %arg6: memref<8x4x128xf32, #tpu.memory_space<vmem>>) attributes {dimension_semantics = [#tpu.dimension_semantics<parallel>], iteration_bounds = array<i64: 2>, scalar_prefetch = 0 : i64, scratch_operands = 0 : i64, tpu.core_type = #tpu.core_type<tc>, window_params = [{transform_indices = @transform_0, window_bounds = array<i64: 8, 4, 128>}, {pipeline_mode = #tpu.pipeline_mode<synchronous>, transform_indices = @transform_1, window_bounds = array<i64: 128, 128>}, {pipeline_mode = #tpu.pipeline_mode<synchronous>, transform_indices = @transform_2, window_bounds = array<i64: 128, 128>}, {pipeline_mode = #tpu.pipeline_mode<synchronous>, transform_indices = @transform_3, window_bounds = array<i64: 1, 128>}, {pipeline_mode = #tpu.pipeline_mode<synchronous>, transform_indices = @transform_4, window_bounds = array<i64: 1, 128>}, {transform_indices = @transform_5, window_bounds = array<i64: 8, 4, 128>}]} {
    %c0 = arith.constant 0 : index
    %c0_0 = arith.constant 0 : index
    %c0_1 = arith.constant 0 : index
    %0 = vector.load %arg1[%c0, %c0_0, %c0_1] : memref<8x4x128xf32, #tpu.memory_space<vmem>>, vector<8x4x128xf32>
    %1 = vector.shape_cast %0 : vector<8x4x128xf32> to vector<32x128xf32>
    %2 = arith.truncf %1 : vector<32x128xf32> to vector<32x128xbf16>
    %c0_2 = arith.constant 0 : index
    %c0_3 = arith.constant 0 : index
    %3 = vector.load %arg2[%c0_2, %c0_3] : memref<128x128xbf16, #tpu.memory_space<vmem>>, vector<128x128xbf16>
    %cst = arith.constant dense<0.000000e+00> : vector<32x128xf32>
    %4 = tpu.matmul %2, %3, %cst {dimension_numbers = #tpu.dot_dimension_numbers<[1], [0], [0], [1], [0, 0, 1, 1], [], []>} : vector<32x128xbf16>, vector<128x128xbf16>, vector<32x128xf32> -> vector<32x128xf32>
    %c0_4 = arith.constant 0 : index
    %c0_5 = arith.constant 0 : index
    %5 = vector.load %arg4[%c0_4, %c0_5] : memref<1x128xf32, #tpu.memory_space<vmem>>, vector<1x128xf32>
    %6 = vector.broadcast %5 : vector<1x128xf32> to vector<32x128xf32>
    %7 = arith.addf %4, %6 : vector<32x128xf32>
    %8 = math.tanh %7 : vector<32x128xf32>
    %9 = arith.truncf %8 : vector<32x128xf32> to vector<32x128xbf16>
    %c0_6 = arith.constant 0 : index
    %c0_7 = arith.constant 0 : index
    %10 = vector.load %arg3[%c0_6, %c0_7] : memref<128x128xbf16, #tpu.memory_space<vmem>>, vector<128x128xbf16>
    %cst_8 = arith.constant dense<0.000000e+00> : vector<32x128xf32>
    %11 = tpu.matmul %9, %10, %cst_8 {dimension_numbers = #tpu.dot_dimension_numbers<[1], [0], [0], [1], [0, 0, 1, 1], [], []>} : vector<32x128xbf16>, vector<128x128xbf16>, vector<32x128xf32> -> vector<32x128xf32>
    %c0_9 = arith.constant 0 : index
    %c0_10 = arith.constant 0 : index
    %12 = vector.load %arg5[%c0_9, %c0_10] : memref<1x128xf32, #tpu.memory_space<vmem>>, vector<1x128xf32>
    %13 = vector.broadcast %12 : vector<1x128xf32> to vector<32x128xf32>
    %14 = arith.addf %11, %13 : vector<32x128xf32>
    %15 = vector.shape_cast %14 : vector<32x128xf32> to vector<8x4x128xf32>
    %c0_11 = arith.constant 0 : index
    %c0_12 = arith.constant 0 : index
    %c0_13 = arith.constant 0 : index
    %16 = vector.load %arg6[%c0_11, %c0_12, %c0_13] : memref<8x4x128xf32, #tpu.memory_space<vmem>>, vector<8x4x128xf32>
    tpu.vector_store %arg6[%c0_11, %c0_12, %c0_13], %15 {strides = array<i32>} : memref<8x4x128xf32, #tpu.memory_space<vmem>>, vector<8x4x128xf32>,
    return
  }
  func.func @transform_0(%arg0: i32) -> (i32, i32, i32) {
    %c0_i32 = arith.constant 0 : i32
    %c0_i32_0 = arith.constant 0 : i32
    %c0_i32_1 = arith.constant 0 : i32
    return %arg0, %c0_i32, %c0_i32_0 : i32, i32, i32
  }
  func.func @transform_1(%arg0: i32) -> (i32, i32) {
    %c0_i32 = arith.constant 0 : i32
    %c0_i32_0 = arith.constant 0 : i32
    %c0_i32_1 = arith.constant 0 : i32
    return %c0_i32, %c0_i32_0 : i32, i32
  }
  func.func @transform_2(%arg0: i32) -> (i32, i32) {
    %c0_i32 = arith.constant 0 : i32
    %c0_i32_0 = arith.constant 0 : i32
    %c0_i32_1 = arith.constant 0 : i32
    return %c0_i32, %c0_i32_0 : i32, i32
  }
  func.func @transform_3(%arg0: i32) -> (i32, i32) {
    %c0_i32 = arith.constant 0 : i32
    %c0_i32_0 = arith.constant 0 : i32
    %c0_i32_1 = arith.constant 0 : i32
    return %c0_i32, %c0_i32_0 : i32, i32
  }
  func.func @transform_4(%arg0: i32) -> (i32, i32) {
    %c0_i32 = arith.constant 0 : i32
    %c0_i32_0 = arith.constant 0 : i32
    %c0_i32_1 = arith.constant 0 : i32
    return %c0_i32, %c0_i32_0 : i32, i32
  }
  func.func @transform_5(%arg0: i32) -> (i32, i32, i32) {
    %c0_i32 = arith.constant 0 : i32
    %c0_i32_0 = arith.constant 0 : i32
    %c0_i32_1 = arith.constant 0 : i32
    return %arg0, %c0_i32, %c0_i32_0 : i32, i32, i32
  }
}

</mosaic_0001>

<llo_original>
// kernel: _lambda_.3
$region0: #{_lambda_.3}
  #allocation0 [shape = 'u32[]', space=smem, size = 0x4, offset = 0x4, fixed_abs, tag = 'smem constant byte address 0x4 - core index']
  #allocation1 [shape = 'u32[144,128]{1,0:T(1,128)}', space=vmem, size = 0x12000, scoped, tag = 'internal scratch']
  %s0 = inlined_call_operand.vmem [shape: f32[16,4,128], index: 0, kind: input, shape index: {}]
  %s1 = inlined_call_operand.vmem [shape: bf16[128,128], index: 1, kind: input, shape index: {}]
  %s2 = inlined_call_operand.vmem [shape: bf16[128,128], index: 2, kind: input, shape index: {}]
  %s3 = inlined_call_operand.vmem [shape: f32[1,128], index: 3, kind: input, shape index: {}]
  %s4 = inlined_call_operand.vmem [shape: f32[1,128], index: 4, kind: input, shape index: {}]
  %s5 = inlined_call_operand.vmem [shape: f32[16,4,128], index: 5, kind: output, shape index: {}]
  %s6 = sld [smem:[#allocation0]]
  $region53: #{_lambda_.3} parent=0
    _
  %s8 = ssub.s32 1, %s6
  %s9 = scalar_select 0, %s8, %s6
  loop: start=0, step=1, limit=4
  $region2: #{_lambda_.3} parent=0 // loop_pre_header
    _
  $region3: #{_lambda_.3} parent=0 // loop_header
    %s11 = sphi 0, %s15
    %p12 = scmp.ge.s32.totalorder %s11, 4
    %s21 = sphi 0, %s23
    %s24 = sphi 0, %s21
    %s25 = sphi 0, %s24
    %s41 = sphi 0, %s25
    %s45 = sphi 0, %s45
    %s47 = sphi 0, %s45
    %s48 = sphi 0, %s47
    %s62 = sphi 0, %s48
    %s66 = sphi 0, %s66
    %s68 = sphi 0, %s66
    %s69 = sphi 0, %s68
    %s83 = sphi 0, %s69
    %s87 = sphi 0, %s87
    %s89 = sphi 0, %s87
    %s90 = sphi 0, %s89
    %s104 = sphi 0, %s90
    %s108 = sphi 0, %s108
    %s110 = sphi 0, %s108
    %s111 = sphi 0, %s110
    %s125 = sphi 0, %s111
    %s131 = sphi 0, %s133
    %s134 = sphi 0, %s131
    %s135 = sphi 0, %s134
    %s151 = sphi 0, %s135
  $region4: #{_lambda_.3} parent=0 // loop_header_branch
    %14 = sbr.rel (%p12) target = $region8
  $region5: #{_lambda_.3} parent=0 // loop_body
    %s16 = ssub.s32 %s11, 1
    %s17 = ssub.s32 %s11, 2
    %s18 = sadd.s32 %s11, 1
    %s19 = ssub.s32 %s11, %s18
    %p20 = scmp.eq.s32.totalorder %s19, 0
    %s22 = sadd.s32 %s21, 1
    %s23 = scalar_select %p20, %s21, %s22
    %p26 = pneg %p20
    %p27 = scmp.eq.s32.totalorder %s11, 1
    %p28 = por %p26, %p27
    %p29 = scmp.ne.s32.totalorder %s21, %s24
    %p30 = scmp.eq.s32.totalorder %s11, 0
    %p31 = por %p29, %p30
    %p32 = scmp.ne.s32.totalorder %s21, %s24
    %p33 = scmp.eq.s32.totalorder %s16, 1
    %p34 = por %p32, %p33
    %p35 = scmp.ne.s32.totalorder %s24, %s25
    %p36 = scmp.eq.s32.totalorder %s16, 0
    %p37 = por %p35, %p36
    %p38 = scmp.ne.s32.totalorder %s24, %s25
    %p39 = scmp.eq.s32.totalorder %s17, 1
    %p40 = por %p38, %p39
    %p42 = scmp.ne.s32.totalorder %s25, %s41
    %p43 = scmp.eq.s32.totalorder %s17, 0
    %p44 = por %p42, %p43
    %s46 = sadd.s32 %s45, 1
    %p49 = scmp.eq.s32.totalorder %s11, 1
    %p50 = scmp.ne.s32.totalorder %s45, %s47
    %p51 = scmp.eq.s32.totalorder %s11, 0
    %p52 = por %p50, %p51
    %p53 = scmp.ne.s32.totalorder %s45, %s47
    %p54 = scmp.eq.s32.totalorder %s16, 1
    %p55 = por %p53, %p54
    %p56 = scmp.ne.s32.totalorder %s47, %s48
    %p57 = scmp.eq.s32.totalorder %s16, 0
    %p58 = por %p56, %p57
    %p59 = scmp.ne.s32.totalorder %s47, %s48
    %p60 = scmp.eq.s32.totalorder %s17, 1
    %p61 = por %p59, %p60
    %p63 = scmp.ne.s32.totalorder %s48, %s62
    %p64 = scmp.eq.s32.totalorder %s17, 0
    %p65 = por %p63, %p64
    %s67 = sadd.s32 %s66, 1
    %p70 = scmp.eq.s32.totalorder %s11, 1
    %p71 = scmp.ne.s32.totalorder %s66, %s68
    %p72 = scmp.eq.s32.totalorder %s11, 0
    %p73 = por %p71, %p72
    %p74 = scmp.ne.s32.totalorder %s66, %s68
    %p75 = scmp.eq.s32.totalorder %s16, 1
    %p76 = por %p74, %p75
    %p77 = scmp.ne.s32.totalorder %s68, %s69
    %p78 = scmp.eq.s32.totalorder %s16, 0
    %p79 = por %p77, %p78
    %p80 = scmp.ne.s32.totalorder %s68, %s69
    %p81 = scmp.eq.s32.totalorder %s17, 1
    %p82 = por %p80, %p81
    %p84 = scmp.ne.s32.totalorder %s69, %s83
    %p85 = scmp.eq.s32.totalorder %s17, 0
    %p86 = por %p84, %p85
    %s88 = sadd.s32 %s87, 1
    %p91 = scmp.eq.s32.totalorder %s11, 1
    %p92 = scmp.ne.s32.totalorder %s87, %s89
    %p93 = scmp.eq.s32.totalorder %s11, 0
    %p94 = por %p92, %p93
    %p95 = scmp.ne.s32.totalorder %s87, %s89
    %p96 = scmp.eq.s32.totalorder %s16, 1
    %p97 = por %p95, %p96
    %p98 = scmp.ne.s32.totalorder %s89, %s90
    %p99 = scmp.eq.s32.totalorder %s16, 0
    %p100 = por %p98, %p99
    %p101 = scmp.ne.s32.totalorder %s89, %s90
    %p102 = scmp.eq.s32.totalorder %s17, 1
    %p103 = por %p101, %p102
    %p105 = scmp.ne.s32.totalorder %s90, %s104
    %p106 = scmp.eq.s32.totalorder %s17, 0
    %p107 = por %p105, %p106
    %s109 = sadd.s32 %s108, 1
    %p112 = scmp.eq.s32.totalorder %s11, 1
    %p113 = scmp.ne.s32.totalorder %s108, %s110
    %p114 = scmp.eq.s32.totalorder %s11, 0
    %p115 = por %p113, %p114
    %p116 = scmp.ne.s32.totalorder %s108, %s110
    %p117 = scmp.eq.s32.totalorder %s16, 1
    %p118 = por %p116, %p117
    %p119 = scmp.ne.s32.totalorder %s110, %s111
    %p120 = scmp.eq.s32.totalorder %s16, 0
    %p121 = por %p119, %p120
    %p122 = scmp.ne.s32.totalorder %s110, %s111
    %p123 = scmp.eq.s32.totalorder %s17, 1
    %p124 = por %p122, %p123
    %p126 = scmp.ne.s32.totalorder %s111, %s125
    %p127 = scmp.eq.s32.totalorder %s17, 0
    %p128 = por %p126, %p127
    %s129 = ssub.s32 %s11, %s18
    %p130 = scmp.eq.s32.totalorder %s129, 0
    %s132 = sadd.s32 %s131, 1
    %s133 = scalar_select %p130, %s131, %s132
    %p136 = pneg %p130
    %p137 = scmp.eq.s32.totalorder %s11, 1
    %p138 = por %p136, %p137
    %p139 = scmp.ne.s32.totalorder %s131, %s134
    %p140 = scmp.eq.s32.totalorder %s11, 0
    %p141 = por %p139, %p140
    %p142 = scmp.ne.s32.totalorder %s131, %s134
    %p143 = scmp.eq.s32.totalorder %s16, 1
    %p144 = por %p142, %p143
    %p145 = scmp.ne.s32.totalorder %s134, %s135
    %p146 = scmp.eq.s32.totalorder %s16, 0
    %p147 = por %p145, %p146
    %p148 = scmp.ne.s32.totalorder %s134, %s135
    %p149 = scmp.eq.s32.totalorder %s17, 1
    %p150 = por %p148, %p149
    %p152 = scmp.ne.s32.totalorder %s135, %s151
    %p153 = scmp.eq.s32.totalorder %s17, 0
    %p154 = por %p152, %p153
    %p155 = scmp.le.s32.totalorder 1, %s11
    %p156 = scmp.lt.s32.totalorder %s11, 3
    %p157 = pnand %p155, %p156
    %p158 = pneg %p157
    // Predicated region
    $region9: #{_lambda_.3} parent=5 // pred_check
      _
    $region10: #{_lambda_.3} parent=5 // pred_check_branch
      %160 = sbr.rel (%p157) target = $region12
    $region11: #{_lambda_.3} parent=5 // pred_region
      %s161 = ssub.s32 %s11, 1
      // Predicated region
      $region13: #{_lambda_.3} parent=11 // pred_check
        %p162 = pneg %p58
      $region14: #{_lambda_.3} parent=11 // pred_check_branch
        %164 = sbr.rel (%p162) target = $region16
      $region15: #{_lambda_.3} parent=11 // pred_region
        _
      $region16: #{_lambda_.3} parent=11 // pred_fallthru
        _
      // Predicated region
      $region17: #{_lambda_.3} parent=11 // pred_check
        %p165 = pneg %p79
      $region18: #{_lambda_.3} parent=11 // pred_check_branch
        %167 = sbr.rel (%p165) target = $region20
      $region19: #{_lambda_.3} parent=11 // pred_region
        _
      $region20: #{_lambda_.3} parent=11 // pred_fallthru
        _
      // Predicated region
      $region21: #{_lambda_.3} parent=11 // pred_check
        %p168 = pneg %p100
      $region22: #{_lambda_.3} parent=11 // pred_check_branch
        %170 = sbr.rel (%p168) target = $region24
      $region23: #{_lambda_.3} parent=11 // pred_region
        _
      $region24: #{_lambda_.3} parent=11 // pred_fallthru
        _
      // Predicated region
      $region25: #{_lambda_.3} parent=11 // pred_check
        %p171 = pneg %p121
      $region26: #{_lambda_.3} parent=11 // pred_check_branch
        %173 = sbr.rel (%p171) target = $region28
      $region27: #{_lambda_.3} parent=11 // pred_region
        _
      $region28: #{_lambda_.3} parent=11 // pred_fallthru
        _
    $region12: #{_lambda_.3} parent=5 // pred_fallthru
      _
    %p174 = scmp.lt.s32.totalorder %s11, 2
    // Predicated region
    $region29: #{_lambda_.3} parent=5 // pred_check
      %p175 = pneg %p174
    $region30: #{_lambda_.3} parent=5 // pred_check_branch
      %177 = sbr.rel (%p175) target = $region32
    $region31: #{_lambda_.3} parent=5 // pred_region
      // Predicated region
      $region33: #{_lambda_.3} parent=31 // pred_check
        %p178 = pneg %p31
      $region34: #{_lambda_.3} parent=31 // pred_check_branch
        %180 = sbr.rel (%p178) target = $region36
      $region35: #{_lambda_.3} parent=31 // pred_region
        %s181 = smul.u32 8, %s11
        %p182 = scmp.lt.s32.totalorder %s181, 15
        %s183 = scalar_select %p182, %s181, 15
        %s184 = smul.addr %s183, 4
        %s185 = scalar_lea.vmem %s0, %s184
        %s186 = smul.u32 8, %s11
      $region36: #{_lambda_.3} parent=31 // pred_fallthru
        _
    $region32: #{_lambda_.3} parent=5 // pred_fallthru
      _
    %p187 = scmp.le.s32.totalorder 1, %s11
    %p188 = scmp.lt.s32.totalorder %s11, 3
    %p189 = pnand %p187, %p188
    %p190 = pneg %p189
    // Predicated region
    $region37: #{_lambda_.3} parent=5 // pred_check
      _
    $region38: #{_lambda_.3} parent=5 // pred_check_branch
      %192 = sbr.rel (%p189) target = $region40
    $region39: #{_lambda_.3} parent=5 // pred_region
      %s193 = ssub.s32 %s11, 1
      %s194 = smul.u32 8, %s16
      %p195 = scmp.lt.s32.totalorder %s194, 15
      %s196 = scalar_select %p195, %s194, 15
      %s197 = smul.addr %s196, 4
      %s198 = scalar_lea.vmem %s0, %s197
      %p199 = pneg %p37
      %p200 = pneg %p34
      %p201 = pneg %p58
      %p202 = pneg %p55
      %p203 = pneg %p79
      %p204 = pneg %p76
      %p205 = pneg %p100
      %p206 = pneg %p97
      %p207 = pneg %p121
      %p208 = pneg %p118
      %p209 = pneg %p147
      %p210 = pneg %p144
      %s211 = smul.u32 8, %s16
      %p212 = scmp.lt.s32.totalorder %s211, 15
      %s213 = scalar_select %p212, %s211, 15
      %s214 = smul.addr %s213, 4
      %s215 = scalar_lea.vmem %s5, %s214
      %s216 = smul.u32 8, %s16
      %p217 = scmp.lt.s32.totalorder %s216, 15
      %s218 = scalar_select %p217, %s216, 15
      %s219 = smul.addr %s218, 4
      %s220 = scalar_lea.vmem %s0, %s219
      %s221 = smul.u32 8, %s16
      %s222 = smul.u32 8, %s16
      %p223 = scmp.lt.s32.totalorder %s222, 15
      %s224 = scalar_select %p223, %s222, 15
      %s225 = smul.addr %s224, 4
      %s226 = scalar_lea.vmem %s5, %s225
      %s227 = smul.u32 8, %s16
      %v229 = vld [vmem:[%s220] sm:$0xf]
      %v230 = vld [vmem:[%s220 + $0x4] sm:$0xf]
      %v231 = vld [vmem:[%s220 + $0x8] sm:$0xf]
      %v232 = vld [vmem:[%s220 + $0xc] sm:$0xf]
      %v233 = vld [vmem:[%s220 + $0x10] sm:$0xf]
      %v234 = vld [vmem:[%s220 + $0x14] sm:$0xf]
      %v235 = vld [vmem:[%s220 + $0x18] sm:$0xf]
      %v236 = vld [vmem:[%s220 + $0x1c] sm:$0xf]
      %v237 = vmul.f32 %v229, %v229
      %v238 = vmul.f32 %v230, %v230
      %v239 = vmul.f32 %v231, %v231
      %v240 = vmul.f32 %v232, %v232
      %v241 = vmul.f32 %v233, %v233
      %v242 = vmul.f32 %v234, %v234
      %v243 = vmul.f32 %v235, %v235
      %v244 = vmul.f32 %v236, %v236
      %vm245 = vcmask 1043456
      %v246 = vsel %vm245, %v237, 0.0
      %v247 = vrot.slane %v246, 4
      %v248 = vadd.f32 %v246, %v247
      %v249 = vrot.slane %v248, 2
      %v250 = vadd.f32 %v248, %v249
      %v251 = vrot.slane %v250, 1
      %v252 = vadd.f32 %v250, %v251
      %v253 = vsel %vm245, %v238, 0.0
      %v254 = vrot.slane %v253, 4
      %v255 = vadd.f32 %v253, %v254
      %v256 = vrot.slane %v255, 2
      %v257 = vadd.f32 %v255, %v256
      %v258 = vrot.slane %v257, 1
      %v259 = vadd.f32 %v257, %v258
      %v260 = vsel %vm245, %v239, 0.0
      %v261 = vrot.slane %v260, 4
      %v262 = vadd.f32 %v260, %v261
      %v263 = vrot.slane %v262, 2
      %v264 = vadd.f32 %v262, %v263
      %v265 = vrot.slane %v264, 1
      %v266 = vadd.f32 %v264, %v265
      %v267 = vsel %vm245, %v240, 0.0
      %v268 = vrot.slane %v267, 4
      %v269 = vadd.f32 %v267, %v268
      %v270 = vrot.slane %v269, 2
      %v271 = vadd.f32 %v269, %v270
      %v272 = vrot.slane %v271, 1
      %v273 = vadd.f32 %v271, %v272
      %v274 = vsel %vm245, %v241, 0.0
      %v275 = vrot.slane %v274, 4
      %v276 = vadd.f32 %v274, %v275
      %v277 = vrot.slane %v276, 2
      %v278 = vadd.f32 %v276, %v277
      %v279 = vrot.slane %v278, 1
      %v280 = vadd.f32 %v278, %v279
      %v281 = vsel %vm245, %v242, 0.0
      %v282 = vrot.slane %v281, 4
      %v283 = vadd.f32 %v281, %v282
      %v284 = vrot.slane %v283, 2
      %v285 = vadd.f32 %v283, %v284
      %v286 = vrot.slane %v285, 1
      %v287 = vadd.f32 %v285, %v286
      %v288 = vsel %vm245, %v243, 0.0
      %v289 = vrot.slane %v288, 4
      %v290 = vadd.f32 %v288, %v289
      %v291 = vrot.slane %v290, 2
      %v292 = vadd.f32 %v290, %v291
      %v293 = vrot.slane %v292, 1
      %v294 = vadd.f32 %v292, %v293
      %v295 = vsel %vm245, %v244, 0.0
      %v296 = vrot.slane %v295, 4
      %v297 = vadd.f32 %v295, %v296
      %v298 = vrot.slane %v297, 2
      %v299 = vadd.f32 %v297, %v298
      %v300 = vrot.slane %v299, 1
      %v301 = vadd.f32 %v299, %v300
      %v302 = vrsqrt.pop %v252
      %v303 = vmul.f32 %v252, %v302
      %vm304 = vcmp.eq.f32.partialorder %v252, inf
      %v305 = vsel %vm304, %v252, %v303
      %vm306 = vcmp.eq.f32.partialorder %v252, 0.0
      %v307 = vand.u32 %v252, 2147483648
      %v308 = vsel %vm306, %v307, %v305
      %v309 = vrsqrt.pop %v259
      %v310 = vmul.f32 %v259, %v309
      %vm311 = vcmp.eq.f32.partialorder %v259, inf
      %v312 = vsel %vm311, %v259, %v310
      %vm313 = vcmp.eq.f32.partialorder %v259, 0.0
      %v314 = vand.u32 %v259, 2147483648
      %v315 = vsel %vm313, %v314, %v312
      %v316 = vrsqrt.pop %v266
      %v317 = vmul.f32 %v266, %v316
      %vm318 = vcmp.eq.f32.partialorder %v266, inf
      %v319 = vsel %vm318, %v266, %v317
      %vm320 = vcmp.eq.f32.partialorder %v266, 0.0
      %v321 = vand.u32 %v266, 2147483648
      %v322 = vsel %vm320, %v321, %v319
      %v323 = vrsqrt.pop %v273
      %v324 = vmul.f32 %v273, %v323
      %vm325 = vcmp.eq.f32.partialorder %v273, inf
      %v326 = vsel %vm325, %v273, %v324
      %vm327 = vcmp.eq.f32.partialorder %v273, 0.0
      %v328 = vand.u32 %v273, 2147483648
      %v329 = vsel %vm327, %v328, %v326
      %v330 = vrsqrt.pop %v280
      %v331 = vmul.f32 %v280, %v330
      %vm332 = vcmp.eq.f32.partialorder %v280, inf
      %v333 = vsel %vm332, %v280, %v331
      %vm334 = vcmp.eq.f32.partialorder %v280, 0.0
      %v335 = vand.u32 %v280, 2147483648
      %v336 = vsel %vm334, %v335, %v333
      %v337 = vrsqrt.pop %v287
      %v338 = vmul.f32 %v287, %v337
      %vm339 = vcmp.eq.f32.partialorder %v287, inf
      %v340 = vsel %vm339, %v287, %v338
      %vm341 = vcmp.eq.f32.partialorder %v287, 0.0
      %v342 = vand.u32 %v287, 2147483648
      %v343 = vsel %vm341, %v342, %v340
      %v344 = vrsqrt.pop %v294
      %v345 = vmul.f32 %v294, %v344
      %vm346 = vcmp.eq.f32.partialorder %v294, inf
      %v347 = vsel %vm346, %v294, %v345
      %vm348 = vcmp.eq.f32.partialorder %v294, 0.0
      %v349 = vand.u32 %v294, 2147483648
      %v350 = vsel %vm348, %v349, %v347
      %v351 = vrsqrt.pop %v301
      %v352 = vmul.f32 %v301, %v351
      %vm353 = vcmp.eq.f32.partialorder %v301, inf
      %v354 = vsel %vm353, %v301, %v352
      %vm355 = vcmp.eq.f32.partialorder %v301, 0.0
      %v356 = vand.u32 %v301, 2147483648
      %v357 = vsel %vm355, %v356, %v354
      %v358 = vmax.f32 %v308, 1e-06
      %v359 = vmax.f32 %v315, 1e-06
      %v360 = vmax.f32 %v322, 1e-06
      %v361 = vmax.f32 %v329, 1e-06
      %v362 = vmax.f32 %v336, 1e-06
      %v363 = vmax.f32 %v343, 1e-06
      %v364 = vmax.f32 %v350, 1e-06
      %v365 = vmax.f32 %v357, 1e-06
      %v366 = vrcp.pop %v358
      %v367 = vmul.f32 %v229, %v366
      %v368 = vrcp.pop %v359
      %v369 = vmul.f32 %v230, %v368
      %v370 = vrcp.pop %v360
      %v371 = vmul.f32 %v231, %v370
      %v372 = vrcp.pop %v361
      %v373 = vmul.f32 %v232, %v372
      %v374 = vrcp.pop %v362
      %v375 = vmul.f32 %v233, %v374
      %v376 = vrcp.pop %v363
      %v377 = vmul.f32 %v234, %v376
      %v378 = vrcp.pop %v364
      %v379 = vmul.f32 %v235, %v378
      %v380 = vrcp.pop %v365
      %v381 = vmul.f32 %v236, %v380
      %v390 = vcombine.low %v367, %v369
      %v391 = vcombine.low %v371, %v373
      %v392 = vcombine.low %v375, %v377
      %v393 = vcombine.low %v379, %v381
      %v398 = vpack.c.bf16 %v391, %v390
      %v399 = vpack.c.bf16 %v393, %v392
      %v400 = vld [vmem:[%s1] sm:$0xf]
      %v401 = vld [vmem:[%s1 + $0x4] sm:$0xf]
      %v402 = vld [vmem:[%s1 + $0x8] sm:$0xf]
      %v403 = vld [vmem:[%s1 + $0xc] sm:$0xf]
      %v404 = vld [vmem:[%s1 + $0x10] sm:$0xf]
      %v405 = vld [vmem:[%s1 + $0x14] sm:$0xf]
      %v406 = vld [vmem:[%s1 + $0x18] sm:$0xf]
      %v407 = vld [vmem:[%s1 + $0x1c] sm:$0xf]
      %v408 = vld [vmem:[%s1 + $0x20] sm:$0xf]
      %v409 = vld [vmem:[%s1 + $0x24] sm:$0xf]
      %v410 = vld [vmem:[%s1 + $0x28] sm:$0xf]
      %v411 = vld [vmem:[%s1 + $0x2c] sm:$0xf]
      %v412 = vld [vmem:[%s1 + $0x30] sm:$0xf]
      %v413 = vld [vmem:[%s1 + $0x34] sm:$0xf]
      %v414 = vld [vmem:[%s1 + $0x38] sm:$0xf]
      %v415 = vld [vmem:[%s1 + $0x3c] sm:$0xf]
      %v416 = vld [vmem:[%s3] sm:$0x1]
      %v418 = vlaneseq
      %v419 = vshrl.u32 %v418, 7
      %v420 = vsub.s32 0, %v419
      %v421 = vrot.slane %v416, %v420
      %v439 = vunpack.c.l.b16 %v400
      %v440 = vunpack.c.l.b16 %v401
      %v441 = vunpack.c.l.b16 %v402
      %v442 = vunpack.c.l.b16 %v403
      %v443 = vunpack.c.l.b16 %v404
      %v444 = vunpack.c.l.b16 %v405
      %v445 = vunpack.c.l.b16 %v406
      %v446 = vunpack.c.l.b16 %v407
      %v447 = vunpack.c.l.b16 %v408
      %v448 = vunpack.c.l.b16 %v409
      %v449 = vunpack.c.l.b16 %v410
      %v450 = vunpack.c.l.b16 %v411
      %v451 = vunpack.c.l.b16 %v412
      %v452 = vunpack.c.l.b16 %v413
      %v453 = vunpack.c.l.b16 %v414
      %v454 = vunpack.c.l.b16 %v415
      %v455 = vpack.c.b16 %v440, %v439
      %v456 = vpack.c.b16 %v442, %v441
      %v457 = vpack.c.b16 %v444, %v443
      %v458 = vpack.c.b16 %v446, %v445
      %v459 = vpack.c.b16 %v448, %v447
      %v460 = vpack.c.b16 %v450, %v449
      %v461 = vpack.c.b16 %v452, %v451
      %v462 = vpack.c.b16 %v454, %v453
      %471 = vmatprep.subr.bf16.mxu0 0
      %472 = vmatpush1.bf16.msra.mxu0 %v462
      %473 = vmatprep.subr.bf16.mxu0 0
      %474 = vmatpush1.bf16.msra.mxu0 %v461
      %475 = vmatprep.subr.bf16.mxu0 0
      %476 = vmatpush1.bf16.msra.mxu0 %v460
      %477 = vmatprep.subr.bf16.mxu0 0
      %478 = vmatpush1.bf16.msra.mxu0 %v459
      %479 = vmatprep.subr.bf16.mxu0 0
      %480 = vmatpush1.bf16.msra.mxu0 %v458
      %481 = vmatprep.subr.bf16.mxu0 0
      %482 = vmatpush1.bf16.msra.mxu0 %v457
      %483 = vmatprep.subr.bf16.mxu0 0
      %484 = vmatpush1.bf16.msra.mxu0 %v456
      %485 = vmatprep.subr.bf16.mxu0 0
      %486 = vmatpush1.bf16.msra.mxu0 %v455
      %487 = vmatprep.subr.bf16.mxu0 0
      %488 = vmatpush2.bf16.msra.mxu0 0
      %489 = vmatprep.subr.bf16.mxu0 0
      %490 = vmatpush2.bf16.msra.mxu0 0
      %491 = vmatprep.subr.bf16.mxu0 0
      %492 = vmatpush2.bf16.msra.mxu0 0
      %493 = vmatprep.subr.bf16.mxu0 0
      %494 = vmatpush2.bf16.msra.mxu0 0
      %495 = vmatprep.subr.bf16.mxu0 0
      %496 = vmatpush2.bf16.msra.mxu0 0
      %497 = vmatprep.subr.bf16.mxu0 0
      %498 = vmatpush2.bf16.msra.mxu0 0
      %499 = vmatprep.subr.bf16.mxu0 0
      %500 = vmatpush2.bf16.msra.mxu0 0
      %501 = vmatprep.subr.bf16.mxu0 0
      %502 = vmatpush2.bf16.msra.mxu0 0
      %503 = vmatprep.mubr.bf16.mxu0 0
      %504 = vmatmul.mubr.bf16.gmra.mxu0 %v398
      %v505 = vpop.f32.mrf.mxu0
      %v506 = vadd.f32 %v421, %v505
      %v507 = vpop.f32.mrf.mxu0
      %v508 = vpop.f32.mrf.mxu0
      %v509 = vadd.f32 %v421, %v508
      %v510 = vpop.f32.mrf.mxu0
      %511 = vmatprep.mubr.bf16.mxu0 0
      %512 = vmatmul.mubr.bf16.gmra.mxu0 %v399
      %v513 = vpop.f32.mrf.mxu0
      %v514 = vadd.f32 %v421, %v513
      %v515 = vpop.f32.mrf.mxu0
      %v516 = vpop.f32.mrf.mxu0
      %v517 = vadd.f32 %v421, %v516
      %v518 = vpop.f32.mrf.mxu0
      %519 = vdwg.mxu0
      %v520 = vtanh.pop %v506
      %v521 = vtanh.pop %v509
      %v522 = vtanh.pop %v514
      %v523 = vtanh.pop %v517
      %v524 = vpack.c.bf16 %v521, %v520
      %v525 = vpack.c.bf16 %v523, %v522
      %v526 = vld [vmem:[%s2] sm:$0xf]
      %v527 = vld [vmem:[%s2 + $0x4] sm:$0xf]
      %v528 = vld [vmem:[%s2 + $0x8] sm:$0xf]
      %v529 = vld [vmem:[%s2 + $0xc] sm:$0xf]
      %v530 = vld [vmem:[%s2 + $0x10] sm:$0xf]
      %v531 = vld [vmem:[%s2 + $0x14] sm:$0xf]
      %v532 = vld [vmem:[%s2 + $0x18] sm:$0xf]
      %v533 = vld [vmem:[%s2 + $0x1c] sm:$0xf]
      %v534 = vld [vmem:[%s2 + $0x20] sm:$0xf]
      %v535 = vld [vmem:[%s2 + $0x24] sm:$0xf]
      %v536 = vld [vmem:[%s2 + $0x28] sm:$0xf]
      %v537 = vld [vmem:[%s2 + $0x2c] sm:$0xf]
      %v538 = vld [vmem:[%s2 + $0x30] sm:$0xf]
      %v539 = vld [vmem:[%s2 + $0x34] sm:$0xf]
      %v540 = vld [vmem:[%s2 + $0x38] sm:$0xf]
      %v541 = vld [vmem:[%s2 + $0x3c] sm:$0xf]
      %v542 = vld [vmem:[%s4] sm:$0x1]
      %v544 = vlaneseq
      %v545 = vshrl.u32 %v544, 7
      %v546 = vsub.s32 0, %v545
      %v547 = vrot.slane %v542, %v546
      %v565 = vunpack.c.l.b16 %v526
      %v566 = vunpack.c.l.b16 %v527
      %v567 = vunpack.c.l.b16 %v528
      %v568 = vunpack.c.l.b16 %v529
      %v569 = vunpack.c.l.b16 %v530
      %v570 = vunpack.c.l.b16 %v531
      %v571 = vunpack.c.l.b16 %v532
      %v572 = vunpack.c.l.b16 %v533
      %v573 = vunpack.c.l.b16 %v534
      %v574 = vunpack.c.l.b16 %v535
      %v575 = vunpack.c.l.b16 %v536
      %v576 = vunpack.c.l.b16 %v537
      %v577 = vunpack.c.l.b16 %v538
      %v578 = vunpack.c.l.b16 %v539
      %v579 = vunpack.c.l.b16 %v540
      %v580 = vunpack.c.l.b16 %v541
      %v581 = vpack.c.b16 %v566, %v565
      %v582 = vpack.c.b16 %v568, %v567
      %v583 = vpack.c.b16 %v570, %v569
      %v584 = vpack.c.b16 %v572, %v571
      %v585 = vpack.c.b16 %v574, %v573
      %v586 = vpack.c.b16 %v576, %v575
      %v587 = vpack.c.b16 %v578, %v577
      %v588 = vpack.c.b16 %v580, %v579
      %597 = vmatprep.subr.bf16.mxu0 0
      %598 = vmatpush1.bf16.msra.mxu0 %v588
      %599 = vmatprep.subr.bf16.mxu0 0
      %600 = vmatpush1.bf16.msra.mxu0 %v587
      %601 = vmatprep.subr.bf16.mxu0 0
      %602 = vmatpush1.bf16.msra.mxu0 %v586
      %603 = vmatprep.subr.bf16.mxu0 0
      %604 = vmatpush1.bf16.msra.mxu0 %v585
      %605 = vmatprep.subr.bf16.mxu0 0
      %606 = vmatpush1.bf16.msra.mxu0 %v584
      %607 = vmatprep.subr.bf16.mxu0 0
      %608 = vmatpush1.bf16.msra.mxu0 %v583
      %609 = vmatprep.subr.bf16.mxu0 0
      %610 = vmatpush1.bf16.msra.mxu0 %v582
      %611 = vmatprep.subr.bf16.mxu0 0
      %612 = vmatpush1.bf16.msra.mxu0 %v581
      %613 = vmatprep.subr.bf16.mxu0 0
      %614 = vmatpush2.bf16.msra.mxu0 0
      %615 = vmatprep.subr.bf16.mxu0 0
      %616 = vmatpush2.bf16.msra.mxu0 0
      %617 = vmatprep.subr.bf16.mxu0 0
      %618 = vmatpush2.bf16.msra.mxu0 0
      %619 = vmatprep.subr.bf16.mxu0 0
      %620 = vmatpush2.bf16.msra.mxu0 0
      %621 = vmatprep.subr.bf16.mxu0 0
      %622 = vmatpush2.bf16.msra.mxu0 0
      %623 = vmatprep.subr.bf16.mxu0 0
      %624 = vmatpush2.bf16.msra.mxu0 0
      %625 = vmatprep.subr.bf16.mxu0 0
      %626 = vmatpush2.bf16.msra.mxu0 0
      %627 = vmatprep.subr.bf16.mxu0 0
      %628 = vmatpush2.bf16.msra.mxu0 0
      %629 = vmatprep.mubr.bf16.mxu0 0
      %630 = vmatmul.mubr.bf16.gmra.mxu0 %v524
      %v631 = vpop.f32.mrf.mxu0
      %v632 = vadd.f32 %v547, %v631
      %v633 = vpop.f32.mrf.mxu0
      %v634 = vpop.f32.mrf.mxu0
      %v635 = vadd.f32 %v547, %v634
      %v636 = vpop.f32.mrf.mxu0
      %637 = vmatprep.mubr.bf16.mxu0 0
      %638 = vmatmul.mubr.bf16.gmra.mxu0 %v525
      %v639 = vpop.f32.mrf.mxu0
      %v640 = vadd.f32 %v547, %v639
      %v641 = vpop.f32.mrf.mxu0
      %v642 = vpop.f32.mrf.mxu0
      %v643 = vadd.f32 %v547, %v642
      %v644 = vpop.f32.mrf.mxu0
      %645 = vdwg.mxu0
      %v650 = vcombine.high %v632, %v632
      %v651 = vcombine.high %v635, %v635
      %v652 = vcombine.high %v640, %v640
      %v653 = vcombine.high %v643, %v643
      %658 = vst [vmem:[%s226] sm:$0xf] %v632
      %659 = vst [vmem:[%s226 + $0x4] sm:$0xf] %v650
      %660 = vst [vmem:[%s226 + $0x8] sm:$0xf] %v635
      %661 = vst [vmem:[%s226 + $0xc] sm:$0xf] %v651
      %662 = vst [vmem:[%s226 + $0x10] sm:$0xf] %v640
      %663 = vst [vmem:[%s226 + $0x14] sm:$0xf] %v652
      %664 = vst [vmem:[%s226 + $0x18] sm:$0xf] %v643
      %665 = vst [vmem:[%s226 + $0x1c] sm:$0xf] %v653
      %s666 = smul.u32 8, %s16
      %p667 = scmp.lt.s32.totalorder %s666, 15
      %s668 = scalar_select %p667, %s666, 15
      %s669 = smul.addr %s668, 4
      %s670 = scalar_lea.vmem %s5, %s669
      // Predicated region
      $region41: #{_lambda_.3} parent=39 // pred_check
        %p671 = pneg %p144
      $region42: #{_lambda_.3} parent=39 // pred_check_branch
        %673 = sbr.rel (%p671) target = $region44
      $region43: #{_lambda_.3} parent=39 // pred_region
        %s674 = smul.u32 8, %s16
      $region44: #{_lambda_.3} parent=39 // pred_fallthru
        _
    $region40: #{_lambda_.3} parent=5 // pred_fallthru
      _
    %p675 = scmp.le.s32.totalorder 2, %s11
    // Predicated region
    $region45: #{_lambda_.3} parent=5 // pred_check
      %p676 = pneg %p675
    $region46: #{_lambda_.3} parent=5 // pred_check_branch
      %678 = sbr.rel (%p676) target = $region48
    $region47: #{_lambda_.3} parent=5 // pred_region
      %s679 = ssub.s32 %s11, 2
      // Predicated region
      $region49: #{_lambda_.3} parent=47 // pred_check
        %p680 = pneg %p150
      $region50: #{_lambda_.3} parent=47 // pred_check_branch
        %682 = sbr.rel (%p680) target = $region52
      $region51: #{_lambda_.3} parent=47 // pred_region
        %s683 = smul.u32 8, %s17
        %p684 = scmp.lt.s32.totalorder %s683, 15
        %s685 = scalar_select %p684, %s683, 15
        %s686 = smul.addr %s685, 4
        %s687 = scalar_lea.vmem %s5, %s686
      $region52: #{_lambda_.3} parent=47 // pred_fallthru
        _
    $region48: #{_lambda_.3} parent=5 // pred_fallthru
      _
  $region6: #{_lambda_.3} parent=0 // loop_footer
    %s15 = sadd.s32 1, %s11
  $region7: #{_lambda_.3} parent=0 // loop_footer_branch
    %10 = sbr.rel target = $region3
  $region8: #{_lambda_.3} parent=0 // loop_exit
    _

// kernel: _lambda_.5
$region0: #{_lambda_.5}
  #allocation0 [shape = 'u32[]', space=smem, size = 0x4, offset = 0x4, fixed_abs, tag = 'smem constant byte address 0x4 - core index']
  #allocation1 [shape = 'u32[144,128]{1,0:T(1,128)}', space=vmem, size = 0x12000, scoped, tag = 'internal scratch']
  %s0 = inlined_call_operand.vmem [shape: f32[16,4,128], index: 0, kind: input, shape index: {}]
  %s1 = inlined_call_operand.vmem [shape: bf16[128,128], index: 1, kind: input, shape index: {}]
  %s2 = inlined_call_operand.vmem [shape: bf16[128,128], index: 2, kind: input, shape index: {}]
  %s3 = inlined_call_operand.vmem [shape: f32[1,128], index: 3, kind: input, shape index: {}]
  %s4 = inlined_call_operand.vmem [shape: f32[1,128], index: 4, kind: input, shape index: {}]
  %s5 = inlined_call_operand.hbm [shape: f32[16,4,128], index: 5, kind: output, shape index: {}]
  %s6 = sld [smem:[#allocation0]]
  $region53: #{_lambda_.5} parent=0
    _
  %s8 = ssub.s32 1, %s6
  %s9 = scalar_select 0, %s8, %s6
  $region1: #{_lambda_.5} parent=0
    #allocation2 [shape = 'u8[32768]{0}', space=vmem, size = 0x8000, scoped, tag = 'output window, operand 0']
    #allocation3 [shape = 's32[2]{0}', space=sflag, size = 0x8, scoped, tag = 'scoped memory for _lambda_.5']
    %10 = vsyncpa [#allocation3], 0
    %s11 = scalar_lea.sflag [#allocation3], 1
    %12 = vsyncpa %s11, 0
    loop: start=0, step=1, limit=4
    $region2: #{_lambda_.5} parent=1 // loop_pre_header
      _
    $region3: #{_lambda_.5} parent=1 // loop_header
      %s14 = sphi 0, %s18
      %p15 = scmp.ge.s32.totalorder %s14, 4
      %s24 = sphi 0, %s26
      %s27 = sphi 0, %s24
      %s28 = sphi 0, %s27
      %s44 = sphi 0, %s28
      %s48 = sphi 0, %s48
      %s50 = sphi 0, %s48
      %s51 = sphi 0, %s50
      %s65 = sphi 0, %s51
      %s69 = sphi 0, %s69
      %s71 = sphi 0, %s69
      %s72 = sphi 0, %s71
      %s86 = sphi 0, %s72
      %s90 = sphi 0, %s90
      %s92 = sphi 0, %s90
      %s93 = sphi 0, %s92
      %s107 = sphi 0, %s93
      %s111 = sphi 0, %s111
      %s113 = sphi 0, %s111
      %s114 = sphi 0, %s113
      %s128 = sphi 0, %s114
      %s134 = sphi 0, %s136
      %s137 = sphi 0, %s134
      %s138 = sphi 0, %s137
      %s154 = sphi 0, %s138
    $region4: #{_lambda_.5} parent=1 // loop_header_branch
      %17 = sbr.rel (%p15) target = $region8
    $region5: #{_lambda_.5} parent=1 // loop_body
      %s19 = ssub.s32 %s14, 1
      %s20 = ssub.s32 %s14, 2
      %s21 = sadd.s32 %s14, 1
      %s22 = ssub.s32 %s14, %s21
      %p23 = scmp.eq.s32.totalorder %s22, 0
      %s25 = sadd.s32 %s24, 1
      %s26 = scalar_select %p23, %s24, %s25
      %p29 = pneg %p23
      %p30 = scmp.eq.s32.totalorder %s14, 1
      %p31 = por %p29, %p30
      %p32 = scmp.ne.s32.totalorder %s24, %s27
      %p33 = scmp.eq.s32.totalorder %s14, 0
      %p34 = por %p32, %p33
      %p35 = scmp.ne.s32.totalorder %s24, %s27
      %p36 = scmp.eq.s32.totalorder %s19, 1
      %p37 = por %p35, %p36
      %p38 = scmp.ne.s32.totalorder %s27, %s28
      %p39 = scmp.eq.s32.totalorder %s19, 0
      %p40 = por %p38, %p39
      %p41 = scmp.ne.s32.totalorder %s27, %s28
      %p42 = scmp.eq.s32.totalorder %s20, 1
      %p43 = por %p41, %p42
      %p45 = scmp.ne.s32.totalorder %s28, %s44
      %p46 = scmp.eq.s32.totalorder %s20, 0
      %p47 = por %p45, %p46
      %s49 = sadd.s32 %s48, 1
      %p52 = scmp.eq.s32.totalorder %s14, 1
      %p53 = scmp.ne.s32.totalorder %s48, %s50
      %p54 = scmp.eq.s32.totalorder %s14, 0
      %p55 = por %p53, %p54
      %p56 = scmp.ne.s32.totalorder %s48, %s50
      %p57 = scmp.eq.s32.totalorder %s19, 1
      %p58 = por %p56, %p57
      %p59 = scmp.ne.s32.totalorder %s50, %s51
      %p60 = scmp.eq.s32.totalorder %s19, 0
      %p61 = por %p59, %p60
      %p62 = scmp.ne.s32.totalorder %s50, %s51
      %p63 = scmp.eq.s32.totalorder %s20, 1
      %p64 = por %p62, %p63
      %p66 = scmp.ne.s32.totalorder %s51, %s65
      %p67 = scmp.eq.s32.totalorder %s20, 0
      %p68 = por %p66, %p67
      %s70 = sadd.s32 %s69, 1
      %p73 = scmp.eq.s32.totalorder %s14, 1
      %p74 = scmp.ne.s32.totalorder %s69, %s71
      %p75 = scmp.eq.s32.totalorder %s14, 0
      %p76 = por %p74, %p75
      %p77 = scmp.ne.s32.totalorder %s69, %s71
      %p78 = scmp.eq.s32.totalorder %s19, 1
      %p79 = por %p77, %p78
      %p80 = scmp.ne.s32.totalorder %s71, %s72
      %p81 = scmp.eq.s32.totalorder %s19, 0
      %p82 = por %p80, %p81
      %p83 = scmp.ne.s32.totalorder %s71, %s72
      %p84 = scmp.eq.s32.totalorder %s20, 1
      %p85 = por %p83, %p84
      %p87 = scmp.ne.s32.totalorder %s72, %s86
      %p88 = scmp.eq.s32.totalorder %s20, 0
      %p89 = por %p87, %p88
      %s91 = sadd.s32 %s90, 1
      %p94 = scmp.eq.s32.totalorder %s14, 1
      %p95 = scmp.ne.s32.totalorder %s90, %s92
      %p96 = scmp.eq.s32.totalorder %s14, 0
      %p97 = por %p95, %p96
      %p98 = scmp.ne.s32.totalorder %s90, %s92
      %p99 = scmp.eq.s32.totalorder %s19, 1
      %p100 = por %p98, %p99
      %p101 = scmp.ne.s32.totalorder %s92, %s93
      %p102 = scmp.eq.s32.totalorder %s19, 0
      %p103 = por %p101, %p102
      %p104 = scmp.ne.s32.totalorder %s92, %s93
      %p105 = scmp.eq.s32.totalorder %s20, 1
      %p106 = por %p104, %p105
      %p108 = scmp.ne.s32.totalorder %s93, %s107
      %p109 = scmp.eq.s32.totalorder %s20, 0
      %p110 = por %p108, %p109
      %s112 = sadd.s32 %s111, 1
      %p115 = scmp.eq.s32.totalorder %s14, 1
      %p116 = scmp.ne.s32.totalorder %s111, %s113
      %p117 = scmp.eq.s32.totalorder %s14, 0
      %p118 = por %p116, %p117
      %p119 = scmp.ne.s32.totalorder %s111, %s113
      %p120 = scmp.eq.s32.totalorder %s19, 1
      %p121 = por %p119, %p120
      %p122 = scmp.ne.s32.totalorder %s113, %s114
      %p123 = scmp.eq.s32.totalorder %s19, 0
      %p124 = por %p122, %p123
      %p125 = scmp.ne.s32.totalorder %s113, %s114
      %p126 = scmp.eq.s32.totalorder %s20, 1
      %p127 = por %p125, %p126
      %p129 = scmp.ne.s32.totalorder %s114, %s128
      %p130 = scmp.eq.s32.totalorder %s20, 0
      %p131 = por %p129, %p130
      %s132 = ssub.s32 %s14, %s21
      %p133 = scmp.eq.s32.totalorder %s132, 0
      %s135 = sadd.s32 %s134, 1
      %s136 = scalar_select %p133, %s134, %s135
      %p139 = pneg %p133
      %p140 = scmp.eq.s32.totalorder %s14, 1
      %p141 = por %p139, %p140
      %p142 = scmp.ne.s32.totalorder %s134, %s137
      %p143 = scmp.eq.s32.totalorder %s14, 0
      %p144 = por %p142, %p143
      %p145 = scmp.ne.s32.totalorder %s134, %s137
      %p146 = scmp.eq.s32.totalorder %s19, 1
      %p147 = por %p145, %p146
      %p148 = scmp.ne.s32.totalorder %s137, %s138
      %p149 = scmp.eq.s32.totalorder %s19, 0
      %p150 = por %p148, %p149
      %p151 = scmp.ne.s32.totalorder %s137, %s138
      %p152 = scmp.eq.s32.totalorder %s20, 1
      %p153 = por %p151, %p152
      %p155 = scmp.ne.s32.totalorder %s138, %s154
      %p156 = scmp.eq.s32.totalorder %s20, 0
      %p157 = por %p155, %p156
      %p158 = scmp.le.s32.totalorder 1, %s14
      %p159 = scmp.lt.s32.totalorder %s14, 3
      %p160 = pnand %p158, %p159
      %p161 = pneg %p160
      // Predicated region
      $region9: #{_lambda_.5} parent=5 // pred_check
        _
      $region10: #{_lambda_.5} parent=5 // pred_check_branch
        %163 = sbr.rel (%p160) target = $region12
      $region11: #{_lambda_.5} parent=5 // pred_region
        %s164 = ssub.s32 %s14, 1
        // Predicated region
        $region13: #{_lambda_.5} parent=11 // pred_check
          %p165 = pneg %p61
        $region14: #{_lambda_.5} parent=11 // pred_check_branch
          %167 = sbr.rel (%p165) target = $region16
        $region15: #{_lambda_.5} parent=11 // pred_region
          _
        $region16: #{_lambda_.5} parent=11 // pred_fallthru
          _
        // Predicated region
        $region17: #{_lambda_.5} parent=11 // pred_check
          %p168 = pneg %p82
        $region18: #{_lambda_.5} parent=11 // pred_check_branch
          %170 = sbr.rel (%p168) target = $region20
        $region19: #{_lambda_.5} parent=11 // pred_region
          _
        $region20: #{_lambda_.5} parent=11 // pred_fallthru
          _
        // Predicated region
        $region21: #{_lambda_.5} parent=11 // pred_check
          %p171 = pneg %p103
        $region22: #{_lambda_.5} parent=11 // pred_check_branch
          %173 = sbr.rel (%p171) target = $region24
        $region23: #{_lambda_.5} parent=11 // pred_region
          _
        $region24: #{_lambda_.5} parent=11 // pred_fallthru
          _
        // Predicated region
        $region25: #{_lambda_.5} parent=11 // pred_check
          %p174 = pneg %p124
        $region26: #{_lambda_.5} parent=11 // pred_check_branch
          %176 = sbr.rel (%p174) target = $region28
        $region27: #{_lambda_.5} parent=11 // pred_region
          _
        $region28: #{_lambda_.5} parent=11 // pred_fallthru
          _
      $region12: #{_lambda_.5} parent=5 // pred_fallthru
        _
      %p177 = scmp.lt.s32.totalorder %s14, 2
      // Predicated region
      $region29: #{_lambda_.5} parent=5 // pred_check
        %p178 = pneg %p177
      $region30: #{_lambda_.5} parent=5 // pred_check_branch
        %180 = sbr.rel (%p178) target = $region32
      $region31: #{_lambda_.5} parent=5 // pred_region
        // Predicated region
        $region33: #{_lambda_.5} parent=31 // pred_check
          %p181 = pneg %p34
        $region34: #{_lambda_.5} parent=31 // pred_check_branch
          %183 = sbr.rel (%p181) target = $region36
        $region35: #{_lambda_.5} parent=31 // pred_region
          %s184 = smul.u32 8, %s14
          %p185 = scmp.lt.s32.totalorder %s184, 15
          %s186 = scalar_select %p185, %s184, 15
          %s187 = smul.addr %s186, 4
          %s188 = scalar_lea.vmem %s0, %s187
          %s189 = smul.u32 8, %s14
        $region36: #{_lambda_.5} parent=31 // pred_fallthru
          _
      $region32: #{_lambda_.5} parent=5 // pred_fallthru
        _
      %p190 = scmp.le.s32.totalorder 1, %s14
      %p191 = scmp.lt.s32.totalorder %s14, 3
      %p192 = pnand %p190, %p191
      %p193 = pneg %p192
      // Predicated region
      $region37: #{_lambda_.5} parent=5 // pred_check
        _
      $region38: #{_lambda_.5} parent=5 // pred_check_branch
        %195 = sbr.rel (%p192) target = $region40
      $region39: #{_lambda_.5} parent=5 // pred_region
        %s196 = ssub.s32 %s14, 1
        %s197 = smul.u32 8, %s19
        %p198 = scmp.lt.s32.totalorder %s197, 15
        %s199 = scalar_select %p198, %s197, 15
        %s200 = smul.addr %s199, 4
        %s201 = scalar_lea.vmem %s0, %s200
        %p202 = pneg %p40
        %p203 = pneg %p37
        %p204 = pneg %p61
        %p205 = pneg %p58
        %p206 = pneg %p82
        %p207 = pneg %p79
        %p208 = pneg %p103
        %p209 = pneg %p100
        %p210 = pneg %p124
        %p211 = pneg %p121
        %p212 = pneg %p150
        %p213 = pneg %p147
        %s214 = sand.u32 %s137, 1
        %s215 = scalar_lea.sflag [#allocation3], %s214
        %s216 = sand.u32 %s137, 1
        %s217 = smul.addr %s216, 32
        %s218 = scalar_lea.vmem [#allocation2], %s217
        %s219 = smul.u32 8, %s19
        %p220 = scmp.lt.s32.totalorder %s219, 15
        %s221 = scalar_select %p220, %s219, 15
        %s222 = smul.addr %s221, 4
        %s223 = scalar_lea.vmem %s0, %s222
        %s224 = smul.u32 8, %s19
        %s225 = smul.u32 8, %s19
        %v227 = vld [vmem:[%s223] sm:$0xf]
        %v228 = vld [vmem:[%s223 + $0x4] sm:$0xf]
        %v229 = vld [vmem:[%s223 + $0x8] sm:$0xf]
        %v230 = vld [vmem:[%s223 + $0xc] sm:$0xf]
        %v231 = vld [vmem:[%s223 + $0x10] sm:$0xf]
        %v232 = vld [vmem:[%s223 + $0x14] sm:$0xf]
        %v233 = vld [vmem:[%s223 + $0x18] sm:$0xf]
        %v234 = vld [vmem:[%s223 + $0x1c] sm:$0xf]
        %v243 = vcombine.low %v227, %v228
        %v244 = vcombine.low %v229, %v230
        %v245 = vcombine.low %v231, %v232
        %v246 = vcombine.low %v233, %v234
        %v251 = vpack.c.bf16 %v244, %v243
        %v252 = vpack.c.bf16 %v246, %v245
        %v253 = vld [vmem:[%s1] sm:$0xf]
        %v254 = vld [vmem:[%s1 + $0x4] sm:$0xf]
        %v255 = vld [vmem:[%s1 + $0x8] sm:$0xf]
        %v256 = vld [vmem:[%s1 + $0xc] sm:$0xf]
        %v257 = vld [vmem:[%s1 + $0x10] sm:$0xf]
        %v258 = vld [vmem:[%s1 + $0x14] sm:$0xf]
        %v259 = vld [vmem:[%s1 + $0x18] sm:$0xf]
        %v260 = vld [vmem:[%s1 + $0x1c] sm:$0xf]
        %v261 = vld [vmem:[%s1 + $0x20] sm:$0xf]
        %v262 = vld [vmem:[%s1 + $0x24] sm:$0xf]
        %v263 = vld [vmem:[%s1 + $0x28] sm:$0xf]
        %v264 = vld [vmem:[%s1 + $0x2c] sm:$0xf]
        %v265 = vld [vmem:[%s1 + $0x30] sm:$0xf]
        %v266 = vld [vmem:[%s1 + $0x34] sm:$0xf]
        %v267 = vld [vmem:[%s1 + $0x38] sm:$0xf]
        %v268 = vld [vmem:[%s1 + $0x3c] sm:$0xf]
        %v269 = vld [vmem:[%s3] sm:$0x1]
        %v271 = vlaneseq
        %v272 = vshrl.u32 %v271, 7
        %v273 = vsub.s32 0, %v272
        %v274 = vrot.slane %v269, %v273
        %v292 = vunpack.c.l.b16 %v253
        %v293 = vunpack.c.l.b16 %v254
        %v294 = vunpack.c.l.b16 %v255
        %v295 = vunpack.c.l.b16 %v256
        %v296 = vunpack.c.l.b16 %v257
        %v297 = vunpack.c.l.b16 %v258
        %v298 = vunpack.c.l.b16 %v259
        %v299 = vunpack.c.l.b16 %v260
        %v300 = vunpack.c.l.b16 %v261
        %v301 = vunpack.c.l.b16 %v262
        %v302 = vunpack.c.l.b16 %v263
        %v303 = vunpack.c.l.b16 %v264
        %v304 = vunpack.c.l.b16 %v265
        %v305 = vunpack.c.l.b16 %v266
        %v306 = vunpack.c.l.b16 %v267
        %v307 = vunpack.c.l.b16 %v268
        %v308 = vpack.c.b16 %v293, %v292
        %v309 = vpack.c.b16 %v295, %v294
        %v310 = vpack.c.b16 %v297, %v296
        %v311 = vpack.c.b16 %v299, %v298
        %v312 = vpack.c.b16 %v301, %v300
        %v313 = vpack.c.b16 %v303, %v302
        %v314 = vpack.c.b16 %v305, %v304
        %v315 = vpack.c.b16 %v307, %v306
        %324 = vmatprep.subr.bf16.mxu0 0
        %325 = vmatpush1.bf16.msra.mxu0 %v315
        %326 = vmatprep.subr.bf16.mxu0 0
        %327 = vmatpush1.bf16.msra.mxu0 %v314
        %328 = vmatprep.subr.bf16.mxu0 0
        %329 = vmatpush1.bf16.msra.mxu0 %v313
        %330 = vmatprep.subr.bf16.mxu0 0
        %331 = vmatpush1.bf16.msra.mxu0 %v312
        %332 = vmatprep.subr.bf16.mxu0 0
        %333 = vmatpush1.bf16.msra.mxu0 %v311
        %334 = vmatprep.subr.bf16.mxu0 0
        %335 = vmatpush1.bf16.msra.mxu0 %v310
        %336 = vmatprep.subr.bf16.mxu0 0
        %337 = vmatpush1.bf16.msra.mxu0 %v309
        %338 = vmatprep.subr.bf16.mxu0 0
        %339 = vmatpush1.bf16.msra.mxu0 %v308
        %340 = vmatprep.subr.bf16.mxu0 0
        %341 = vmatpush2.bf16.msra.mxu0 0
        %342 = vmatprep.subr.bf16.mxu0 0
        %343 = vmatpush2.bf16.msra.mxu0 0
        %344 = vmatprep.subr.bf16.mxu0 0
        %345 = vmatpush2.bf16.msra.mxu0 0
        %346 = vmatprep.subr.bf16.mxu0 0
        %347 = vmatpush2.bf16.msra.mxu0 0
        %348 = vmatprep.subr.bf16.mxu0 0
        %349 = vmatpush2.bf16.msra.mxu0 0
        %350 = vmatprep.subr.bf16.mxu0 0
        %351 = vmatpush2.bf16.msra.mxu0 0
        %352 = vmatprep.subr.bf16.mxu0 0
        %353 = vmatpush2.bf16.msra.mxu0 0
        %354 = vmatprep.subr.bf16.mxu0 0
        %355 = vmatpush2.bf16.msra.mxu0 0
        %356 = vmatprep.mubr.bf16.mxu0 0
        %357 = vmatmul.mubr.bf16.gmra.mxu0 %v251
        %v358 = vpop.f32.mrf.mxu0
        %v359 = vadd.f32 %v274, %v358
        %v360 = vpop.f32.mrf.mxu0
        %v361 = vpop.f32.mrf.mxu0
        %v362 = vadd.f32 %v274, %v361
        %v363 = vpop.f32.mrf.mxu0
        %364 = vmatprep.mubr.bf16.mxu0 0
        %365 = vmatmul.mubr.bf16.gmra.mxu0 %v252
        %v366 = vpop.f32.mrf.mxu0
        %v367 = vadd.f32 %v274, %v366
        %v368 = vpop.f32.mrf.mxu0
        %v369 = vpop.f32.mrf.mxu0
        %v370 = vadd.f32 %v274, %v369
        %v371 = vpop.f32.mrf.mxu0
        %372 = vdwg.mxu0
        %v373 = vtanh.pop %v359
        %v374 = vtanh.pop %v362
        %v375 = vtanh.pop %v367
        %v376 = vtanh.pop %v370
        %v377 = vpack.c.bf16 %v374, %v373
        %v378 = vpack.c.bf16 %v376, %v375
        %v379 = vld [vmem:[%s2] sm:$0xf]
        %v380 = vld [vmem:[%s2 + $0x4] sm:$0xf]
        %v381 = vld [vmem:[%s2 + $0x8] sm:$0xf]
        %v382 = vld [vmem:[%s2 + $0xc] sm:$0xf]
        %v383 = vld [vmem:[%s2 + $0x10] sm:$0xf]
        %v384 = vld [vmem:[%s2 + $0x14] sm:$0xf]
        %v385 = vld [vmem:[%s2 + $0x18] sm:$0xf]
        %v386 = vld [vmem:[%s2 + $0x1c] sm:$0xf]
        %v387 = vld [vmem:[%s2 + $0x20] sm:$0xf]
        %v388 = vld [vmem:[%s2 + $0x24] sm:$0xf]
        %v389 = vld [vmem:[%s2 + $0x28] sm:$0xf]
        %v390 = vld [vmem:[%s2 + $0x2c] sm:$0xf]
        %v391 = vld [vmem:[%s2 + $0x30] sm:$0xf]
        %v392 = vld [vmem:[%s2 + $0x34] sm:$0xf]
        %v393 = vld [vmem:[%s2 + $0x38] sm:$0xf]
        %v394 = vld [vmem:[%s2 + $0x3c] sm:$0xf]
        %v395 = vld [vmem:[%s4] sm:$0x1]
        %v397 = vlaneseq
        %v398 = vshrl.u32 %v397, 7
        %v399 = vsub.s32 0, %v398
        %v400 = vrot.slane %v395, %v399
        %v418 = vunpack.c.l.b16 %v379
        %v419 = vunpack.c.l.b16 %v380
        %v420 = vunpack.c.l.b16 %v381
        %v421 = vunpack.c.l.b16 %v382
        %v422 = vunpack.c.l.b16 %v383
        %v423 = vunpack.c.l.b16 %v384
        %v424 = vunpack.c.l.b16 %v385
        %v425 = vunpack.c.l.b16 %v386
        %v426 = vunpack.c.l.b16 %v387
        %v427 = vunpack.c.l.b16 %v388
        %v428 = vunpack.c.l.b16 %v389
        %v429 = vunpack.c.l.b16 %v390
        %v430 = vunpack.c.l.b16 %v391
        %v431 = vunpack.c.l.b16 %v392
        %v432 = vunpack.c.l.b16 %v393
        %v433 = vunpack.c.l.b16 %v394
        %v434 = vpack.c.b16 %v419, %v418
        %v435 = vpack.c.b16 %v421, %v420
        %v436 = vpack.c.b16 %v423, %v422
        %v437 = vpack.c.b16 %v425, %v424
        %v438 = vpack.c.b16 %v427, %v426
        %v439 = vpack.c.b16 %v429, %v428
        %v440 = vpack.c.b16 %v431, %v430
        %v441 = vpack.c.b16 %v433, %v432
        %450 = vmatprep.subr.bf16.mxu0 0
        %451 = vmatpush1.bf16.msra.mxu0 %v441
        %452 = vmatprep.subr.bf16.mxu0 0
        %453 = vmatpush1.bf16.msra.mxu0 %v440
        %454 = vmatprep.subr.bf16.mxu0 0
        %455 = vmatpush1.bf16.msra.mxu0 %v439
        %456 = vmatprep.subr.bf16.mxu0 0
        %457 = vmatpush1.bf16.msra.mxu0 %v438
        %458 = vmatprep.subr.bf16.mxu0 0
        %459 = vmatpush1.bf16.msra.mxu0 %v437
        %460 = vmatprep.subr.bf16.mxu0 0
        %461 = vmatpush1.bf16.msra.mxu0 %v436
        %462 = vmatprep.subr.bf16.mxu0 0
        %463 = vmatpush1.bf16.msra.mxu0 %v435
        %464 = vmatprep.subr.bf16.mxu0 0
        %465 = vmatpush1.bf16.msra.mxu0 %v434
        %466 = vmatprep.subr.bf16.mxu0 0
        %467 = vmatpush2.bf16.msra.mxu0 0
        %468 = vmatprep.subr.bf16.mxu0 0
        %469 = vmatpush2.bf16.msra.mxu0 0
        %470 = vmatprep.subr.bf16.mxu0 0
        %471 = vmatpush2.bf16.msra.mxu0 0
        %472 = vmatprep.subr.bf16.mxu0 0
        %473 = vmatpush2.bf16.msra.mxu0 0
        %474 = vmatprep.subr.bf16.mxu0 0
        %475 = vmatpush2.bf16.msra.mxu0 0
        %476 = vmatprep.subr.bf16.mxu0 0
        %477 = vmatpush2.bf16.msra.mxu0 0
        %478 = vmatprep.subr.bf16.mxu0 0
        %479 = vmatpush2.bf16.msra.mxu0 0
        %480 = vmatprep.subr.bf16.mxu0 0
        %481 = vmatpush2.bf16.msra.mxu0 0
        %482 = vmatprep.mubr.bf16.mxu0 0
        %483 = vmatmul.mubr.bf16.gmra.mxu0 %v377
        %v484 = vpop.f32.mrf.mxu0
        %v485 = vadd.f32 %v400, %v484
        %v486 = vpop.f32.mrf.mxu0
        %v487 = vpop.f32.mrf.mxu0
        %v488 = vadd.f32 %v400, %v487
        %v489 = vpop.f32.mrf.mxu0
        %490 = vmatprep.mubr.bf16.mxu0 0
        %491 = vmatmul.mubr.bf16.gmra.mxu0 %v378
        %v492 = vpop.f32.mrf.mxu0
        %v493 = vadd.f32 %v400, %v492
        %v494 = vpop.f32.mrf.mxu0
        %v495 = vpop.f32.mrf.mxu0
        %v496 = vadd.f32 %v400, %v495
        %v497 = vpop.f32.mrf.mxu0
        %498 = vdwg.mxu0
        %v503 = vcombine.high %v485, %v485
        %v504 = vcombine.high %v488, %v488
        %v505 = vcombine.high %v493, %v493
        %v506 = vcombine.high %v496, %v496
        %511 = vst [vmem:[%s218] sm:$0xf] %v485
        %512 = vst [vmem:[%s218 + $0x4] sm:$0xf] %v503
        %513 = vst [vmem:[%s218 + $0x8] sm:$0xf] %v488
        %514 = vst [vmem:[%s218 + $0xc] sm:$0xf] %v504
        %515 = vst [vmem:[%s218 + $0x10] sm:$0xf] %v493
        %516 = vst [vmem:[%s218 + $0x14] sm:$0xf] %v505
        %517 = vst [vmem:[%s218 + $0x18] sm:$0xf] %v496
        %518 = vst [vmem:[%s218 + $0x1c] sm:$0xf] %v506
        %s519 = sand.u32 %s137, 1
        %s520 = scalar_lea.sflag [#allocation3], %s519
        %s521 = sand.u32 %s137, 1
        %s522 = smul.addr %s521, 32
        %s523 = scalar_lea.vmem [#allocation2], %s522
        // Predicated region
        $region41: #{_lambda_.5} parent=39 // pred_check
          %p524 = pneg %p147
        $region42: #{_lambda_.5} parent=39 // pred_check_branch
          %526 = sbr.rel (%p524) target = $region44
        $region43: #{_lambda_.5} parent=39 // pred_region
          %s527 = smul.u32 8, %s19
          %s529 = ssub.s32 512, 512
          %530 = vsyncadd %s520, %s529
          %s531 = smul.addr %s527, 64
          %s532 = scalar_lea.hbm %s5, %s531
          %s533 = sshll.u32 %s523, 4
          %s534 = int_to_ptr.vmem [resolvable:$true] %s533
          %539 = dma.vmem_to_hbm [thread:$0]  %s534, 512, %s532, %s520, 64, 64, 4
        $region44: #{_lambda_.5} parent=39 // pred_fallthru
          _
      $region40: #{_lambda_.5} parent=5 // pred_fallthru
        _
      %p540 = scmp.le.s32.totalorder 2, %s14
      // Predicated region
      $region45: #{_lambda_.5} parent=5 // pred_check
        %p541 = pneg %p540
      $region46: #{_lambda_.5} parent=5 // pred_check_branch
        %543 = sbr.rel (%p541) target = $region48
      $region47: #{_lambda_.5} parent=5 // pred_region
        %s544 = ssub.s32 %s14, 2
        // Predicated region
        $region49: #{_lambda_.5} parent=47 // pred_check
          %p545 = pneg %p153
        $region50: #{_lambda_.5} parent=47 // pred_check_branch
          %547 = sbr.rel (%p545) target = $region52
        $region51: #{_lambda_.5} parent=47 // pred_region
          %s548 = sand.u32 %s138, 1
          %s549 = scalar_lea.sflag [#allocation3], %s548
          %s550 = sand.u32 %s138, 1
          %s551 = smul.addr %s550, 32
          %s552 = scalar_lea.vmem [#allocation2], %s551
          %553 = dma.done %s549, 512
        $region52: #{_lambda_.5} parent=47 // pred_fallthru
          _
      $region48: #{_lambda_.5} parent=5 // pred_fallthru
        _
    $region6: #{_lambda_.5} parent=1 // loop_footer
      %s18 = sadd.s32 1, %s14
    $region7: #{_lambda_.5} parent=1 // loop_footer_branch
      %13 = sbr.rel target = $region3
    $region8: #{_lambda_.5} parent=1 // loop_exit
      _
    %554 = vsyncpa [#allocation3], 1
    %s555 = scalar_lea.sflag [#allocation3], 1
    %556 = vsyncpa %s555, 1

// kernel: _lambda_.4
$region0: #{_lambda_.4}
  #allocation0 [shape = 'u32[]', space=smem, size = 0x4, offset = 0x4, fixed_abs, tag = 'smem constant byte address 0x4 - core index']
  #allocation1 [shape = 'u32[144,128]{1,0:T(1,128)}', space=vmem, size = 0x12000, scoped, tag = 'internal scratch']
  %s0 = inlined_call_operand.vmem [shape: f32[2,32,32], index: 0, kind: input, shape index: {}]
  %s1 = inlined_call_operand.vmem [shape: f32[2,32,128], index: 1, kind: input, shape index: {}]
  %s2 = inlined_call_operand.vmem [shape: bf16[32,128], index: 2, kind: input, shape index: {}]
  %s3 = inlined_call_operand.vmem [shape: bf16[32,128], index: 3, kind: input, shape index: {}]
  %s4 = inlined_call_operand.vmem [shape: f32[1,128], index: 4, kind: input, shape index: {}]
  %s5 = inlined_call_operand.vmem [shape: bf16[128,128], index: 5, kind: input, shape index: {}]
  %s6 = inlined_call_operand.vmem [shape: f32[1,128], index: 6, kind: input, shape index: {}]
  %s7 = inlined_call_operand.vmem [shape: f32[1,128], index: 7, kind: input, shape index: {}]
  %s8 = inlined_call_operand.vmem [shape: f32[1,128], index: 8, kind: input, shape index: {}]
  %s9 = inlined_call_operand.vmem [shape: bf16[128,128], index: 9, kind: input, shape index: {}]
  %s10 = inlined_call_operand.vmem [shape: f32[1,128], index: 10, kind: input, shape index: {}]
  %s11 = inlined_call_operand.vmem [shape: bf16[32,128], index: 11, kind: input, shape index: {}]
  %s12 = inlined_call_operand.vmem [shape: bf16[128,128], index: 12, kind: input, shape index: {}]
  %s13 = inlined_call_operand.vmem [shape: bf16[128,128], index: 13, kind: input, shape index: {}]
  %s14 = inlined_call_operand.vmem [shape: f32[1,128], index: 14, kind: input, shape index: {}]
  %s15 = inlined_call_operand.vmem [shape: f32[1,128], index: 15, kind: input, shape index: {}]
  %s16 = inlined_call_operand.vmem [shape: f32[1,128], index: 16, kind: input, shape index: {}]
  %s17 = inlined_call_operand.vmem [shape: bf16[128,128], index: 17, kind: input, shape index: {}]
  %s18 = inlined_call_operand.vmem [shape: f32[1,128], index: 18, kind: input, shape index: {}]
  %s19 = inlined_call_operand.vmem [shape: f32[2,32,128], index: 19, kind: output, shape index: {}]
  %s20 = sld [smem:[#allocation0]]
  $region109: #{_lambda_.4} parent=0
    _
  %s22 = ssub.s32 1, %s20
  %s23 = scalar_select 0, %s22, %s20
  loop: start=0, step=1, limit=4
  $region2: #{_lambda_.4} parent=0 // loop_pre_header
    _
  $region3: #{_lambda_.4} parent=0 // loop_header
    %s25 = sphi 0, %s29
    %p26 = scmp.ge.s32.totalorder %s25, 4
    %s35 = sphi 0, %s37
    %s38 = sphi 0, %s35
    %s39 = sphi 0, %s38
    %s55 = sphi 0, %s39
    %s61 = sphi 0, %s63
    %s64 = sphi 0, %s61
    %s65 = sphi 0, %s64
    %s81 = sphi 0, %s65
    %s85 = sphi 0, %s85
    %s87 = sphi 0, %s85
    %s88 = sphi 0, %s87
    %s102 = sphi 0, %s88
    %s106 = sphi 0, %s106
    %s108 = sphi 0, %s106
    %s109 = sphi 0, %s108
    %s123 = sphi 0, %s109
    %s127 = sphi 0, %s127
    %s129 = sphi 0, %s127
    %s130 = sphi 0, %s129
    %s144 = sphi 0, %s130
    %s148 = sphi 0, %s148
    %s150 = sphi 0, %s148
    %s151 = sphi 0, %s150
    %s165 = sphi 0, %s151
    %s169 = sphi 0, %s169
    %s171 = sphi 0, %s169
    %s172 = sphi 0, %s171
    %s186 = sphi 0, %s172
    %s190 = sphi 0, %s190
    %s192 = sphi 0, %s190
    %s193 = sphi 0, %s192
    %s207 = sphi 0, %s193
    %s211 = sphi 0, %s211
    %s213 = sphi 0, %s211
    %s214 = sphi 0, %s213
    %s228 = sphi 0, %s214
    %s232 = sphi 0, %s232
    %s234 = sphi 0, %s232
    %s235 = sphi 0, %s234
    %s249 = sphi 0, %s235
    %s253 = sphi 0, %s253
    %s255 = sphi 0, %s253
    %s256 = sphi 0, %s255
    %s270 = sphi 0, %s256
    %s274 = sphi 0, %s274
    %s276 = sphi 0, %s274
    %s277 = sphi 0, %s276
    %s291 = sphi 0, %s277
    %s295 = sphi 0, %s295
    %s297 = sphi 0, %s295
    %s298 = sphi 0, %s297
    %s312 = sphi 0, %s298
    %s316 = sphi 0, %s316
    %s318 = sphi 0, %s316
    %s319 = sphi 0, %s318
    %s333 = sphi 0, %s319
    %s337 = sphi 0, %s337
    %s339 = sphi 0, %s337
    %s340 = sphi 0, %s339
    %s354 = sphi 0, %s340
    %s358 = sphi 0, %s358
    %s360 = sphi 0, %s358
    %s361 = sphi 0, %s360
    %s375 = sphi 0, %s361
    %s379 = sphi 0, %s379
    %s381 = sphi 0, %s379
    %s382 = sphi 0, %s381
    %s396 = sphi 0, %s382
    %s400 = sphi 0, %s400
    %s402 = sphi 0, %s400
    %s403 = sphi 0, %s402
    %s417 = sphi 0, %s403
    %s421 = sphi 0, %s421
    %s423 = sphi 0, %s421
    %s424 = sphi 0, %s423
    %s438 = sphi 0, %s424
    %s444 = sphi 0, %s446
    %s447 = sphi 0, %s444
    %s448 = sphi 0, %s447
    %s464 = sphi 0, %s448
  $region4: #{_lambda_.4} parent=0 // loop_header_branch
    %28 = sbr.rel (%p26) target = $region8
  $region5: #{_lambda_.4} parent=0 // loop_body
    %s30 = ssub.s32 %s25, 1
    %s31 = ssub.s32 %s25, 2
    %s32 = sadd.s32 %s25, 1
    %s33 = ssub.s32 %s25, %s32
    %p34 = scmp.eq.s32.totalorder %s33, 0
    %s36 = sadd.s32 %s35, 1
    %s37 = scalar_select %p34, %s35, %s36
    %p40 = pneg %p34
    %p41 = scmp.eq.s32.totalorder %s25, 1
    %p42 = por %p40, %p41
    %p43 = scmp.ne.s32.totalorder %s35, %s38
    %p44 = scmp.eq.s32.totalorder %s25, 0
    %p45 = por %p43, %p44
    %p46 = scmp.ne.s32.totalorder %s35, %s38
    %p47 = scmp.eq.s32.totalorder %s30, 1
    %p48 = por %p46, %p47
    %p49 = scmp.ne.s32.totalorder %s38, %s39
    %p50 = scmp.eq.s32.totalorder %s30, 0
    %p51 = por %p49, %p50
    %p52 = scmp.ne.s32.totalorder %s38, %s39
    %p53 = scmp.eq.s32.totalorder %s31, 1
    %p54 = por %p52, %p53
    %p56 = scmp.ne.s32.totalorder %s39, %s55
    %p57 = scmp.eq.s32.totalorder %s31, 0
    %p58 = por %p56, %p57
    %s59 = ssub.s32 %s25, %s32
    %p60 = scmp.eq.s32.totalorder %s59, 0
    %s62 = sadd.s32 %s61, 1
    %s63 = scalar_select %p60, %s61, %s62
    %p66 = pneg %p60
    %p67 = scmp.eq.s32.totalorder %s25, 1
    %p68 = por %p66, %p67
    %p69 = scmp.ne.s32.totalorder %s61, %s64
    %p70 = scmp.eq.s32.totalorder %s25, 0
    %p71 = por %p69, %p70
    %p72 = scmp.ne.s32.totalorder %s61, %s64
    %p73 = scmp.eq.s32.totalorder %s30, 1
    %p74 = por %p72, %p73
    %p75 = scmp.ne.s32.totalorder %s64, %s65
    %p76 = scmp.eq.s32.totalorder %s30, 0
    %p77 = por %p75, %p76
    %p78 = scmp.ne.s32.totalorder %s64, %s65
    %p79 = scmp.eq.s32.totalorder %s31, 1
    %p80 = por %p78, %p79
    %p82 = scmp.ne.s32.totalorder %s65, %s81
    %p83 = scmp.eq.s32.totalorder %s31, 0
    %p84 = por %p82, %p83
    %s86 = sadd.s32 %s85, 1
    %p89 = scmp.eq.s32.totalorder %s25, 1
    %p90 = scmp.ne.s32.totalorder %s85, %s87
    %p91 = scmp.eq.s32.totalorder %s25, 0
    %p92 = por %p90, %p91
    %p93 = scmp.ne.s32.totalorder %s85, %s87
    %p94 = scmp.eq.s32.totalorder %s30, 1
    %p95 = por %p93, %p94
    %p96 = scmp.ne.s32.totalorder %s87, %s88
    %p97 = scmp.eq.s32.totalorder %s30, 0
    %p98 = por %p96, %p97
    %p99 = scmp.ne.s32.totalorder %s87, %s88
    %p100 = scmp.eq.s32.totalorder %s31, 1
    %p101 = por %p99, %p100
    %p103 = scmp.ne.s32.totalorder %s88, %s102
    %p104 = scmp.eq.s32.totalorder %s31, 0
    %p105 = por %p103, %p104
    %s107 = sadd.s32 %s106, 1
    %p110 = scmp.eq.s32.totalorder %s25, 1
    %p111 = scmp.ne.s32.totalorder %s106, %s108
    %p112 = scmp.eq.s32.totalorder %s25, 0
    %p113 = por %p111, %p112
    %p114 = scmp.ne.s32.totalorder %s106, %s108
    %p115 = scmp.eq.s32.totalorder %s30, 1
    %p116 = por %p114, %p115
    %p117 = scmp.ne.s32.totalorder %s108, %s109
    %p118 = scmp.eq.s32.totalorder %s30, 0
    %p119 = por %p117, %p118
    %p120 = scmp.ne.s32.totalorder %s108, %s109
    %p121 = scmp.eq.s32.totalorder %s31, 1
    %p122 = por %p120, %p121
    %p124 = scmp.ne.s32.totalorder %s109, %s123
    %p125 = scmp.eq.s32.totalorder %s31, 0
    %p126 = por %p124, %p125
    %s128 = sadd.s32 %s127, 1
    %p131 = scmp.eq.s32.totalorder %s25, 1
    %p132 = scmp.ne.s32.totalorder %s127, %s129
    %p133 = scmp.eq.s32.totalorder %s25, 0
    %p134 = por %p132, %p133
    %p135 = scmp.ne.s32.totalorder %s127, %s129
    %p136 = scmp.eq.s32.totalorder %s30, 1
    %p137 = por %p135, %p136
    %p138 = scmp.ne.s32.totalorder %s129, %s130
    %p139 = scmp.eq.s32.totalorder %s30, 0
    %p140 = por %p138, %p139
    %p141 = scmp.ne.s32.totalorder %s129, %s130
    %p142 = scmp.eq.s32.totalorder %s31, 1
    %p143 = por %p141, %p142
    %p145 = scmp.ne.s32.totalorder %s130, %s144
    %p146 = scmp.eq.s32.totalorder %s31, 0
    %p147 = por %p145, %p146
    %s149 = sadd.s32 %s148, 1
    %p152 = scmp.eq.s32.totalorder %s25, 1
    %p153 = scmp.ne.s32.totalorder %s148, %s150
    %p154 = scmp.eq.s32.totalorder %s25, 0
    %p155 = por %p153, %p154
    %p156 = scmp.ne.s32.totalorder %s148, %s150
    %p157 = scmp.eq.s32.totalorder %s30, 1
    %p158 = por %p156, %p157
    %p159 = scmp.ne.s32.totalorder %s150, %s151
    %p160 = scmp.eq.s32.totalorder %s30, 0
    %p161 = por %p159, %p160
    %p162 = scmp.ne.s32.totalorder %s150, %s151
    %p163 = scmp.eq.s32.totalorder %s31, 1
    %p164 = por %p162, %p163
    %p166 = scmp.ne.s32.totalorder %s151, %s165
    %p167 = scmp.eq.s32.totalorder %s31, 0
    %p168 = por %p166, %p167
    %s170 = sadd.s32 %s169, 1
    %p173 = scmp.eq.s32.totalorder %s25, 1
    %p174 = scmp.ne.s32.totalorder %s169, %s171
    %p175 = scmp.eq.s32.totalorder %s25, 0
    %p176 = por %p174, %p175
    %p177 = scmp.ne.s32.totalorder %s169, %s171
    %p178 = scmp.eq.s32.totalorder %s30, 1
    %p179 = por %p177, %p178
    %p180 = scmp.ne.s32.totalorder %s171, %s172
    %p181 = scmp.eq.s32.totalorder %s30, 0
    %p182 = por %p180, %p181
    %p183 = scmp.ne.s32.totalorder %s171, %s172
    %p184 = scmp.eq.s32.totalorder %s31, 1
    %p185 = por %p183, %p184
    %p187 = scmp.ne.s32.totalorder %s172, %s186
    %p188 = scmp.eq.s32.totalorder %s31, 0
    %p189 = por %p187, %p188
    %s191 = sadd.s32 %s190, 1
    %p194 = scmp.eq.s32.totalorder %s25, 1
    %p195 = scmp.ne.s32.totalorder %s190, %s192
    %p196 = scmp.eq.s32.totalorder %s25, 0
    %p197 = por %p195, %p196
    %p198 = scmp.ne.s32.totalorder %s190, %s192
    %p199 = scmp.eq.s32.totalorder %s30, 1
    %p200 = por %p198, %p199
    %p201 = scmp.ne.s32.totalorder %s192, %s193
    %p202 = scmp.eq.s32.totalorder %s30, 0
    %p203 = por %p201, %p202
    %p204 = scmp.ne.s32.totalorder %s192, %s193
    %p205 = scmp.eq.s32.totalorder %s31, 1
    %p206 = por %p204, %p205
    %p208 = scmp.ne.s32.totalorder %s193, %s207
    %p209 = scmp.eq.s32.totalorder %s31, 0
    %p210 = por %p208, %p209
    %s212 = sadd.s32 %s211, 1
    %p215 = scmp.eq.s32.totalorder %s25, 1
    %p216 = scmp.ne.s32.totalorder %s211, %s213
    %p217 = scmp.eq.s32.totalorder %s25, 0
    %p218 = por %p216, %p217
    %p219 = scmp.ne.s32.totalorder %s211, %s213
    %p220 = scmp.eq.s32.totalorder %s30, 1
    %p221 = por %p219, %p220
    %p222 = scmp.ne.s32.totalorder %s213, %s214
    %p223 = scmp.eq.s32.totalorder %s30, 0
    %p224 = por %p222, %p223
    %p225 = scmp.ne.s32.totalorder %s213, %s214
    %p226 = scmp.eq.s32.totalorder %s31, 1
    %p227 = por %p225, %p226
    %p229 = scmp.ne.s32.totalorder %s214, %s228
    %p230 = scmp.eq.s32.totalorder %s31, 0
    %p231 = por %p229, %p230
    %s233 = sadd.s32 %s232, 1
    %p236 = scmp.eq.s32.totalorder %s25, 1
    %p237 = scmp.ne.s32.totalorder %s232, %s234
    %p238 = scmp.eq.s32.totalorder %s25, 0
    %p239 = por %p237, %p238
    %p240 = scmp.ne.s32.totalorder %s232, %s234
    %p241 = scmp.eq.s32.totalorder %s30, 1
    %p242 = por %p240, %p241
    %p243 = scmp.ne.s32.totalorder %s234, %s235
    %p244 = scmp.eq.s32.totalorder %s30, 0
    %p245 = por %p243, %p244
    %p246 = scmp.ne.s32.totalorder %s234, %s235
    %p247 = scmp.eq.s32.totalorder %s31, 1
    %p248 = por %p246, %p247
    %p250 = scmp.ne.s32.totalorder %s235, %s249
    %p251 = scmp.eq.s32.totalorder %s31, 0
    %p252 = por %p250, %p251
    %s254 = sadd.s32 %s253, 1
    %p257 = scmp.eq.s32.totalorder %s25, 1
    %p258 = scmp.ne.s32.totalorder %s253, %s255
    %p259 = scmp.eq.s32.totalorder %s25, 0
    %p260 = por %p258, %p259
    %p261 = scmp.ne.s32.totalorder %s253, %s255
    %p262 = scmp.eq.s32.totalorder %s30, 1
    %p263 = por %p261, %p262
    %p264 = scmp.ne.s32.totalorder %s255, %s256
    %p265 = scmp.eq.s32.totalorder %s30, 0
    %p266 = por %p264, %p265
    %p267 = scmp.ne.s32.totalorder %s255, %s256
    %p268 = scmp.eq.s32.totalorder %s31, 1
    %p269 = por %p267, %p268
    %p271 = scmp.ne.s32.totalorder %s256, %s270
    %p272 = scmp.eq.s32.totalorder %s31, 0
    %p273 = por %p271, %p272
    %s275 = sadd.s32 %s274, 1
    %p278 = scmp.eq.s32.totalorder %s25, 1
    %p279 = scmp.ne.s32.totalorder %s274, %s276
    %p280 = scmp.eq.s32.totalorder %s25, 0
    %p281 = por %p279, %p280
    %p282 = scmp.ne.s32.totalorder %s274, %s276
    %p283 = scmp.eq.s32.totalorder %s30, 1
    %p284 = por %p282, %p283
    %p285 = scmp.ne.s32.totalorder %s276, %s277
    %p286 = scmp.eq.s32.totalorder %s30, 0
    %p287 = por %p285, %p286
    %p288 = scmp.ne.s32.totalorder %s276, %s277
    %p289 = scmp.eq.s32.totalorder %s31, 1
    %p290 = por %p288, %p289
    %p292 = scmp.ne.s32.totalorder %s277, %s291
    %p293 = scmp.eq.s32.totalorder %s31, 0
    %p294 = por %p292, %p293
    %s296 = sadd.s32 %s295, 1
    %p299 = scmp.eq.s32.totalorder %s25, 1
    %p300 = scmp.ne.s32.totalorder %s295, %s297
    %p301 = scmp.eq.s32.totalorder %s25, 0
    %p302 = por %p300, %p301
    %p303 = scmp.ne.s32.totalorder %s295, %s297
    %p304 = scmp.eq.s32.totalorder %s30, 1
    %p305 = por %p303, %p304
    %p306 = scmp.ne.s32.totalorder %s297, %s298
    %p307 = scmp.eq.s32.totalorder %s30, 0
    %p308 = por %p306, %p307
    %p309 = scmp.ne.s32.totalorder %s297, %s298
    %p310 = scmp.eq.s32.totalorder %s31, 1
    %p311 = por %p309, %p310
    %p313 = scmp.ne.s32.totalorder %s298, %s312
    %p314 = scmp.eq.s32.totalorder %s31, 0
    %p315 = por %p313, %p314
    %s317 = sadd.s32 %s316, 1
    %p320 = scmp.eq.s32.totalorder %s25, 1
    %p321 = scmp.ne.s32.totalorder %s316, %s318
    %p322 = scmp.eq.s32.totalorder %s25, 0
    %p323 = por %p321, %p322
    %p324 = scmp.ne.s32.totalorder %s316, %s318
    %p325 = scmp.eq.s32.totalorder %s30, 1
    %p326 = por %p324, %p325
    %p327 = scmp.ne.s32.totalorder %s318, %s319
    %p328 = scmp.eq.s32.totalorder %s30, 0
    %p329 = por %p327, %p328
    %p330 = scmp.ne.s32.totalorder %s318, %s319
    %p331 = scmp.eq.s32.totalorder %s31, 1
    %p332 = por %p330, %p331
    %p334 = scmp.ne.s32.totalorder %s319, %s333
    %p335 = scmp.eq.s32.totalorder %s31, 0
    %p336 = por %p334, %p335
    %s338 = sadd.s32 %s337, 1
    %p341 = scmp.eq.s32.totalorder %s25, 1
    %p342 = scmp.ne.s32.totalorder %s337, %s339
    %p343 = scmp.eq.s32.totalorder %s25, 0
    %p344 = por %p342, %p343
    %p345 = scmp.ne.s32.totalorder %s337, %s339
    %p346 = scmp.eq.s32.totalorder %s30, 1
    %p347 = por %p345, %p346
    %p348 = scmp.ne.s32.totalorder %s339, %s340
    %p349 = scmp.eq.s32.totalorder %s30, 0
    %p350 = por %p348, %p349
    %p351 = scmp.ne.s32.totalorder %s339, %s340
    %p352 = scmp.eq.s32.totalorder %s31, 1
    %p353 = por %p351, %p352
    %p355 = scmp.ne.s32.totalorder %s340, %s354
    %p356 = scmp.eq.s32.totalorder %s31, 0
    %p357 = por %p355, %p356
    %s359 = sadd.s32 %s358, 1
    %p362 = scmp.eq.s32.totalorder %s25, 1
    %p363 = scmp.ne.s32.totalorder %s358, %s360
    %p364 = scmp.eq.s32.totalorder %s25, 0
    %p365 = por %p363, %p364
    %p366 = scmp.ne.s32.totalorder %s358, %s360
    %p367 = scmp.eq.s32.totalorder %s30, 1
    %p368 = por %p366, %p367
    %p369 = scmp.ne.s32.totalorder %s360, %s361
    %p370 = scmp.eq.s32.totalorder %s30, 0
    %p371 = por %p369, %p370
    %p372 = scmp.ne.s32.totalorder %s360, %s361
    %p373 = scmp.eq.s32.totalorder %s31, 1
    %p374 = por %p372, %p373
    %p376 = scmp.ne.s32.totalorder %s361, %s375
    %p377 = scmp.eq.s32.totalorder %s31, 0
    %p378 = por %p376, %p377
    %s380 = sadd.s32 %s379, 1
    %p383 = scmp.eq.s32.totalorder %s25, 1
    %p384 = scmp.ne.s32.totalorder %s379, %s381
    %p385 = scmp.eq.s32.totalorder %s25, 0
    %p386 = por %p384, %p385
    %p387 = scmp.ne.s32.totalorder %s379, %s381
    %p388 = scmp.eq.s32.totalorder %s30, 1
    %p389 = por %p387, %p388
    %p390 = scmp.ne.s32.totalorder %s381, %s382
    %p391 = scmp.eq.s32.totalorder %s30, 0
    %p392 = por %p390, %p391
    %p393 = scmp.ne.s32.totalorder %s381, %s382
    %p394 = scmp.eq.s32.totalorder %s31, 1
    %p395 = por %p393, %p394
    %p397 = scmp.ne.s32.totalorder %s382, %s396
    %p398 = scmp.eq.s32.totalorder %s31, 0
    %p399 = por %p397, %p398
    %s401 = sadd.s32 %s400, 1
    %p404 = scmp.eq.s32.totalorder %s25, 1
    %p405 = scmp.ne.s32.totalorder %s400, %s402
    %p406 = scmp.eq.s32.totalorder %s25, 0
    %p407 = por %p405, %p406
    %p408 = scmp.ne.s32.totalorder %s400, %s402
    %p409 = scmp.eq.s32.totalorder %s30, 1
    %p410 = por %p408, %p409
    %p411 = scmp.ne.s32.totalorder %s402, %s403
    %p412 = scmp.eq.s32.totalorder %s30, 0
    %p413 = por %p411, %p412
    %p414 = scmp.ne.s32.totalorder %s402, %s403
    %p415 = scmp.eq.s32.totalorder %s31, 1
    %p416 = por %p414, %p415
    %p418 = scmp.ne.s32.totalorder %s403, %s417
    %p419 = scmp.eq.s32.totalorder %s31, 0
    %p420 = por %p418, %p419
    %s422 = sadd.s32 %s421, 1
    %p425 = scmp.eq.s32.totalorder %s25, 1
    %p426 = scmp.ne.s32.totalorder %s421, %s423
    %p427 = scmp.eq.s32.totalorder %s25, 0
    %p428 = por %p426, %p427
    %p429 = scmp.ne.s32.totalorder %s421, %s423
    %p430 = scmp.eq.s32.totalorder %s30, 1
    %p431 = por %p429, %p430
    %p432 = scmp.ne.s32.totalorder %s423, %s424
    %p433 = scmp.eq.s32.totalorder %s30, 0
    %p434 = por %p432, %p433
    %p435 = scmp.ne.s32.totalorder %s423, %s424
    %p436 = scmp.eq.s32.totalorder %s31, 1
    %p437 = por %p435, %p436
    %p439 = scmp.ne.s32.totalorder %s424, %s438
    %p440 = scmp.eq.s32.totalorder %s31, 0
    %p441 = por %p439, %p440
    %s442 = ssub.s32 %s25, %s32
    %p443 = scmp.eq.s32.totalorder %s442, 0
    %s445 = sadd.s32 %s444, 1
    %s446 = scalar_select %p443, %s444, %s445
    %p449 = pneg %p443
    %p450 = scmp.eq.s32.totalorder %s25, 1
    %p451 = por %p449, %p450
    %p452 = scmp.ne.s32.totalorder %s444, %s447
    %p453 = scmp.eq.s32.totalorder %s25, 0
    %p454 = por %p452, %p453
    %p455 = scmp.ne.s32.totalorder %s444, %s447
    %p456 = scmp.eq.s32.totalorder %s30, 1
    %p457 = por %p455, %p456
    %p458 = scmp.ne.s32.totalorder %s447, %s448
    %p459 = scmp.eq.s32.totalorder %s30, 0
    %p460 = por %p458, %p459
    %p461 = scmp.ne.s32.totalorder %s447, %s448
    %p462 = scmp.eq.s32.totalorder %s31, 1
    %p463 = por %p461, %p462
    %p465 = scmp.ne.s32.totalorder %s448, %s464
    %p466 = scmp.eq.s32.totalorder %s31, 0
    %p467 = por %p465, %p466
    %p468 = scmp.le.s32.totalorder 1, %s25
    %p469 = scmp.lt.s32.totalorder %s25, 3
    %p470 = pnand %p468, %p469
    %p471 = pneg %p470
    // Predicated region
    $region9: #{_lambda_.4} parent=5 // pred_check
      _
    $region10: #{_lambda_.4} parent=5 // pred_check_branch
      %473 = sbr.rel (%p470) target = $region12
    $region11: #{_lambda_.4} parent=5 // pred_region
      %s474 = ssub.s32 %s25, 1
      // Predicated region
      $region13: #{_lambda_.4} parent=11 // pred_check
        %p475 = pneg %p98
      $region14: #{_lambda_.4} parent=11 // pred_check_branch
        %477 = sbr.rel (%p475) target = $region16
      $region15: #{_lambda_.4} parent=11 // pred_region
        _
      $region16: #{_lambda_.4} parent=11 // pred_fallthru
        _
      // Predicated region
      $region17: #{_lambda_.4} parent=11 // pred_check
        %p478 = pneg %p119
      $region18: #{_lambda_.4} parent=11 // pred_check_branch
        %480 = sbr.rel (%p478) target = $region20
      $region19: #{_lambda_.4} parent=11 // pred_region
        _
      $region20: #{_lambda_.4} parent=11 // pred_fallthru
        _
      // Predicated region
      $region21: #{_lambda_.4} parent=11 // pred_check
        %p481 = pneg %p140
      $region22: #{_lambda_.4} parent=11 // pred_check_branch
        %483 = sbr.rel (%p481) target = $region24
      $region23: #{_lambda_.4} parent=11 // pred_region
        _
      $region24: #{_lambda_.4} parent=11 // pred_fallthru
        _
      // Predicated region
      $region25: #{_lambda_.4} parent=11 // pred_check
        %p484 = pneg %p161
      $region26: #{_lambda_.4} parent=11 // pred_check_branch
        %486 = sbr.rel (%p484) target = $region28
      $region27: #{_lambda_.4} parent=11 // pred_region
        _
      $region28: #{_lambda_.4} parent=11 // pred_fallthru
        _
      // Predicated region
      $region29: #{_lambda_.4} parent=11 // pred_check
        %p487 = pneg %p182
      $region30: #{_lambda_.4} parent=11 // pred_check_branch
        %489 = sbr.rel (%p487) target = $region32
      $region31: #{_lambda_.4} parent=11 // pred_region
        _
      $region32: #{_lambda_.4} parent=11 // pred_fallthru
        _
      // Predicated region
      $region33: #{_lambda_.4} parent=11 // pred_check
        %p490 = pneg %p203
      $region34: #{_lambda_.4} parent=11 // pred_check_branch
        %492 = sbr.rel (%p490) target = $region36
      $region35: #{_lambda_.4} parent=11 // pred_region
        _
      $region36: #{_lambda_.4} parent=11 // pred_fallthru
        _
      // Predicated region
      $region37: #{_lambda_.4} parent=11 // pred_check
        %p493 = pneg %p224
      $region38: #{_lambda_.4} parent=11 // pred_check_branch
        %495 = sbr.rel (%p493) target = $region40
      $region39: #{_lambda_.4} parent=11 // pred_region
        _
      $region40: #{_lambda_.4} parent=11 // pred_fallthru
        _
      // Predicated region
      $region41: #{_lambda_.4} parent=11 // pred_check
        %p496 = pneg %p245
      $region42: #{_lambda_.4} parent=11 // pred_check_branch
        %498 = sbr.rel (%p496) target = $region44
      $region43: #{_lambda_.4} parent=11 // pred_region
        _
      $region44: #{_lambda_.4} parent=11 // pred_fallthru
        _
      // Predicated region
      $region45: #{_lambda_.4} parent=11 // pred_check
        %p499 = pneg %p266
      $region46: #{_lambda_.4} parent=11 // pred_check_branch
        %501 = sbr.rel (%p499) target = $region48
      $region47: #{_lambda_.4} parent=11 // pred_region
        _
      $region48: #{_lambda_.4} parent=11 // pred_fallthru
        _
      // Predicated region
      $region49: #{_lambda_.4} parent=11 // pred_check
        %p502 = pneg %p287
      $region50: #{_lambda_.4} parent=11 // pred_check_branch
        %504 = sbr.rel (%p502) target = $region52
      $region51: #{_lambda_.4} parent=11 // pred_region
        _
      $region52: #{_lambda_.4} parent=11 // pred_fallthru
        _
      // Predicated region
      $region53: #{_lambda_.4} parent=11 // pred_check
        %p505 = pneg %p308
      $region54: #{_lambda_.4} parent=11 // pred_check_branch
        %507 = sbr.rel (%p505) target = $region56
      $region55: #{_lambda_.4} parent=11 // pred_region
        _
      $region56: #{_lambda_.4} parent=11 // pred_fallthru
        _
      // Predicated region
      $region57: #{_lambda_.4} parent=11 // pred_check
        %p508 = pneg %p329
      $region58: #{_lambda_.4} parent=11 // pred_check_branch
        %510 = sbr.rel (%p508) target = $region60
      $region59: #{_lambda_.4} parent=11 // pred_region
        _
      $region60: #{_lambda_.4} parent=11 // pred_fallthru
        _
      // Predicated region
      $region61: #{_lambda_.4} parent=11 // pred_check
        %p511 = pneg %p350
      $region62: #{_lambda_.4} parent=11 // pred_check_branch
        %513 = sbr.rel (%p511) target = $region64
      $region63: #{_lambda_.4} parent=11 // pred_region
        _
      $region64: #{_lambda_.4} parent=11 // pred_fallthru
        _
      // Predicated region
      $region65: #{_lambda_.4} parent=11 // pred_check
        %p514 = pneg %p371
      $region66: #{_lambda_.4} parent=11 // pred_check_branch
        %516 = sbr.rel (%p514) target = $region68
      $region67: #{_lambda_.4} parent=11 // pred_region
        _
      $region68: #{_lambda_.4} parent=11 // pred_fallthru
        _
      // Predicated region
      $region69: #{_lambda_.4} parent=11 // pred_check
        %p517 = pneg %p392
      $region70: #{_lambda_.4} parent=11 // pred_check_branch
        %519 = sbr.rel (%p517) target = $region72
      $region71: #{_lambda_.4} parent=11 // pred_region
        _
      $region72: #{_lambda_.4} parent=11 // pred_fallthru
        _
      // Predicated region
      $region73: #{_lambda_.4} parent=11 // pred_check
        %p520 = pneg %p413
      $region74: #{_lambda_.4} parent=11 // pred_check_branch
        %522 = sbr.rel (%p520) target = $region76
      $region75: #{_lambda_.4} parent=11 // pred_region
        _
      $region76: #{_lambda_.4} parent=11 // pred_fallthru
        _
      // Predicated region
      $region77: #{_lambda_.4} parent=11 // pred_check
        %p523 = pneg %p434
      $region78: #{_lambda_.4} parent=11 // pred_check_branch
        %525 = sbr.rel (%p523) target = $region80
      $region79: #{_lambda_.4} parent=11 // pred_region
        _
      $region80: #{_lambda_.4} parent=11 // pred_fallthru
        _
    $region12: #{_lambda_.4} parent=5 // pred_fallthru
      _
    %p526 = scmp.lt.s32.totalorder %s25, 2
    // Predicated region
    $region81: #{_lambda_.4} parent=5 // pred_check
      %p527 = pneg %p526
    $region82: #{_lambda_.4} parent=5 // pred_check_branch
      %529 = sbr.rel (%p527) target = $region84
    $region83: #{_lambda_.4} parent=5 // pred_region
      // Predicated region
      $region85: #{_lambda_.4} parent=83 // pred_check
        %p530 = pneg %p45
      $region86: #{_lambda_.4} parent=83 // pred_check_branch
        %532 = sbr.rel (%p530) target = $region88
      $region87: #{_lambda_.4} parent=83 // pred_region
        %p533 = scmp.lt.s32.totalorder %s25, 1
        %s534 = scalar_select %p533, %s25, 1
        %s535 = smul.addr %s534, 4
        %s536 = smul.addr %s535, 8
        %s537 = scalar_lea.vmem %s0, %s536
      $region88: #{_lambda_.4} parent=83 // pred_fallthru
        _
      // Predicated region
      $region89: #{_lambda_.4} parent=83 // pred_check
        %p538 = pneg %p71
      $region90: #{_lambda_.4} parent=83 // pred_check_branch
        %540 = sbr.rel (%p538) target = $region92
      $region91: #{_lambda_.4} parent=83 // pred_region
        %p541 = scmp.lt.s32.totalorder %s25, 1
        %s542 = scalar_select %p541, %s25, 1
        %s543 = smul.addr %s542, 4
        %s544 = smul.addr %s543, 8
        %s545 = scalar_lea.vmem %s1, %s544
      $region92: #{_lambda_.4} parent=83 // pred_fallthru
        _
    $region84: #{_lambda_.4} parent=5 // pred_fallthru
      _
    %p546 = scmp.le.s32.totalorder 1, %s25
    %p547 = scmp.lt.s32.totalorder %s25, 3
    %p548 = pnand %p546, %p547
    %p549 = pneg %p548
    // Predicated region
    $region93: #{_lambda_.4} parent=5 // pred_check
      _
    $region94: #{_lambda_.4} parent=5 // pred_check_branch
      %551 = sbr.rel (%p548) target = $region96
    $region95: #{_lambda_.4} parent=5 // pred_region
      %s552 = ssub.s32 %s25, 1
      %p553 = scmp.lt.s32.totalorder %s30, 1
      %s554 = scalar_select %p553, %s30, 1
      %s555 = smul.addr %s554, 4
      %s556 = smul.addr %s555, 8
      %s557 = scalar_lea.vmem %s0, %s556
      %p558 = pneg %p51
      %p559 = pneg %p48
      %p560 = scmp.lt.s32.totalorder %s30, 1
      %s561 = scalar_select %p560, %s30, 1
      %s562 = smul.addr %s561, 4
      %s563 = smul.addr %s562, 8
      %s564 = scalar_lea.vmem %s1, %s563
      %p565 = pneg %p77
      %p566 = pneg %p74
      %p567 = pneg %p98
      %p568 = pneg %p95
      %p569 = pneg %p119
      %p570 = pneg %p116
      %p571 = pneg %p140
      %p572 = pneg %p137
      %p573 = pneg %p161
      %p574 = pneg %p158
      %p575 = pneg %p182
      %p576 = pneg %p179
      %p577 = pneg %p203
      %p578 = pneg %p200
      %p579 = pneg %p224
      %p580 = pneg %p221
      %p581 = pneg %p245
      %p582 = pneg %p242
      %p583 = pneg %p266
      %p584 = pneg %p263
      %p585 = pneg %p287
      %p586 = pneg %p284
      %p587 = pneg %p308
      %p588 = pneg %p305
      %p589 = pneg %p329
      %p590 = pneg %p326
      %p591 = pneg %p350
      %p592 = pneg %p347
      %p593 = pneg %p371
      %p594 = pneg %p368
      %p595 = pneg %p392
      %p596 = pneg %p389
      %p597 = pneg %p413
      %p598 = pneg %p410
      %p599 = pneg %p434
      %p600 = pneg %p431
      %p601 = pneg %p460
      %p602 = pneg %p457
      %p603 = scmp.lt.s32.totalorder %s30, 1
      %s604 = scalar_select %p603, %s30, 1
      %s605 = smul.addr %s604, 4
      %s606 = smul.addr %s605, 8
      %s607 = scalar_lea.vmem %s19, %s606
      %p608 = scmp.lt.s32.totalorder %s30, 1
      %s609 = scalar_select %p608, %s30, 1
      %s610 = smul.addr %s609, 4
      %s611 = smul.addr %s610, 8
      %s612 = scalar_lea.vmem %s0, %s611
      %p613 = scmp.lt.s32.totalorder %s30, 1
      %s614 = scalar_select %p613, %s30, 1
      %s615 = smul.addr %s614, 4
      %s616 = smul.addr %s615, 8
      %s617 = scalar_lea.vmem %s1, %s616
      %p618 = scmp.lt.s32.totalorder %s30, 1
      %s619 = scalar_select %p618, %s30, 1
      %s620 = smul.addr %s619, 4
      %s621 = smul.addr %s620, 8
      %s622 = scalar_lea.vmem %s19, %s621
      %v624 = vld [vmem:[%s612] sm:$0xff]
      %v625 = vld [vmem:[%s612 + $0x8] sm:$0xff]
      %v626 = vld [vmem:[%s612 + $0x10] sm:$0xff]
      %v627 = vld [vmem:[%s612 + $0x18] sm:$0xff]
      %v628 = vpack.c.bf16 %v625, %v624
      %v629 = vpack.c.bf16 %v627, %v626
      %v630 = vld [vmem:[%s2] sm:$0xf]
      %v631 = vld [vmem:[%s2 + $0x4] sm:$0xf]
      %v632 = vld [vmem:[%s2 + $0x8] sm:$0xf]
      %v633 = vld [vmem:[%s2 + $0xc] sm:$0xf]
      %v634 = vld [vmem:[%s4] sm:$0x1]
      %v636 = vlaneseq
      %v637 = vshrl.u32 %v636, 7
      %v638 = vsub.s32 0, %v637
      %v639 = vrot.slane %v634, %v638
      %v645 = vunpack.c.l.b16 %v630
      %v646 = vunpack.c.l.b16 %v631
      %v647 = vunpack.c.l.b16 %v632
      %v648 = vunpack.c.l.b16 %v633
      %v649 = vpack.c.b16 %v646, %v645
      %v650 = vpack.c.b16 %v648, %v647
      %vm653 = vcmask 261120
      %v655 = vsel %vm653, %v628, 0
      %v658 = vsel %vm653, %v629, 0
      %660 = vmatprep.subr.bf16.mxu0 0
      %661 = vmatpush1.bf16.msra.mxu0 0
      %662 = vmatprep.subr.bf16.mxu0 0
      %663 = vmatpush1.bf16.msra.mxu0 0
      %664 = vmatprep.subr.bf16.mxu0 0
      %665 = vmatpush1.bf16.msra.mxu0 0
      %666 = vmatprep.subr.bf16.mxu0 0
      %667 = vmatpush1.bf16.msra.mxu0 0
      %668 = vmatprep.subr.bf16.mxu0 0
      %669 = vmatpush1.bf16.msra.mxu0 0
      %670 = vmatprep.subr.bf16.mxu0 0
      %671 = vmatpush1.bf16.msra.mxu0 0
      %672 = vmatprep.subr.bf16.mxu0 0
      %673 = vmatpush1.bf16.msra.mxu0 %v650
      %674 = vmatprep.subr.bf16.mxu0 0
      %675 = vmatpush1.bf16.msra.mxu0 %v649
      %676 = vmatprep.subr.bf16.mxu0 0
      %677 = vmatpush2.bf16.msra.mxu0 0
      %678 = vmatprep.subr.bf16.mxu0 0
      %679 = vmatpush2.bf16.msra.mxu0 0
      %680 = vmatprep.subr.bf16.mxu0 0
      %681 = vmatpush2.bf16.msra.mxu0 0
      %682 = vmatprep.subr.bf16.mxu0 0
      %683 = vmatpush2.bf16.msra.mxu0 0
      %684 = vmatprep.subr.bf16.mxu0 0
      %685 = vmatpush2.bf16.msra.mxu0 0
      %686 = vmatprep.subr.bf16.mxu0 0
      %687 = vmatpush2.bf16.msra.mxu0 0
      %688 = vmatprep.subr.bf16.mxu0 0
      %689 = vmatpush2.bf16.msra.mxu0 0
      %690 = vmatprep.subr.bf16.mxu0 0
      %691 = vmatpush2.bf16.msra.mxu0 0
      %692 = vmatprep.mubr.bf16.mxu0 0
      %693 = vmatmul.mubr.bf16.gmra.mxu0 %v655
      %v694 = vpop.f32.mrf.mxu0
      %v695 = vadd.f32 %v639, %v694
      %v696 = vpop.f32.mrf.mxu0
      %v697 = vpop.f32.mrf.mxu0
      %v698 = vadd.f32 %v639, %v697
      %v699 = vpop.f32.mrf.mxu0
      %700 = vmatprep.mubr.bf16.mxu0 0
      %701 = vmatmul.mubr.bf16.gmra.mxu0 %v658
      %v702 = vpop.f32.mrf.mxu0
      %v703 = vadd.f32 %v639, %v702
      %v704 = vpop.f32.mrf.mxu0
      %v705 = vpop.f32.mrf.mxu0
      %v706 = vadd.f32 %v639, %v705
      %v707 = vpop.f32.mrf.mxu0
      %708 = vdwg.mxu0
      %v709 = vld [vmem:[%s3] sm:$0xf]
      %v710 = vld [vmem:[%s3 + $0x4] sm:$0xf]
      %v711 = vld [vmem:[%s3 + $0x8] sm:$0xf]
      %v712 = vld [vmem:[%s3 + $0xc] sm:$0xf]
      %v717 = vunpack.c.l.b16 %v709
      %v718 = vunpack.c.l.b16 %v710
      %v719 = vunpack.c.l.b16 %v711
      %v720 = vunpack.c.l.b16 %v712
      %v721 = vpack.c.b16 %v718, %v717
      %v722 = vpack.c.b16 %v720, %v719
      %725 = vmatprep.subr.bf16.mxu0 0
      %726 = vmatpush1.bf16.msra.mxu0 0
      %727 = vmatprep.subr.bf16.mxu0 0
      %728 = vmatpush1.bf16.msra.mxu0 0
      %729 = vmatprep.subr.bf16.mxu0 0
      %730 = vmatpush1.bf16.msra.mxu0 0
      %731 = vmatprep.subr.bf16.mxu0 0
      %732 = vmatpush1.bf16.msra.mxu0 0
      %733 = vmatprep.subr.bf16.mxu0 0
      %734 = vmatpush1.bf16.msra.mxu0 0
      %735 = vmatprep.subr.bf16.mxu0 0
      %736 = vmatpush1.bf16.msra.mxu0 0
      %737 = vmatprep.subr.bf16.mxu0 0
      %738 = vmatpush1.bf16.msra.mxu0 %v722
      %739 = vmatprep.subr.bf16.mxu0 0
      %740 = vmatpush1.bf16.msra.mxu0 %v721
      %741 = vmatprep.subr.bf16.mxu0 0
      %742 = vmatpush2.bf16.msra.mxu0 0
      %743 = vmatprep.subr.bf16.mxu0 0
      %744 = vmatpush2.bf16.msra.mxu0 0
      %745 = vmatprep.subr.bf16.mxu0 0
      %746 = vmatpush2.bf16.msra.mxu0 0
      %747 = vmatprep.subr.bf16.mxu0 0
      %748 = vmatpush2.bf16.msra.mxu0 0
      %749 = vmatprep.subr.bf16.mxu0 0
      %750 = vmatpush2.bf16.msra.mxu0 0
      %751 = vmatprep.subr.bf16.mxu0 0
      %752 = vmatpush2.bf16.msra.mxu0 0
      %753 = vmatprep.subr.bf16.mxu0 0
      %754 = vmatpush2.bf16.msra.mxu0 0
      %755 = vmatprep.subr.bf16.mxu0 0
      %756 = vmatpush2.bf16.msra.mxu0 0
      %757 = vmatprep.mubr.bf16.mxu0 0
      %758 = vmatmul.mubr.bf16.gmra.mxu0 %v655
      %v759 = vpop.f32.mrf.mxu0
      %v760 = vadd.f32 0.0, %v759
      %v761 = vpop.f32.mrf.mxu0
      %v762 = vpop.f32.mrf.mxu0
      %v763 = vadd.f32 0.0, %v762
      %v764 = vpop.f32.mrf.mxu0
      %765 = vmatprep.mubr.bf16.mxu0 0
      %766 = vmatmul.mubr.bf16.gmra.mxu0 %v658
      %v767 = vpop.f32.mrf.mxu0
      %v768 = vadd.f32 0.0, %v767
      %v769 = vpop.f32.mrf.mxu0
      %v770 = vpop.f32.mrf.mxu0
      %v771 = vadd.f32 0.0, %v770
      %v772 = vpop.f32.mrf.mxu0
      %773 = vdwg.mxu0
      %v774 = vadd.f32 %v695, %v763
      %v775 = vadd.f32 %v698, %v768
      %v776 = vadd.f32 %v703, %v771
      %v777 = vadd.f32 %v706, %v760
      %v778 = vadd.f32 %v695, %v768
      %v779 = vadd.f32 %v698, %v771
      %v780 = vadd.f32 %v703, %v760
      %v781 = vadd.f32 %v706, %v763
      %v782 = vadd.f32 %v695, %v771
      %v783 = vadd.f32 %v698, %v760
      %v784 = vadd.f32 %v703, %v763
      %v785 = vadd.f32 %v706, %v768
      %v786 = vmax.f32 %v774, 0.0
      %v787 = vmax.f32 %v775, 0.0
      %v788 = vmax.f32 %v776, 0.0
      %v789 = vmax.f32 %v777, 0.0
      %v790 = vmax.f32 %v778, 0.0
      %v791 = vmax.f32 %v779, 0.0
      %v792 = vmax.f32 %v780, 0.0
      %v793 = vmax.f32 %v781, 0.0
      %v794 = vmax.f32 %v782, 0.0
      %v795 = vmax.f32 %v783, 0.0
      %v796 = vmax.f32 %v784, 0.0
      %v797 = vmax.f32 %v785, 0.0
      %v798 = vpack.c.bf16 %v787, %v786
      %v799 = vpack.c.bf16 %v789, %v788
      %v800 = vpack.c.bf16 %v791, %v790
      %v801 = vpack.c.bf16 %v793, %v792
      %v802 = vpack.c.bf16 %v795, %v794
      %v803 = vpack.c.bf16 %v797, %v796
      %v804 = vld [vmem:[%s5] sm:$0xf]
      %v805 = vld [vmem:[%s5 + $0x4] sm:$0xf]
      %v806 = vld [vmem:[%s5 + $0x8] sm:$0xf]
      %v807 = vld [vmem:[%s5 + $0xc] sm:$0xf]
      %v808 = vld [vmem:[%s5 + $0x10] sm:$0xf]
      %v809 = vld [vmem:[%s5 + $0x14] sm:$0xf]
      %v810 = vld [vmem:[%s5 + $0x18] sm:$0xf]
      %v811 = vld [vmem:[%s5 + $0x1c] sm:$0xf]
      %v812 = vld [vmem:[%s5 + $0x20] sm:$0xf]
      %v813 = vld [vmem:[%s5 + $0x24] sm:$0xf]
      %v814 = vld [vmem:[%s5 + $0x28] sm:$0xf]
      %v815 = vld [vmem:[%s5 + $0x2c] sm:$0xf]
      %v816 = vld [vmem:[%s5 + $0x30] sm:$0xf]
      %v817 = vld [vmem:[%s5 + $0x34] sm:$0xf]
      %v818 = vld [vmem:[%s5 + $0x38] sm:$0xf]
      %v819 = vld [vmem:[%s5 + $0x3c] sm:$0xf]
      %v820 = vld [vmem:[%s6] sm:$0x1]
      %v822 = vlaneseq
      %v823 = vshrl.u32 %v822, 7
      %v824 = vsub.s32 0, %v823
      %v825 = vrot.slane %v820, %v824
      %v843 = vunpack.c.l.b16 %v804
      %v844 = vunpack.c.l.b16 %v805
      %v845 = vunpack.c.l.b16 %v806
      %v846 = vunpack.c.l.b16 %v807
      %v847 = vunpack.c.l.b16 %v808
      %v848 = vunpack.c.l.b16 %v809
      %v849 = vunpack.c.l.b16 %v810
      %v850 = vunpack.c.l.b16 %v811
      %v851 = vunpack.c.l.b16 %v812
      %v852 = vunpack.c.l.b16 %v813
      %v853 = vunpack.c.l.b16 %v814
      %v854 = vunpack.c.l.b16 %v815
      %v855 = vunpack.c.l.b16 %v816
      %v856 = vunpack.c.l.b16 %v817
      %v857 = vunpack.c.l.b16 %v818
      %v858 = vunpack.c.l.b16 %v819
      %v859 = vpack.c.b16 %v844, %v843
      %v860 = vpack.c.b16 %v846, %v845
      %v861 = vpack.c.b16 %v848, %v847
      %v862 = vpack.c.b16 %v850, %v849
      %v863 = vpack.c.b16 %v852, %v851
      %v864 = vpack.c.b16 %v854, %v853
      %v865 = vpack.c.b16 %v856, %v855
      %v866 = vpack.c.b16 %v858, %v857
      %875 = vmatprep.subr.bf16.mxu0 0
      %876 = vmatpush1.bf16.msra.mxu0 %v866
      %877 = vmatprep.subr.bf16.mxu0 0
      %878 = vmatpush1.bf16.msra.mxu0 %v865
      %879 = vmatprep.subr.bf16.mxu0 0
      %880 = vmatpush1.bf16.msra.mxu0 %v864
      %881 = vmatprep.subr.bf16.mxu0 0
      %882 = vmatpush1.bf16.msra.mxu0 %v863
      %883 = vmatprep.subr.bf16.mxu0 0
      %884 = vmatpush1.bf16.msra.mxu0 %v862
      %885 = vmatprep.subr.bf16.mxu0 0
      %886 = vmatpush1.bf16.msra.mxu0 %v861
      %887 = vmatprep.subr.bf16.mxu0 0
      %888 = vmatpush1.bf16.msra.mxu0 %v860
      %889 = vmatprep.subr.bf16.mxu0 0
      %890 = vmatpush1.bf16.msra.mxu0 %v859
      %891 = vmatprep.subr.bf16.mxu0 0
      %892 = vmatpush2.bf16.msra.mxu0 0
      %893 = vmatprep.subr.bf16.mxu0 0
      %894 = vmatpush2.bf16.msra.mxu0 0
      %895 = vmatprep.subr.bf16.mxu0 0
      %896 = vmatpush2.bf16.msra.mxu0 0
      %897 = vmatprep.subr.bf16.mxu0 0
      %898 = vmatpush2.bf16.msra.mxu0 0
      %899 = vmatprep.subr.bf16.mxu0 0
      %900 = vmatpush2.bf16.msra.mxu0 0
      %901 = vmatprep.subr.bf16.mxu0 0
      %902 = vmatpush2.bf16.msra.mxu0 0
      %903 = vmatprep.subr.bf16.mxu0 0
      %904 = vmatpush2.bf16.msra.mxu0 0
      %905 = vmatprep.subr.bf16.mxu0 0
      %906 = vmatpush2.bf16.msra.mxu0 0
      %907 = vmatprep.mubr.bf16.mxu0 0
      %908 = vmatmul.mubr.bf16.gmra.mxu0 %v798
      %v909 = vpop.f32.mrf.mxu0
      %v910 = vadd.f32 %v825, %v909
      %v911 = vpop.f32.mrf.mxu0
      %v912 = vpop.f32.mrf.mxu0
      %v913 = vadd.f32 %v825, %v912
      %v914 = vpop.f32.mrf.mxu0
      %915 = vmatprep.mubr.bf16.mxu0 0
      %916 = vmatmul.mubr.bf16.gmra.mxu0 %v799
      %v917 = vpop.f32.mrf.mxu0
      %v918 = vadd.f32 %v825, %v917
      %v919 = vpop.f32.mrf.mxu0
      %v920 = vpop.f32.mrf.mxu0
      %v921 = vadd.f32 %v825, %v920
      %v922 = vpop.f32.mrf.mxu0
      %923 = vmatprep.mubr.bf16.mxu0 0
      %924 = vmatmul.mubr.bf16.gmra.mxu0 %v800
      %v925 = vpop.f32.mrf.mxu0
      %v926 = vadd.f32 %v825, %v925
      %v927 = vpop.f32.mrf.mxu0
      %v928 = vpop.f32.mrf.mxu0
      %v929 = vadd.f32 %v825, %v928
      %v930 = vpop.f32.mrf.mxu0
      %931 = vmatprep.mubr.bf16.mxu0 0
      %932 = vmatmul.mubr.bf16.gmra.mxu0 %v801
      %v933 = vpop.f32.mrf.mxu0
      %v934 = vadd.f32 %v825, %v933
      %v935 = vpop.f32.mrf.mxu0
      %v936 = vpop.f32.mrf.mxu0
      %v937 = vadd.f32 %v825, %v936
      %v938 = vpop.f32.mrf.mxu0
      %939 = vmatprep.mubr.bf16.mxu0 0
      %940 = vmatmul.mubr.bf16.gmra.mxu0 %v802
      %v941 = vpop.f32.mrf.mxu0
      %v942 = vadd.f32 %v825, %v941
      %v943 = vpop.f32.mrf.mxu0
      %v944 = vpop.f32.mrf.mxu0
      %v945 = vadd.f32 %v825, %v944
      %v946 = vpop.f32.mrf.mxu0
      %947 = vmatprep.mubr.bf16.mxu0 0
      %948 = vmatmul.mubr.bf16.gmra.mxu0 %v803
      %v949 = vpop.f32.mrf.mxu0
      %v950 = vadd.f32 %v825, %v949
      %v951 = vpop.f32.mrf.mxu0
      %v952 = vpop.f32.mrf.mxu0
      %v953 = vadd.f32 %v825, %v952
      %v954 = vpop.f32.mrf.mxu0
      %955 = vdwg.mxu0
      %v956 = vld [vmem:[%s7] sm:$0x1]
      %v957 = vld [vmem:[%s8] sm:$0x1]
      %v958 = vlaneseq
      %v959 = vand.u32 %v958, 127
      %vm960 = vcmp.lt.s32.totalorder %v959, 32
      %v961 = vsel %vm960, 1, 0
      %v962 = vcvt.s32.f32 %v961
      %963 = vadd.xlane.f32.xlu0 %v910
      %v964 = vpop.xlane.xlu0 %963
      %965 = vadd.xlane.f32.xlu0 %v913
      %v966 = vpop.xlane.xlu0 %965
      %967 = vadd.xlane.f32.xlu0 %v918
      %v968 = vpop.xlane.xlu0 %967
      %969 = vadd.xlane.f32.xlu0 %v921
      %v970 = vpop.xlane.xlu0 %969
      %971 = vadd.xlane.f32.xlu0 %v926
      %v972 = vpop.xlane.xlu0 %971
      %973 = vadd.xlane.f32.xlu0 %v929
      %v974 = vpop.xlane.xlu0 %973
      %975 = vadd.xlane.f32.xlu0 %v934
      %v976 = vpop.xlane.xlu0 %975
      %977 = vadd.xlane.f32.xlu0 %v937
      %v978 = vpop.xlane.xlu0 %977
      %979 = vadd.xlane.f32.xlu0 %v942
      %v980 = vpop.xlane.xlu0 %979
      %981 = vadd.xlane.f32.xlu0 %v945
      %v982 = vpop.xlane.xlu0 %981
      %983 = vadd.xlane.f32.xlu0 %v950
      %v984 = vpop.xlane.xlu0 %983
      %985 = vadd.xlane.f32.xlu0 %v953
      %v986 = vpop.xlane.xlu0 %985
      %v987 = vmul.f32 %v964, 0.03125
      %v988 = vmul.f32 %v966, 0.03125
      %v989 = vmul.f32 %v968, 0.03125
      %v990 = vmul.f32 %v970, 0.03125
      %v991 = vmul.f32 %v972, 0.03125
      %v992 = vmul.f32 %v974, 0.03125
      %v993 = vmul.f32 %v976, 0.03125
      %v994 = vmul.f32 %v978, 0.03125
      %v995 = vmul.f32 %v980, 0.03125
      %v996 = vmul.f32 %v982, 0.03125
      %v997 = vmul.f32 %v984, 0.03125
      %v998 = vmul.f32 %v986, 0.03125
      %v999 = vsub.f32 %v910, %v987
      %v1000 = vsub.f32 %v913, %v988
      %v1001 = vsub.f32 %v918, %v989
      %v1002 = vsub.f32 %v921, %v990
      %v1003 = vsub.f32 %v926, %v991
      %v1004 = vsub.f32 %v929, %v992
      %v1005 = vsub.f32 %v934, %v993
      %v1006 = vsub.f32 %v937, %v994
      %v1007 = vsub.f32 %v942, %v995
      %v1008 = vsub.f32 %v945, %v996
      %v1009 = vsub.f32 %v950, %v997
      %v1010 = vsub.f32 %v953, %v998
      %v1011 = vmul.f32 %v999, %v962
      %v1012 = vmul.f32 %v1000, %v962
      %v1013 = vmul.f32 %v1001, %v962
      %v1014 = vmul.f32 %v1002, %v962
      %v1015 = vmul.f32 %v1003, %v962
      %v1016 = vmul.f32 %v1004, %v962
      %v1017 = vmul.f32 %v1005, %v962
      %v1018 = vmul.f32 %v1006, %v962
      %v1019 = vmul.f32 %v1007, %v962
      %v1020 = vmul.f32 %v1008, %v962
      %v1021 = vmul.f32 %v1009, %v962
      %v1022 = vmul.f32 %v1010, %v962
      %v1023 = vmul.f32 %v1011, %v1011
      %v1024 = vmul.f32 %v1012, %v1012
      %v1025 = vmul.f32 %v1013, %v1013
      %v1026 = vmul.f32 %v1014, %v1014
      %v1027 = vmul.f32 %v1015, %v1015
      %v1028 = vmul.f32 %v1016, %v1016
      %v1029 = vmul.f32 %v1017, %v1017
      %v1030 = vmul.f32 %v1018, %v1018
      %v1031 = vmul.f32 %v1019, %v1019
      %v1032 = vmul.f32 %v1020, %v1020
      %v1033 = vmul.f32 %v1021, %v1021
      %v1034 = vmul.f32 %v1022, %v1022
      %1035 = vadd.xlane.f32.xlu0 %v1023
      %v1036 = vpop.xlane.xlu0 %1035
      %1037 = vadd.xlane.f32.xlu0 %v1024
      %v1038 = vpop.xlane.xlu0 %1037
      %1039 = vadd.xlane.f32.xlu0 %v1025
      %v1040 = vpop.xlane.xlu0 %1039
      %1041 = vadd.xlane.f32.xlu0 %v1026
      %v1042 = vpop.xlane.xlu0 %1041
      %1043 = vadd.xlane.f32.xlu0 %v1027
      %v1044 = vpop.xlane.xlu0 %1043
      %1045 = vadd.xlane.f32.xlu0 %v1028
      %v1046 = vpop.xlane.xlu0 %1045
      %1047 = vadd.xlane.f32.xlu0 %v1029
      %v1048 = vpop.xlane.xlu0 %1047
      %1049 = vadd.xlane.f32.xlu0 %v1030
      %v1050 = vpop.xlane.xlu0 %1049
      %1051 = vadd.xlane.f32.xlu0 %v1031
      %v1052 = vpop.xlane.xlu0 %1051
      %1053 = vadd.xlane.f32.xlu0 %v1032
      %v1054 = vpop.xlane.xlu0 %1053
      %1055 = vadd.xlane.f32.xlu0 %v1033
      %v1056 = vpop.xlane.xlu0 %1055
      %1057 = vadd.xlane.f32.xlu0 %v1034
      %v1058 = vpop.xlane.xlu0 %1057
      %v1059 = vmul.f32 %v1036, 0.03125
      %v1060 = vmul.f32 %v1038, 0.03125
      %v1061 = vmul.f32 %v1040, 0.03125
      %v1062 = vmul.f32 %v1042, 0.03125
      %v1063 = vmul.f32 %v1044, 0.03125
      %v1064 = vmul.f32 %v1046, 0.03125
      %v1065 = vmul.f32 %v1048, 0.03125
      %v1066 = vmul.f32 %v1050, 0.03125
      %v1067 = vmul.f32 %v1052, 0.03125
      %v1068 = vmul.f32 %v1054, 0.03125
      %v1069 = vmul.f32 %v1056, 0.03125
      %v1070 = vmul.f32 %v1058, 0.03125
      %v1071 = vadd.f32 %v1059, 1e-05
      %v1072 = vadd.f32 %v1060, 1e-05
      %v1073 = vadd.f32 %v1061, 1e-05
      %v1074 = vadd.f32 %v1062, 1e-05
      %v1075 = vadd.f32 %v1063, 1e-05
      %v1076 = vadd.f32 %v1064, 1e-05
      %v1077 = vadd.f32 %v1065, 1e-05
      %v1078 = vadd.f32 %v1066, 1e-05
      %v1079 = vadd.f32 %v1067, 1e-05
      %v1080 = vadd.f32 %v1068, 1e-05
      %v1081 = vadd.f32 %v1069, 1e-05
      %v1082 = vadd.f32 %v1070, 1e-05
      %v1083 = vrsqrt.pop %v1071
      %v1084 = vrsqrt.pop %v1072
      %v1085 = vrsqrt.pop %v1073
      %v1086 = vrsqrt.pop %v1074
      %v1087 = vrsqrt.pop %v1075
      %v1088 = vrsqrt.pop %v1076
      %v1089 = vrsqrt.pop %v1077
      %v1090 = vrsqrt.pop %v1078
      %v1091 = vrsqrt.pop %v1079
      %v1092 = vrsqrt.pop %v1080
      %v1093 = vrsqrt.pop %v1081
      %v1094 = vrsqrt.pop %v1082
      %v1095 = vmul.f32 %v1011, %v1083
      %v1096 = vmul.f32 %v1012, %v1084
      %v1097 = vmul.f32 %v1013, %v1085
      %v1098 = vmul.f32 %v1014, %v1086
      %v1099 = vmul.f32 %v1015, %v1087
      %v1100 = vmul.f32 %v1016, %v1088
      %v1101 = vmul.f32 %v1017, %v1089
      %v1102 = vmul.f32 %v1018, %v1090
      %v1103 = vmul.f32 %v1019, %v1091
      %v1104 = vmul.f32 %v1020, %v1092
      %v1105 = vmul.f32 %v1021, %v1093
      %v1106 = vmul.f32 %v1022, %v1094
      %v1108 = vlaneseq
      %v1109 = vshrl.u32 %v1108, 7
      %v1110 = vsub.s32 0, %v1109
      %v1111 = vrot.slane %v956, %v1110
      %v1113 = vmul.f32 %v1095, %v1111
      %v1114 = vmul.f32 %v1096, %v1111
      %v1115 = vmul.f32 %v1097, %v1111
      %v1116 = vmul.f32 %v1098, %v1111
      %v1117 = vmul.f32 %v1099, %v1111
      %v1118 = vmul.f32 %v1100, %v1111
      %v1119 = vmul.f32 %v1101, %v1111
      %v1120 = vmul.f32 %v1102, %v1111
      %v1121 = vmul.f32 %v1103, %v1111
      %v1122 = vmul.f32 %v1104, %v1111
      %v1123 = vmul.f32 %v1105, %v1111
      %v1124 = vmul.f32 %v1106, %v1111
      %v1126 = vlaneseq
      %v1127 = vshrl.u32 %v1126, 7
      %v1128 = vsub.s32 0, %v1127
      %v1129 = vrot.slane %v957, %v1128
      %v1131 = vadd.f32 %v1113, %v1129
      %v1132 = vadd.f32 %v1114, %v1129
      %v1133 = vadd.f32 %v1115, %v1129
      %v1134 = vadd.f32 %v1116, %v1129
      %v1135 = vadd.f32 %v1117, %v1129
      %v1136 = vadd.f32 %v1118, %v1129
      %v1137 = vadd.f32 %v1119, %v1129
      %v1138 = vadd.f32 %v1120, %v1129
      %v1139 = vadd.f32 %v1121, %v1129
      %v1140 = vadd.f32 %v1122, %v1129
      %v1141 = vadd.f32 %v1123, %v1129
      %v1142 = vadd.f32 %v1124, %v1129
      %v1143 = vmax.f32 %v1131, 0.0
      %v1144 = vmax.f32 %v1132, 0.0
      %v1145 = vmax.f32 %v1133, 0.0
      %v1146 = vmax.f32 %v1134, 0.0
      %v1147 = vmax.f32 %v1135, 0.0
      %v1148 = vmax.f32 %v1136, 0.0
      %v1149 = vmax.f32 %v1137, 0.0
      %v1150 = vmax.f32 %v1138, 0.0
      %v1151 = vmax.f32 %v1139, 0.0
      %v1152 = vmax.f32 %v1140, 0.0
      %v1153 = vmax.f32 %v1141, 0.0
      %v1154 = vmax.f32 %v1142, 0.0
      %v1155 = vpack.c.bf16 %v1144, %v1143
      %v1156 = vpack.c.bf16 %v1146, %v1145
      %v1157 = vpack.c.bf16 %v1148, %v1147
      %v1158 = vpack.c.bf16 %v1150, %v1149
      %v1159 = vpack.c.bf16 %v1152, %v1151
      %v1160 = vpack.c.bf16 %v1154, %v1153
      %v1161 = vld [vmem:[%s9] sm:$0xf]
      %v1162 = vld [vmem:[%s9 + $0x4] sm:$0xf]
      %v1163 = vld [vmem:[%s9 + $0x8] sm:$0xf]
      %v1164 = vld [vmem:[%s9 + $0xc] sm:$0xf]
      %v1165 = vld [vmem:[%s9 + $0x10] sm:$0xf]
      %v1166 = vld [vmem:[%s9 + $0x14] sm:$0xf]
      %v1167 = vld [vmem:[%s9 + $0x18] sm:$0xf]
      %v1168 = vld [vmem:[%s9 + $0x1c] sm:$0xf]
      %v1169 = vld [vmem:[%s9 + $0x20] sm:$0xf]
      %v1170 = vld [vmem:[%s9 + $0x24] sm:$0xf]
      %v1171 = vld [vmem:[%s9 + $0x28] sm:$0xf]
      %v1172 = vld [vmem:[%s9 + $0x2c] sm:$0xf]
      %v1173 = vld [vmem:[%s9 + $0x30] sm:$0xf]
      %v1174 = vld [vmem:[%s9 + $0x34] sm:$0xf]
      %v1175 = vld [vmem:[%s9 + $0x38] sm:$0xf]
      %v1176 = vld [vmem:[%s9 + $0x3c] sm:$0xf]
      %v1177 = vld [vmem:[%s10] sm:$0x1]
      %v1179 = vlaneseq
      %v1180 = vshrl.u32 %v1179, 7
      %v1181 = vsub.s32 0, %v1180
      %v1182 = vrot.slane %v1177, %v1181
      %v1200 = vunpack.c.l.b16 %v1161
      %v1201 = vunpack.c.l.b16 %v1162
      %v1202 = vunpack.c.l.b16 %v1163
      %v1203 = vunpack.c.l.b16 %v1164
      %v1204 = vunpack.c.l.b16 %v1165
      %v1205 = vunpack.c.l.b16 %v1166
      %v1206 = vunpack.c.l.b16 %v1167
      %v1207 = vunpack.c.l.b16 %v1168
      %v1208 = vunpack.c.l.b16 %v1169
      %v1209 = vunpack.c.l.b16 %v1170
      %v1210 = vunpack.c.l.b16 %v1171
      %v1211 = vunpack.c.l.b16 %v1172
      %v1212 = vunpack.c.l.b16 %v1173
      %v1213 = vunpack.c.l.b16 %v1174
      %v1214 = vunpack.c.l.b16 %v1175
      %v1215 = vunpack.c.l.b16 %v1176
      %v1216 = vpack.c.b16 %v1201, %v1200
      %v1217 = vpack.c.b16 %v1203, %v1202
      %v1218 = vpack.c.b16 %v1205, %v1204
      %v1219 = vpack.c.b16 %v1207, %v1206
      %v1220 = vpack.c.b16 %v1209, %v1208
      %v1221 = vpack.c.b16 %v1211, %v1210
      %v1222 = vpack.c.b16 %v1213, %v1212
      %v1223 = vpack.c.b16 %v1215, %v1214
      %1232 = vmatprep.subr.bf16.mxu0 0
      %1233 = vmatpush1.bf16.msra.mxu0 %v1223
      %1234 = vmatprep.subr.bf16.mxu0 0
      %1235 = vmatpush1.bf16.msra.mxu0 %v1222
      %1236 = vmatprep.subr.bf16.mxu0 0
      %1237 = vmatpush1.bf16.msra.mxu0 %v1221
      %1238 = vmatprep.subr.bf16.mxu0 0
      %1239 = vmatpush1.bf16.msra.mxu0 %v1220
      %1240 = vmatprep.subr.bf16.mxu0 0
      %1241 = vmatpush1.bf16.msra.mxu0 %v1219
      %1242 = vmatprep.subr.bf16.mxu0 0
      %1243 = vmatpush1.bf16.msra.mxu0 %v1218
      %1244 = vmatprep.subr.bf16.mxu0 0
      %1245 = vmatpush1.bf16.msra.mxu0 %v1217
      %1246 = vmatprep.subr.bf16.mxu0 0
      %1247 = vmatpush1.bf16.msra.mxu0 %v1216
      %1248 = vmatprep.subr.bf16.mxu0 0
      %1249 = vmatpush2.bf16.msra.mxu0 0
      %1250 = vmatprep.subr.bf16.mxu0 0
      %1251 = vmatpush2.bf16.msra.mxu0 0
      %1252 = vmatprep.subr.bf16.mxu0 0
      %1253 = vmatpush2.bf16.msra.mxu0 0
      %1254 = vmatprep.subr.bf16.mxu0 0
      %1255 = vmatpush2.bf16.msra.mxu0 0
      %1256 = vmatprep.subr.bf16.mxu0 0
      %1257 = vmatpush2.bf16.msra.mxu0 0
      %1258 = vmatprep.subr.bf16.mxu0 0
      %1259 = vmatpush2.bf16.msra.mxu0 0
      %1260 = vmatprep.subr.bf16.mxu0 0
      %1261 = vmatpush2.bf16.msra.mxu0 0
      %1262 = vmatprep.subr.bf16.mxu0 0
      %1263 = vmatpush2.bf16.msra.mxu0 0
      %1264 = vmatprep.mubr.bf16.mxu0 0
      %1265 = vmatmul.mubr.bf16.gmra.mxu0 %v1155
      %v1266 = vpop.f32.mrf.mxu0
      %v1267 = vadd.f32 %v1182, %v1266
      %v1268 = vpop.f32.mrf.mxu0
      %v1269 = vpop.f32.mrf.mxu0
      %v1270 = vadd.f32 %v1182, %v1269
      %v1271 = vpop.f32.mrf.mxu0
      %1272 = vmatprep.mubr.bf16.mxu0 0
      %1273 = vmatmul.mubr.bf16.gmra.mxu0 %v1156
      %v1274 = vpop.f32.mrf.mxu0
      %v1275 = vadd.f32 %v1182, %v1274
      %v1276 = vpop.f32.mrf.mxu0
      %v1277 = vpop.f32.mrf.mxu0
      %v1278 = vadd.f32 %v1182, %v1277
      %v1279 = vpop.f32.mrf.mxu0
      %1280 = vmatprep.mubr.bf16.mxu0 0
      %1281 = vmatmul.mubr.bf16.gmra.mxu0 %v1157
      %v1282 = vpop.f32.mrf.mxu0
      %v1283 = vadd.f32 %v1182, %v1282
      %v1284 = vpop.f32.mrf.mxu0
      %v1285 = vpop.f32.mrf.mxu0
      %v1286 = vadd.f32 %v1182, %v1285
      %v1287 = vpop.f32.mrf.mxu0
      %1288 = vmatprep.mubr.bf16.mxu0 0
      %1289 = vmatmul.mubr.bf16.gmra.mxu0 %v1158
      %v1290 = vpop.f32.mrf.mxu0
      %v1291 = vadd.f32 %v1182, %v1290
      %v1292 = vpop.f32.mrf.mxu0
      %v1293 = vpop.f32.mrf.mxu0
      %v1294 = vadd.f32 %v1182, %v1293
      %v1295 = vpop.f32.mrf.mxu0
      %1296 = vmatprep.mubr.bf16.mxu0 0
      %1297 = vmatmul.mubr.bf16.gmra.mxu0 %v1159
      %v1298 = vpop.f32.mrf.mxu0
      %v1299 = vadd.f32 %v1182, %v1298
      %v1300 = vpop.f32.mrf.mxu0
      %v1301 = vpop.f32.mrf.mxu0
      %v1302 = vadd.f32 %v1182, %v1301
      %v1303 = vpop.f32.mrf.mxu0
      %1304 = vmatprep.mubr.bf16.mxu0 0
      %1305 = vmatmul.mubr.bf16.gmra.mxu0 %v1160
      %v1306 = vpop.f32.mrf.mxu0
      %v1307 = vadd.f32 %v1182, %v1306
      %v1308 = vpop.f32.mrf.mxu0
      %v1309 = vpop.f32.mrf.mxu0
      %v1310 = vadd.f32 %v1182, %v1309
      %v1311 = vpop.f32.mrf.mxu0
      %1312 = vdwg.mxu0
      %v1313 = vadd.f32 %v1267, %v1283
      %v1314 = vadd.f32 %v1270, %v1286
      %v1315 = vadd.f32 %v1275, %v1291
      %v1316 = vadd.f32 %v1278, %v1294
      %v1317 = vadd.f32 %v1313, %v1299
      %v1318 = vadd.f32 %v1314, %v1302
      %v1319 = vadd.f32 %v1315, %v1307
      %v1320 = vadd.f32 %v1316, %v1310
      %v1321 = vld [vmem:[%s11] sm:$0xf]
      %v1322 = vld [vmem:[%s11 + $0x4] sm:$0xf]
      %v1323 = vld [vmem:[%s11 + $0x8] sm:$0xf]
      %v1324 = vld [vmem:[%s11 + $0xc] sm:$0xf]
      %v1325 = vpack.c.bf16 %v1318, %v1317
      %v1326 = vpack.c.bf16 %v1320, %v1319
      %v1327 = vld [vmem:[%s12] sm:$0xf]
      %v1328 = vld [vmem:[%s12 + $0x4] sm:$0xf]
      %v1329 = vld [vmem:[%s12 + $0x8] sm:$0xf]
      %v1330 = vld [vmem:[%s12 + $0xc] sm:$0xf]
      %v1331 = vld [vmem:[%s12 + $0x10] sm:$0xf]
      %v1332 = vld [vmem:[%s12 + $0x14] sm:$0xf]
      %v1333 = vld [vmem:[%s12 + $0x18] sm:$0xf]
      %v1334 = vld [vmem:[%s12 + $0x1c] sm:$0xf]
      %v1335 = vld [vmem:[%s12 + $0x20] sm:$0xf]
      %v1336 = vld [vmem:[%s12 + $0x24] sm:$0xf]
      %v1337 = vld [vmem:[%s12 + $0x28] sm:$0xf]
      %v1338 = vld [vmem:[%s12 + $0x2c] sm:$0xf]
      %v1339 = vld [vmem:[%s12 + $0x30] sm:$0xf]
      %v1340 = vld [vmem:[%s12 + $0x34] sm:$0xf]
      %v1341 = vld [vmem:[%s12 + $0x38] sm:$0xf]
      %v1342 = vld [vmem:[%s12 + $0x3c] sm:$0xf]
      %v1359 = vunpack.c.l.b16 %v1327
      %v1360 = vunpack.c.l.b16 %v1328
      %v1361 = vunpack.c.l.b16 %v1329
      %v1362 = vunpack.c.l.b16 %v1330
      %v1363 = vunpack.c.l.b16 %v1331
      %v1364 = vunpack.c.l.b16 %v1332
      %v1365 = vunpack.c.l.b16 %v1333
      %v1366 = vunpack.c.l.b16 %v1334
      %v1367 = vunpack.c.l.b16 %v1335
      %v1368 = vunpack.c.l.b16 %v1336
      %v1369 = vunpack.c.l.b16 %v1337
      %v1370 = vunpack.c.l.b16 %v1338
      %v1371 = vunpack.c.l.b16 %v1339
      %v1372 = vunpack.c.l.b16 %v1340
      %v1373 = vunpack.c.l.b16 %v1341
      %v1374 = vunpack.c.l.b16 %v1342
      %v1375 = vpack.c.b16 %v1360, %v1359
      %v1376 = vpack.c.b16 %v1362, %v1361
      %v1377 = vpack.c.b16 %v1364, %v1363
      %v1378 = vpack.c.b16 %v1366, %v1365
      %v1379 = vpack.c.b16 %v1368, %v1367
      %v1380 = vpack.c.b16 %v1370, %v1369
      %v1381 = vpack.c.b16 %v1372, %v1371
      %v1382 = vpack.c.b16 %v1374, %v1373
      %1391 = vmatprep.subr.bf16.mxu0 0
      %1392 = vmatpush1.bf16.msra.mxu0 %v1382
      %1393 = vmatprep.subr.bf16.mxu0 0
      %1394 = vmatpush1.bf16.msra.mxu0 %v1381
      %1395 = vmatprep.subr.bf16.mxu0 0
      %1396 = vmatpush1.bf16.msra.mxu0 %v1380
      %1397 = vmatprep.subr.bf16.mxu0 0
      %1398 = vmatpush1.bf16.msra.mxu0 %v1379
      %1399 = vmatprep.subr.bf16.mxu0 0
      %1400 = vmatpush1.bf16.msra.mxu0 %v1378
      %1401 = vmatprep.subr.bf16.mxu0 0
      %1402 = vmatpush1.bf16.msra.mxu0 %v1377
      %1403 = vmatprep.subr.bf16.mxu0 0
      %1404 = vmatpush1.bf16.msra.mxu0 %v1376
      %1405 = vmatprep.subr.bf16.mxu0 0
      %1406 = vmatpush1.bf16.msra.mxu0 %v1375
      %1407 = vmatprep.subr.bf16.mxu0 0
      %1408 = vmatpush2.bf16.msra.mxu0 0
      %1409 = vmatprep.subr.bf16.mxu0 0
      %1410 = vmatpush2.bf16.msra.mxu0 0
      %1411 = vmatprep.subr.bf16.mxu0 0
      %1412 = vmatpush2.bf16.msra.mxu0 0
      %1413 = vmatprep.subr.bf16.mxu0 0
      %1414 = vmatpush2.bf16.msra.mxu0 0
      %1415 = vmatprep.subr.bf16.mxu0 0
      %1416 = vmatpush2.bf16.msra.mxu0 0
      %1417 = vmatprep.subr.bf16.mxu0 0
      %1418 = vmatpush2.bf16.msra.mxu0 0
      %1419 = vmatprep.subr.bf16.mxu0 0
      %1420 = vmatpush2.bf16.msra.mxu0 0
      %1421 = vmatprep.subr.bf16.mxu0 0
      %1422 = vmatpush2.bf16.msra.mxu0 0
      %1423 = vmatprep.mubr.bf16.mxu0 0
      %1424 = vmatmul.mubr.bf16.gmra.mxu0 %v1325
      %v1425 = vpop.f32.mrf.mxu0
      %v1426 = vadd.f32 0.0, %v1425
      %v1427 = vpop.f32.mrf.mxu0
      %v1428 = vpop.f32.mrf.mxu0
      %v1429 = vadd.f32 0.0, %v1428
      %v1430 = vpop.f32.mrf.mxu0
      %1431 = vmatprep.mubr.bf16.mxu0 0
      %1432 = vmatmul.mubr.bf16.gmra.mxu0 %v1326
      %v1433 = vpop.f32.mrf.mxu0
      %v1434 = vadd.f32 0.0, %v1433
      %v1435 = vpop.f32.mrf.mxu0
      %v1436 = vpop.f32.mrf.mxu0
      %v1437 = vadd.f32 0.0, %v1436
      %v1438 = vpop.f32.mrf.mxu0
      %1439 = vdwg.mxu0
      %v1444 = vunpack.c.l.b16 %v1321
      %v1445 = vunpack.c.l.b16 %v1322
      %v1446 = vunpack.c.l.b16 %v1323
      %v1447 = vunpack.c.l.b16 %v1324
      %v1448 = vpack.c.b16 %v1445, %v1444
      %v1449 = vpack.c.b16 %v1447, %v1446
      %1452 = vmatprep.subr.bf16.mxu0 0
      %1453 = vmatpush1.bf16.msra.mxu0 0
      %1454 = vmatprep.subr.bf16.mxu0 0
      %1455 = vmatpush1.bf16.msra.mxu0 0
      %1456 = vmatprep.subr.bf16.mxu0 0
      %1457 = vmatpush1.bf16.msra.mxu0 0
      %1458 = vmatprep.subr.bf16.mxu0 0
      %1459 = vmatpush1.bf16.msra.mxu0 0
      %1460 = vmatprep.subr.bf16.mxu0 0
      %1461 = vmatpush1.bf16.msra.mxu0 0
      %1462 = vmatprep.subr.bf16.mxu0 0
      %1463 = vmatpush1.bf16.msra.mxu0 0
      %1464 = vmatprep.subr.bf16.mxu0 0
      %1465 = vmatpush1.bf16.msra.mxu0 %v1449
      %1466 = vmatprep.subr.bf16.mxu0 0
      %1467 = vmatpush1.bf16.msra.mxu0 %v1448
      %1468 = vmatprep.subr.bf16.mxu0 0
      %1469 = vmatpush2.bf16.msra.mxu0 0
      %1470 = vmatprep.subr.bf16.mxu0 0
      %1471 = vmatpush2.bf16.msra.mxu0 0
      %1472 = vmatprep.subr.bf16.mxu0 0
      %1473 = vmatpush2.bf16.msra.mxu0 0
      %1474 = vmatprep.subr.bf16.mxu0 0
      %1475 = vmatpush2.bf16.msra.mxu0 0
      %1476 = vmatprep.subr.bf16.mxu0 0
      %1477 = vmatpush2.bf16.msra.mxu0 0
      %1478 = vmatprep.subr.bf16.mxu0 0
      %1479 = vmatpush2.bf16.msra.mxu0 0
      %1480 = vmatprep.subr.bf16.mxu0 0
      %1481 = vmatpush2.bf16.msra.mxu0 0
      %1482 = vmatprep.subr.bf16.mxu0 0
      %1483 = vmatpush2.bf16.msra.mxu0 0
      %1484 = vmatprep.mubr.bf16.mxu0 0
      %1485 = vmatmul.mubr.bf16.gmra.mxu0 %v655
      %v1486 = vpop.f32.mrf.mxu0
      %v1487 = vadd.f32 %v1426, %v1486
      %v1488 = vpop.f32.mrf.mxu0
      %v1489 = vpop.f32.mrf.mxu0
      %v1490 = vadd.f32 %v1429, %v1489
      %v1491 = vpop.f32.mrf.mxu0
      %1492 = vmatprep.mubr.bf16.mxu0 0
      %1493 = vmatmul.mubr.bf16.gmra.mxu0 %v658
      %v1494 = vpop.f32.mrf.mxu0
      %v1495 = vadd.f32 %v1434, %v1494
      %v1496 = vpop.f32.mrf.mxu0
      %v1497 = vpop.f32.mrf.mxu0
      %v1498 = vadd.f32 %v1437, %v1497
      %v1499 = vpop.f32.mrf.mxu0
      %1500 = vdwg.mxu0
      %v1501 = vld [vmem:[%s617] sm:$0xff]
      %v1502 = vld [vmem:[%s617 + $0x8] sm:$0xff]
      %v1503 = vld [vmem:[%s617 + $0x10] sm:$0xff]
      %v1504 = vld [vmem:[%s617 + $0x18] sm:$0xff]
      %v1505 = vadd.f32 %v1487, %v1501
      %v1506 = vadd.f32 %v1490, %v1502
      %v1507 = vadd.f32 %v1495, %v1503
      %v1508 = vadd.f32 %v1498, %v1504
      %v1509 = vmax.f32 %v1505, 0.0
      %v1510 = vmax.f32 %v1506, 0.0
      %v1511 = vmax.f32 %v1507, 0.0
      %v1512 = vmax.f32 %v1508, 0.0
      %v1513 = vpack.c.bf16 %v1510, %v1509
      %v1514 = vpack.c.bf16 %v1512, %v1511
      %v1515 = vld [vmem:[%s13] sm:$0xf]
      %v1516 = vld [vmem:[%s13 + $0x4] sm:$0xf]
      %v1517 = vld [vmem:[%s13 + $0x8] sm:$0xf]
      %v1518 = vld [vmem:[%s13 + $0xc] sm:$0xf]
      %v1519 = vld [vmem:[%s13 + $0x10] sm:$0xf]
      %v1520 = vld [vmem:[%s13 + $0x14] sm:$0xf]
      %v1521 = vld [vmem:[%s13 + $0x18] sm:$0xf]
      %v1522 = vld [vmem:[%s13 + $0x1c] sm:$0xf]
      %v1523 = vld [vmem:[%s13 + $0x20] sm:$0xf]
      %v1524 = vld [vmem:[%s13 + $0x24] sm:$0xf]
      %v1525 = vld [vmem:[%s13 + $0x28] sm:$0xf]
      %v1526 = vld [vmem:[%s13 + $0x2c] sm:$0xf]
      %v1527 = vld [vmem:[%s13 + $0x30] sm:$0xf]
      %v1528 = vld [vmem:[%s13 + $0x34] sm:$0xf]
      %v1529 = vld [vmem:[%s13 + $0x38] sm:$0xf]
      %v1530 = vld [vmem:[%s13 + $0x3c] sm:$0xf]
      %v1531 = vld [vmem:[%s14] sm:$0x1]
      %v1533 = vlaneseq
      %v1534 = vshrl.u32 %v1533, 7
      %v1535 = vsub.s32 0, %v1534
      %v1536 = vrot.slane %v1531, %v1535
      %v1554 = vunpack.c.l.b16 %v1515
      %v1555 = vunpack.c.l.b16 %v1516
      %v1556 = vunpack.c.l.b16 %v1517
      %v1557 = vunpack.c.l.b16 %v1518
      %v1558 = vunpack.c.l.b16 %v1519
      %v1559 = vunpack.c.l.b16 %v1520
      %v1560 = vunpack.c.l.b16 %v1521
      %v1561 = vunpack.c.l.b16 %v1522
      %v1562 = vunpack.c.l.b16 %v1523
      %v1563 = vunpack.c.l.b16 %v1524
      %v1564 = vunpack.c.l.b16 %v1525
      %v1565 = vunpack.c.l.b16 %v1526
      %v1566 = vunpack.c.l.b16 %v1527
      %v1567 = vunpack.c.l.b16 %v1528
      %v1568 = vunpack.c.l.b16 %v1529
      %v1569 = vunpack.c.l.b16 %v1530
      %v1570 = vpack.c.b16 %v1555, %v1554
      %v1571 = vpack.c.b16 %v1557, %v1556
      %v1572 = vpack.c.b16 %v1559, %v1558
      %v1573 = vpack.c.b16 %v1561, %v1560
      %v1574 = vpack.c.b16 %v1563, %v1562
      %v1575 = vpack.c.b16 %v1565, %v1564
      %v1576 = vpack.c.b16 %v1567, %v1566
      %v1577 = vpack.c.b16 %v1569, %v1568
      %1586 = vmatprep.subr.bf16.mxu0 0
      %1587 = vmatpush1.bf16.msra.mxu0 %v1577
      %1588 = vmatprep.subr.bf16.mxu0 0
      %1589 = vmatpush1.bf16.msra.mxu0 %v1576
      %1590 = vmatprep.subr.bf16.mxu0 0
      %1591 = vmatpush1.bf16.msra.mxu0 %v1575
      %1592 = vmatprep.subr.bf16.mxu0 0
      %1593 = vmatpush1.bf16.msra.mxu0 %v1574
      %1594 = vmatprep.subr.bf16.mxu0 0
      %1595 = vmatpush1.bf16.msra.mxu0 %v1573
      %1596 = vmatprep.subr.bf16.mxu0 0
      %1597 = vmatpush1.bf16.msra.mxu0 %v1572
      %1598 = vmatprep.subr.bf16.mxu0 0
      %1599 = vmatpush1.bf16.msra.mxu0 %v1571
      %1600 = vmatprep.subr.bf16.mxu0 0
      %1601 = vmatpush1.bf16.msra.mxu0 %v1570
      %1602 = vmatprep.subr.bf16.mxu0 0
      %1603 = vmatpush2.bf16.msra.mxu0 0
      %1604 = vmatprep.subr.bf16.mxu0 0
      %1605 = vmatpush2.bf16.msra.mxu0 0
      %1606 = vmatprep.subr.bf16.mxu0 0
      %1607 = vmatpush2.bf16.msra.mxu0 0
      %1608 = vmatprep.subr.bf16.mxu0 0
      %1609 = vmatpush2.bf16.msra.mxu0 0
      %1610 = vmatprep.subr.bf16.mxu0 0
      %1611 = vmatpush2.bf16.msra.mxu0 0
      %1612 = vmatprep.subr.bf16.mxu0 0
      %1613 = vmatpush2.bf16.msra.mxu0 0
      %1614 = vmatprep.subr.bf16.mxu0 0
      %1615 = vmatpush2.bf16.msra.mxu0 0
      %1616 = vmatprep.subr.bf16.mxu0 0
      %1617 = vmatpush2.bf16.msra.mxu0 0
      %1618 = vmatprep.mubr.bf16.mxu0 0
      %1619 = vmatmul.mubr.bf16.gmra.mxu0 %v1513
      %v1620 = vpop.f32.mrf.mxu0
      %v1621 = vadd.f32 %v1536, %v1620
      %v1622 = vpop.f32.mrf.mxu0
      %v1623 = vpop.f32.mrf.mxu0
      %v1624 = vadd.f32 %v1536, %v1623
      %v1625 = vpop.f32.mrf.mxu0
      %1626 = vmatprep.mubr.bf16.mxu0 0
      %1627 = vmatmul.mubr.bf16.gmra.mxu0 %v1514
      %v1628 = vpop.f32.mrf.mxu0
      %v1629 = vadd.f32 %v1536, %v1628
      %v1630 = vpop.f32.mrf.mxu0
      %v1631 = vpop.f32.mrf.mxu0
      %v1632 = vadd.f32 %v1536, %v1631
      %v1633 = vpop.f32.mrf.mxu0
      %1634 = vdwg.mxu0
      %v1635 = vld [vmem:[%s15] sm:$0x1]
      %v1636 = vld [vmem:[%s16] sm:$0x1]
      %1637 = vadd.xlane.f32.xlu0 %v1621
      %v1638 = vpop.xlane.xlu0 %1637
      %1639 = vadd.xlane.f32.xlu0 %v1624
      %v1640 = vpop.xlane.xlu0 %1639
      %1641 = vadd.xlane.f32.xlu0 %v1629
      %v1642 = vpop.xlane.xlu0 %1641
      %1643 = vadd.xlane.f32.xlu0 %v1632
      %v1644 = vpop.xlane.xlu0 %1643
      %v1645 = vmul.f32 %v1638, 0.03125
      %v1646 = vmul.f32 %v1640, 0.03125
      %v1647 = vmul.f32 %v1642, 0.03125
      %v1648 = vmul.f32 %v1644, 0.03125
      %v1649 = vsub.f32 %v1621, %v1645
      %v1650 = vsub.f32 %v1624, %v1646
      %v1651 = vsub.f32 %v1629, %v1647
      %v1652 = vsub.f32 %v1632, %v1648
      %v1653 = vmul.f32 %v1649, %v962
      %v1654 = vmul.f32 %v1650, %v962
      %v1655 = vmul.f32 %v1651, %v962
      %v1656 = vmul.f32 %v1652, %v962
      %v1657 = vmul.f32 %v1653, %v1653
      %v1658 = vmul.f32 %v1654, %v1654
      %v1659 = vmul.f32 %v1655, %v1655
      %v1660 = vmul.f32 %v1656, %v1656
      %1661 = vadd.xlane.f32.xlu0 %v1657
      %v1662 = vpop.xlane.xlu0 %1661
      %1663 = vadd.xlane.f32.xlu0 %v1658
      %v1664 = vpop.xlane.xlu0 %1663
      %1665 = vadd.xlane.f32.xlu0 %v1659
      %v1666 = vpop.xlane.xlu0 %1665
      %1667 = vadd.xlane.f32.xlu0 %v1660
      %v1668 = vpop.xlane.xlu0 %1667
      %v1669 = vmul.f32 %v1662, 0.03125
      %v1670 = vmul.f32 %v1664, 0.03125
      %v1671 = vmul.f32 %v1666, 0.03125
      %v1672 = vmul.f32 %v1668, 0.03125
      %v1673 = vadd.f32 %v1669, 1e-05
      %v1674 = vadd.f32 %v1670, 1e-05
      %v1675 = vadd.f32 %v1671, 1e-05
      %v1676 = vadd.f32 %v1672, 1e-05
      %v1677 = vrsqrt.pop %v1673
      %v1678 = vrsqrt.pop %v1674
      %v1679 = vrsqrt.pop %v1675
      %v1680 = vrsqrt.pop %v1676
      %v1681 = vmul.f32 %v1653, %v1677
      %v1682 = vmul.f32 %v1654, %v1678
      %v1683 = vmul.f32 %v1655, %v1679
      %v1684 = vmul.f32 %v1656, %v1680
      %v1686 = vlaneseq
      %v1687 = vshrl.u32 %v1686, 7
      %v1688 = vsub.s32 0, %v1687
      %v1689 = vrot.slane %v1635, %v1688
      %v1691 = vmul.f32 %v1681, %v1689
      %v1692 = vmul.f32 %v1682, %v1689
      %v1693 = vmul.f32 %v1683, %v1689
      %v1694 = vmul.f32 %v1684, %v1689
      %v1696 = vlaneseq
      %v1697 = vshrl.u32 %v1696, 7
      %v1698 = vsub.s32 0, %v1697
      %v1699 = vrot.slane %v1636, %v1698
      %v1701 = vadd.f32 %v1691, %v1699
      %v1702 = vadd.f32 %v1692, %v1699
      %v1703 = vadd.f32 %v1693, %v1699
      %v1704 = vadd.f32 %v1694, %v1699
      %v1705 = vmax.f32 %v1701, 0.0
      %v1706 = vmax.f32 %v1702, 0.0
      %v1707 = vmax.f32 %v1703, 0.0
      %v1708 = vmax.f32 %v1704, 0.0
      %v1709 = vpack.c.bf16 %v1706, %v1705
      %v1710 = vpack.c.bf16 %v1708, %v1707
      %v1711 = vld [vmem:[%s17] sm:$0xf]
      %v1712 = vld [vmem:[%s17 + $0x4] sm:$0xf]
      %v1713 = vld [vmem:[%s17 + $0x8] sm:$0xf]
      %v1714 = vld [vmem:[%s17 + $0xc] sm:$0xf]
      %v1715 = vld [vmem:[%s17 + $0x10] sm:$0xf]
      %v1716 = vld [vmem:[%s17 + $0x14] sm:$0xf]
      %v1717 = vld [vmem:[%s17 + $0x18] sm:$0xf]
      %v1718 = vld [vmem:[%s17 + $0x1c] sm:$0xf]
      %v1719 = vld [vmem:[%s17 + $0x20] sm:$0xf]
      %v1720 = vld [vmem:[%s17 + $0x24] sm:$0xf]
      %v1721 = vld [vmem:[%s17 + $0x28] sm:$0xf]
      %v1722 = vld [vmem:[%s17 + $0x2c] sm:$0xf]
      %v1723 = vld [vmem:[%s17 + $0x30] sm:$0xf]
      %v1724 = vld [vmem:[%s17 + $0x34] sm:$0xf]
      %v1725 = vld [vmem:[%s17 + $0x38] sm:$0xf]
      %v1726 = vld [vmem:[%s17 + $0x3c] sm:$0xf]
      %v1727 = vld [vmem:[%s18] sm:$0x1]
      %v1729 = vlaneseq
      %v1730 = vshrl.u32 %v1729, 7
      %v1731 = vsub.s32 0, %v1730
      %v1732 = vrot.slane %v1727, %v1731
      %v1750 = vunpack.c.l.b16 %v1711
      %v1751 = vunpack.c.l.b16 %v1712
      %v1752 = vunpack.c.l.b16 %v1713
      %v1753 = vunpack.c.l.b16 %v1714
      %v1754 = vunpack.c.l.b16 %v1715
      %v1755 = vunpack.c.l.b16 %v1716
      %v1756 = vunpack.c.l.b16 %v1717
      %v1757 = vunpack.c.l.b16 %v1718
      %v1758 = vunpack.c.l.b16 %v1719
      %v1759 = vunpack.c.l.b16 %v1720
      %v1760 = vunpack.c.l.b16 %v1721
      %v1761 = vunpack.c.l.b16 %v1722
      %v1762 = vunpack.c.l.b16 %v1723
      %v1763 = vunpack.c.l.b16 %v1724
      %v1764 = vunpack.c.l.b16 %v1725
      %v1765 = vunpack.c.l.b16 %v1726
      %v1766 = vpack.c.b16 %v1751, %v1750
      %v1767 = vpack.c.b16 %v1753, %v1752
      %v1768 = vpack.c.b16 %v1755, %v1754
      %v1769 = vpack.c.b16 %v1757, %v1756
      %v1770 = vpack.c.b16 %v1759, %v1758
      %v1771 = vpack.c.b16 %v1761, %v1760
      %v1772 = vpack.c.b16 %v1763, %v1762
      %v1773 = vpack.c.b16 %v1765, %v1764
      %1782 = vmatprep.subr.bf16.mxu0 0
      %1783 = vmatpush1.bf16.msra.mxu0 %v1773
      %1784 = vmatprep.subr.bf16.mxu0 0
      %1785 = vmatpush1.bf16.msra.mxu0 %v1772
      %1786 = vmatprep.subr.bf16.mxu0 0
      %1787 = vmatpush1.bf16.msra.mxu0 %v1771
      %1788 = vmatprep.subr.bf16.mxu0 0
      %1789 = vmatpush1.bf16.msra.mxu0 %v1770
      %1790 = vmatprep.subr.bf16.mxu0 0
      %1791 = vmatpush1.bf16.msra.mxu0 %v1769
      %1792 = vmatprep.subr.bf16.mxu0 0
      %1793 = vmatpush1.bf16.msra.mxu0 %v1768
      %1794 = vmatprep.subr.bf16.mxu0 0
      %1795 = vmatpush1.bf16.msra.mxu0 %v1767
      %1796 = vmatprep.subr.bf16.mxu0 0
      %1797 = vmatpush1.bf16.msra.mxu0 %v1766
      %1798 = vmatprep.subr.bf16.mxu0 0
      %1799 = vmatpush2.bf16.msra.mxu0 0
      %1800 = vmatprep.subr.bf16.mxu0 0
      %1801 = vmatpush2.bf16.msra.mxu0 0
      %1802 = vmatprep.subr.bf16.mxu0 0
      %1803 = vmatpush2.bf16.msra.mxu0 0
      %1804 = vmatprep.subr.bf16.mxu0 0
      %1805 = vmatpush2.bf16.msra.mxu0 0
      %1806 = vmatprep.subr.bf16.mxu0 0
      %1807 = vmatpush2.bf16.msra.mxu0 0
      %1808 = vmatprep.subr.bf16.mxu0 0
      %1809 = vmatpush2.bf16.msra.mxu0 0
      %1810 = vmatprep.subr.bf16.mxu0 0
      %1811 = vmatpush2.bf16.msra.mxu0 0
      %1812 = vmatprep.subr.bf16.mxu0 0
      %1813 = vmatpush2.bf16.msra.mxu0 0
      %1814 = vmatprep.mubr.bf16.mxu0 0
      %1815 = vmatmul.mubr.bf16.gmra.mxu0 %v1709
      %v1816 = vpop.f32.mrf.mxu0
      %v1817 = vadd.f32 %v1732, %v1816
      %v1818 = vpop.f32.mrf.mxu0
      %v1819 = vpop.f32.mrf.mxu0
      %v1820 = vadd.f32 %v1732, %v1819
      %v1821 = vpop.f32.mrf.mxu0
      %1822 = vmatprep.mubr.bf16.mxu0 0
      %1823 = vmatmul.mubr.bf16.gmra.mxu0 %v1710
      %v1824 = vpop.f32.mrf.mxu0
      %v1825 = vadd.f32 %v1732, %v1824
      %v1826 = vpop.f32.mrf.mxu0
      %v1827 = vpop.f32.mrf.mxu0
      %v1828 = vadd.f32 %v1732, %v1827
      %v1829 = vpop.f32.mrf.mxu0
      %1830 = vdwg.mxu0
      %1831 = vst [vmem:[%s622] sm:$0xff] %v1817
      %1832 = vst [vmem:[%s622 + $0x8] sm:$0xff] %v1820
      %1833 = vst [vmem:[%s622 + $0x10] sm:$0xff] %v1825
      %1834 = vst [vmem:[%s622 + $0x18] sm:$0xff] %v1828
      %p1835 = scmp.lt.s32.totalorder %s30, 1
      %s1836 = scalar_select %p1835, %s30, 1
      %s1837 = smul.addr %s1836, 4
      %s1838 = smul.addr %s1837, 8
      %s1839 = scalar_lea.vmem %s19, %s1838
      // Predicated region
      $region97: #{_lambda_.4} parent=95 // pred_check
        %p1840 = pneg %p457
      $region98: #{_lambda_.4} parent=95 // pred_check_branch
        %1842 = sbr.rel (%p1840) target = $region100
      $region99: #{_lambda_.4} parent=95 // pred_region
        _
      $region100: #{_lambda_.4} parent=95 // pred_fallthru
        _
    $region96: #{_lambda_.4} parent=5 // pred_fallthru
      _
    %p1843 = scmp.le.s32.totalorder 2, %s25
    // Predicated region
    $region101: #{_lambda_.4} parent=5 // pred_check
      %p1844 = pneg %p1843
    $region102: #{_lambda_.4} parent=5 // pred_check_branch
      %1846 = sbr.rel (%p1844) target = $region104
    $region103: #{_lambda_.4} parent=5 // pred_region
      %s1847 = ssub.s32 %s25, 2
      // Predicated region
      $region105: #{_lambda_.4} parent=103 // pred_check
        %p1848 = pneg %p463
      $region106: #{_lambda_.4} parent=103 // pred_check_branch
        %1850 = sbr.rel (%p1848) target = $region108
      $region107: #{_lambda_.4} parent=103 // pred_region
        %p1851 = scmp.lt.s32.totalorder %s31, 1
        %s1852 = scalar_select %p1851, %s31, 1
        %s1853 = smul.addr %s1852, 4
        %s1854 = smul.addr %s1853, 8
        %s1855 = scalar_lea.vmem %s19, %s1854
      $region108: #{_lambda_.4} parent=103 // pred_fallthru
        _
    $region104: #{_lambda_.4} parent=5 // pred_fallthru
      _
  $region6: #{_lambda_.4} parent=0 // loop_footer
    %s29 = sadd.s32 1, %s25
  $region7: #{_lambda_.4} parent=0 // loop_footer_branch
    %24 = sbr.rel target = $region3
  $region8: #{_lambda_.4} parent=0 // loop_exit
    _

</llo_original>
